<compile_context>
chip_gen: v7x
topology: tpu7x:2x2x1
jax: 0.10.0
libtpu: 0.0.40
codegen_flags: <defaults>
</compile_context>

<pallas_src>
import functools
import math

import jax
import jax.numpy as jnp
from jax.experimental import pallas as pl
from jax.experimental.pallas import tpu as pltpu

_NEG_BIG = -1e30  # "minus infinity" that never overflows after max-subtraction


# --------------------------------------------------------------------------------------
# The fused kernel (3 inputs: adjT, x, parameter slab)
# --------------------------------------------------------------------------------------
def _asap_fused_kernel(adjT_ref, x_ref, slab_ref, out_ref, *,
                       offsets, n, n_convs, ratio, hidden):
    f32 = jnp.float32
    h2 = hidden // 2

    row_ids = jax.lax.broadcasted_iota(jnp.int32, (n, n), 0)
    col_ids = jax.lax.broadcasted_iota(jnp.int32, (n, n), 1)
    eye = (row_ids == col_ids).astype(f32)

    def col_to_row(col):                      # [n,1] -> [1,n] without a vector transpose
        return jnp.sum(col * eye, axis=0, keepdims=True)

    def row_to_col(row):                      # [1,n] -> [n,1]
        return jnp.sum(row * eye, axis=1, keepdims=True)

    def P(name):                              # load a parameter from the packed slab
        r0, r, c = offsets[name]
        return slab_ref[r0:r0 + r, 0:c]

    # ------------------------------- building blocks ----------------------------------
    def cheb_prop(adjT):
        # Mean-aggregated scaled Laplacian of ChebConv(aggr='mean', sym, lambda_max=2),
        # built target-major:  prop[c, r] = -d^-1/2[r] w[r,c] d^-1/2[c] / (indeg[c]+1)
        # TODO(synk): verify this mean-normalized form against the exact PyG ChebConv
        # configuration used by the reference (sum aggregation would drop the /(indeg+1)).
        maskT = (adjT != 0.0).astype(f32)
        deg_row = jnp.sum(adjT, axis=0, keepdims=True)      # weighted degree of source r
        dinv_row = jnp.where(deg_row > 0, jax.lax.rsqrt(deg_row), 0.0)
        dinv_col = row_to_col(dinv_row)
        indeg_col = jnp.sum(maskT, axis=1, keepdims=True)   # unweighted in-degree of c
        return -(adjT * dinv_col * dinv_row) / (indeg_col + 1.0)

    def cheb_mats(prop, K):
        # T1 = prop, T2 = 2*prop^2 - I, T3 = 2*prop*T2 - prop (shared across convs)
        mats = [prop]
        t_prev, t_cur = eye, prop
        for _ in range(2, K):
            t_next = 2.0 * jnp.dot(prop, t_cur, preferred_element_type=f32) - t_prev
            mats.append(t_next)
            t_prev, t_cur = t_cur, t_next
        return mats

    def cheb_apply(mats, x, wname, bname, K):
        # out = sum_k (T_k @ x) @ W_k + b, relu.  K independent dots, no lane concat.
        r0, rows, fout = offsets[wname]
        fin = rows // K
        out = jnp.dot(x, slab_ref[r0:r0 + fin, 0:fout], preferred_element_type=f32)
        for kk in range(1, K):
            tx = jnp.dot(mats[kk - 1], x, preferred_element_type=f32)
            wk = slab_ref[r0 + kk * fin:r0 + (kk + 1) * fin, 0:fout]
            out = out + jnp.dot(tx, wk, preferred_element_type=f32)
        return jnp.maximum(out + P(bname), 0.0)            # F.relu after every conv

    def mean_pool(x, valid_col, count):
        return jnp.sum(x * valid_col, axis=0, keepdims=True) * (1.0 / count)

    def asa_pool(x, adjT, valid_col, valid_count, pidx):
        pre = f'pool{pidx}_'
        h = x.shape[1]
        # add_remaining_self_loops(fill_value=1.), only for live nodes.
        a_slT = adjT + eye * jnp.where(adjT == 0.0, 1.0, 0.0) * valid_col
        mask_ds = (a_slT != 0.0).astype(f32)                # [dst, src]
        indeg_col = jnp.sum(mask_ds, axis=1, keepdims=True)
        # scatter-max of source features per target, unrolled over the n src rows
        # (select + max on [n,h] tiles; no [n,n,h] intermediate / XLU relayout).
        nm = jnp.full((n, h), _NEG_BIG, f32)
        for s in range(n):
            nm = jnp.maximum(nm, jnp.where(mask_ds[:, s:s + 1] > 0,
                                           x[s:s + 1, :], _NEG_BIG))
        nm = jnp.where(indeg_col > 0, nm, 0.0)              # keep sentinel off the MXU
        x_q = jnp.dot(nm, P(pre + 'lin_w'), preferred_element_type=f32) + P(pre + 'lin_b')
        q_col = jnp.dot(x_q, P(pre + 'att_w_q'), preferred_element_type=f32) + P(pre + 'att_b')
        s_col = jnp.dot(x, P(pre + 'att_w_s'), preferred_element_type=f32)
        raw = q_col + col_to_row(s_col)                     # [dst, src]
        raw = jnp.where(raw >= 0, raw, 0.2 * raw)           # leaky_relu(0.2)
        masked = jnp.where(mask_ds > 0, raw, _NEG_BIG)
        mx = jnp.max(masked, axis=1, keepdims=True)
        ex = jnp.exp(masked - mx) * mask_ds                 # masked entries exactly 0
        denom = jnp.sum(ex, axis=1, keepdims=True) + 1e-16
        score_ds = ex * pl.reciprocal(denom, approx=True)   # softmax per target (EUP)
        # cluster features: x_new[dst] = sum_src score * x[src]
        x_new = jnp.dot(score_ds, x, preferred_element_type=f32)
        # LEConv fitness (unweighted, self-looped edges, sum aggregation) + sigmoid.
        lin123 = jnp.dot(x_new, P(pre + 'le_w'), preferred_element_type=f32)   # (n,h)@(h,3)
        le_b = P(pre + 'le_b')                              # [1,2]
        a = lin123[:, 0:1] + le_b[:, 0:1]
        bb = lin123[:, 1:2]
        c = lin123[:, 2:3] + le_b[:, 1:2]
        fit = jnp.dot(mask_ds, a, preferred_element_type=f32) - indeg_col * bb + c
        fit = pl.reciprocal(1.0 + jnp.exp(-fit), approx=True)          # sigmoid via EUP
        # top-k by fitness, kept IN PLACE (pairwise-comparison rank; ties -> lower index).
        k = int(math.ceil(ratio * valid_count))
        fit_rank = jnp.where(valid_col > 0, fit, -1.0)      # dead nodes never selected
        fit_row = col_to_row(fit_rank)
        beats = (fit_row > fit_rank).astype(f32) + jnp.logical_and(
            fit_row == fit_rank, col_ids < row_ids).astype(f32)
        rank_col = jnp.sum(beats, axis=1, keepdims=True)                   # XLU reduce
        rank_row = (n - 1.0) - jnp.sum(beats, axis=0, keepdims=True)       # VPU reduce
        keep_col = (rank_col < k).astype(f32)               # exactly k ones
        keep_row = (rank_row < k).astype(f32)               # same mask, row-oriented
        # x <- x[perm] * fitness[perm]   (in place; dropped rows zeroed)
        x_out = x_new * fit * keep_col
        # A_new = S^T A_sl S, emitted already transposed (what the next cheb_prop needs).
        u = jax.lax.dot_general(a_slT, score_ds, (((1,), (1,)), ((), ())),
                                preferred_element_type=f32)
        adjT_new = jnp.dot(score_ds, u, preferred_element_type=f32)
        adjT_new = adjT_new * (1.0 - eye) * keep_col * keep_row
        return x_out, adjT_new, keep_col, k

    # ------------------------------- forward ------------------------------------------
    adjT = adjT_ref[...]
    x = x_ref[...]
    valid_col = jnp.ones((n, 1), jnp.float32)
    valid_count = n

    prop = cheb_prop(adjT)
    mats4 = cheb_mats(prop, 4)                 # T1, T2, T3 shared by conv1 and conv2
    x = cheb_apply(mats4, x, 'conv1_w', 'conv1_b', 4)
    x = cheb_apply(mats4, x, 'conv2_w', 'conv2_b', 4)
    pooled = [mean_pool(x, valid_col, valid_count)]
    mats2 = mats4[:1]                          # [T1] for the K=2 convs
    for i in range(n_convs):
        x = cheb_apply(mats2, x, f'convs{i}_w', f'convs{i}_b', 2)
        pooled.append(mean_pool(x, valid_col, valid_count))
        if i % 2 == 0 and i < n_convs - 1:
            x, adjT, valid_col, valid_count = asa_pool(x, adjT, valid_col,
                                                       valid_count, i // 2)
            prop = cheb_prop(adjT)
            mats2 = [prop]

    # JumpingKnowledge('cat') + lin1 as per-block dots (no [1, L*H] lane concat).
    r0, _, _ = offsets['lin1_w']
    acc = P('lin1_b')
    for i, pv in enumerate(pooled):
        wblk = slab_ref[r0 + i * hidden:r0 + (i + 1) * hidden, 0:hidden]
        acc = acc + jnp.dot(pv, wblk, preferred_element_type=jnp.float32)
    hid = jnp.maximum(acc, 0.0)
    # TODO(synk): F.dropout(p=0.5) has no deterministic equivalent; identity (eval mode).
    y = jnp.dot(hid, P('lin2_w'), preferred_element_type=jnp.float32) + P('lin2_b')
    z = y - jnp.max(y, axis=-1, keepdims=True)
    out_ref[...] = z - jnp.log(jnp.sum(jnp.exp(z), axis=-1, keepdims=True))


# --------------------------------------------------------------------------------------
# Host-side parameter packing (done ONCE, outside jit): one contiguous f32 slab,
# every entry 8-row aligned, common lane width; static offsets are baked into the kernel.
# --------------------------------------------------------------------------------------
def pack_params(params, hidden):
    entries = []

    def add(name, arr):
        arr = jnp.asarray(arr, jnp.float32)
        if arr.ndim == 1:
            arr = arr.reshape(1, -1)
        entries.append((name, arr))

    add('conv1_w', params['conv1_w']); add('conv1_b', params['conv1_b'])
    add('conv2_w', params['conv2_w']); add('conv2_b', params['conv2_b'])
    for i, (w, b) in enumerate(params['convs']):
        add(f'convs{i}_w', w); add(f'convs{i}_b', b)
    for i, p in enumerate(params['pools']):
        add(f'pool{i}_lin_w', p['lin_w']); add(f'pool{i}_lin_b', p['lin_b'])
        add(f'pool{i}_att_w_q', p['att_w'][:hidden])
        add(f'pool{i}_att_w_s', p['att_w'][hidden:])
        add(f'pool{i}_att_b', jnp.reshape(p['att_b'], (1, 1)))
        add(f'pool{i}_le_w', p['le_w']); add(f'pool{i}_le_b', p['le_b'])
    add('lin1_w', params['lin1_w']); add('lin1_b', params['lin1_b'])
    add('lin2_w', params['lin2_w']); add('lin2_b', params['lin2_b'])

    width = max(int(a.shape[1]) for _, a in entries)
    offsets, blocks, cursor = {}, [], 0
    for name, a in entries:
        r, c = a.shape
        rp = -(-r // 8) * 8                                  # 8-row aligned start
        blk = jnp.zeros((rp, width), jnp.float32).at[:r, :c].set(a)
        blocks.append(blk)
        offsets[name] = (cursor, r, c)
        cursor += rp
    slab = jnp.concatenate(blocks, axis=0)
    return slab, offsets


# --------------------------------------------------------------------------------------
# Wrapper: one pallas_call, 3 VMEM-resident inputs, no grid.
# --------------------------------------------------------------------------------------
def asap_forward(x, adj, slab, *, offsets, ratio, n_convs, hidden, num_classes):
    n, _ = x.shape
    kernel = functools.partial(_asap_fused_kernel, offsets=offsets, n=n,
                               n_convs=n_convs, ratio=ratio, hidden=hidden)
    return pl.pallas_call(
        kernel,
        out_shape=jax.ShapeDtypeStruct((1, num_classes), jnp.float32),
        in_specs=[pl.BlockSpec(memory_space=pltpu.MemorySpace.VMEM)] * 3,
        out_specs=pl.BlockSpec(memory_space=pltpu.MemorySpace.VMEM),
        compiler_params=pltpu.CompilerParams(vmem_limit_bytes=32 * 1024 * 1024),
    )(adj.T, x, slab)


# --------------------------------------------------------------------------------------
# Deterministic parameter initialization (shapes follow the PyTorch __init__)
# --------------------------------------------------------------------------------------
def _init_linear(key, fin, fout, bias=True):
    kw, kb = jax.random.split(key)
    w = jax.random.normal(kw, (fin, fout), jnp.float32) / jnp.sqrt(float(fin))
    b = 0.1 * jax.random.normal(kb, (fout,), jnp.float32) if bias else None
    return w, b


def _init_cheb(key, K, fin, fout):
    ks = jax.random.split(key, K + 1)
    w = jnp.concatenate(
        [jax.random.normal(ks[i], (fin, fout), jnp.float32) / jnp.sqrt(float(fin))
         for i in range(K)], axis=0)                      # stacked [K*fin, fout]
    b = 0.1 * jax.random.normal(ks[K], (fout,), jnp.float32)
    return w, b


def _init_pool(key, hidden):
    ks = jax.random.split(key, 5)
    lin_w, lin_b = _init_linear(ks[0], hidden, hidden)
    att_w, att_b = _init_linear(ks[1], 2 * hidden, 1)
    le1_w, le1_b = _init_linear(ks[2], hidden, 1)
    le2_w, _ = _init_linear(ks[3], hidden, 1, bias=False)
    le3_w, le3_b = _init_linear(ks[4], hidden, 1)
    return dict(lin_w=lin_w, lin_b=lin_b, att_w=att_w, att_b=att_b[0],
                le_w=jnp.concatenate([le1_w, le2_w, le3_w], axis=1),       # [H, 3]
                le_b=jnp.concatenate([le1_b, le3_b]).reshape(1, 2))        # [1, 2]


def init_params(key, num_features, num_classes, num_layers, hidden):
    h2 = hidden // 2
    n_convs = num_layers - 1
    n_pools = num_layers // 2
    keys = list(jax.random.split(key, 4 + n_convs + n_pools))
    p = {}
    p['conv1_w'], p['conv1_b'] = _init_cheb(keys[0], 4, num_features, h2)
    p['conv2_w'], p['conv2_b'] = _init_cheb(keys[1], 4, h2, hidden)
    p['convs'] = [_init_cheb(keys[2 + i], 2, hidden, hidden) for i in range(n_convs)]
    p['pools'] = [_init_pool(keys[2 + n_convs + i], hidden) for i in range(n_pools)]
    p['lin1_w'], p['lin1_b'] = _init_linear(keys[-2], num_layers * hidden, hidden)
    p['lin2_w'], p['lin2_b'] = _init_linear(keys[-1], hidden, num_classes)
    return p


# --------------------------------------------------------------------------------------
if __name__ == "__main__":
    N, NUM_FEATURES, HIDDEN, NUM_CLASSES, NUM_LAYERS = 16, 8, 32, 4, 3
    RATIO = 0.8

    key = jax.random.PRNGKey(0)
    kx, ke, kw, kp = jax.random.split(key, 4)

    # node features
    x = jax.random.normal(kx, (N, NUM_FEATURES), jnp.float32)

    # undirected graph: ring + random extra edges, symmetric positive weights, no self loops
    idx = jnp.arange(N)
    base = jnp.zeros((N, N), jnp.float32)
    base = base.at[idx, (idx + 1) % N].set(1.0)
    base = base.at[(idx + 1) % N, idx].set(1.0)
    r = jax.random.uniform(ke, (N, N))
    extra = ((r + r.T) > 1.4).astype(jnp.float32) * (1.0 - jnp.eye(N))
    mask = jnp.clip(base + extra, 0.0, 1.0)
    wts = 0.5 + jax.random.uniform(kw, (N, N))
    wts = 0.5 * (wts + wts.T)
    adj = mask * wts                               # adj[src, dst], zero diagonal

    params = init_params(kp, NUM_FEATURES, NUM_CLASSES, NUM_LAYERS, HIDDEN)
    slab, offsets = pack_params(params, HIDDEN)    # one-time packing, outside jit

    fwd = jax.jit(functools.partial(asap_forward, offsets=offsets, ratio=RATIO,
                                    n_convs=NUM_LAYERS - 1, hidden=HIDDEN,
                                    num_classes=NUM_CLASSES))
    out = fwd(x, adj, slab)
    out = jax.block_until_ready(out)

    assert out.shape == (1, NUM_CLASSES)
    assert bool(jnp.all(jnp.isfinite(out)))
    assert abs(float(jnp.sum(jnp.exp(out))) - 1.0) < 1e-3   # valid log-softmax row
    print("KERNEL_OK")
</pallas_src>

<mosaic_0001>
module attributes {stable_mosaic.version = 11 : i64} {
  func.func @_asap_fused_kernel(%arg0: memref<16x16xf32, #tpu.memory_space<vmem>>, %arg1: memref<16x8xf32, #tpu.memory_space<vmem>>, %arg2: memref<552x32xf32, #tpu.memory_space<vmem>>, %arg3: memref<1x4xf32, #tpu.memory_space<vmem>>) attributes {dimension_semantics = [], scalar_prefetch = 0 : i64, scratch_operands = 0 : i64, tpu.core_type = #tpu.core_type<tc>} {
    %0 = tpu.iota {dimensions = array<i32: 0>} : vector<16x16xi32>
    %1 = tpu.iota {dimensions = array<i32: 1>} : vector<16x16xi32>
    %2 = arith.cmpi eq, %0, %1 : vector<16x16xi32>
    %3 = arith.extui %2 : vector<16x16xi1> to vector<16x16xi32>
    %4 = arith.sitofp %3 : vector<16x16xi32> to vector<16x16xf32>
    %c0 = arith.constant 0 : index
    %c0_0 = arith.constant 0 : index
    %5 = vector.load %arg0[%c0, %c0_0] : memref<16x16xf32, #tpu.memory_space<vmem>>, vector<16x16xf32>
    %c0_1 = arith.constant 0 : index
    %c0_2 = arith.constant 0 : index
    %6 = vector.load %arg1[%c0_1, %c0_2] : memref<16x8xf32, #tpu.memory_space<vmem>>, vector<16x8xf32>
    %cst = arith.constant 1.000000e+00 : f32
    %7 = vector.broadcast %cst : f32 to vector<16x1xf32>
    %cst_3 = arith.constant 0.000000e+00 : f32
    %8 = vector.broadcast %cst_3 : f32 to vector<16x16xf32>
    %9 = arith.cmpf one, %5, %8 : vector<16x16xf32>
    %10 = arith.extui %9 : vector<16x16xi1> to vector<16x16xi32>
    %11 = arith.sitofp %10 : vector<16x16xi32> to vector<16x16xf32>
    %cst_4 = arith.constant dense<0.000000e+00> : vector<16xf32>
    %12 = vector.multi_reduction <add>, %5, %cst_4 [0] : vector<16x16xf32> to vector<16xf32>
    %13 = vector.shape_cast %12 : vector<16xf32> to vector<1x16xf32>
    %cst_5 = arith.constant 0.000000e+00 : f32
    %14 = vector.broadcast %cst_5 : f32 to vector<1x16xf32>
    %15 = arith.cmpf ogt, %13, %14 : vector<1x16xf32>
    %16 = math.rsqrt %13 : vector<1x16xf32>
    %cst_6 = arith.constant 0.000000e+00 : f32
    %17 = vector.broadcast %cst_6 : f32 to vector<1x16xf32>
    %18 = arith.select %15, %16, %17 : vector<1x16xi1>, vector<1x16xf32>
    %19 = vector.broadcast %18 : vector<1x16xf32> to vector<16x16xf32>
    %20 = arith.mulf %19, %4 : vector<16x16xf32>
    %cst_7 = arith.constant dense<0.000000e+00> : vector<16xf32>
    %21 = vector.multi_reduction <add>, %20, %cst_7 [1] : vector<16x16xf32> to vector<16xf32>
    %22 = vector.shape_cast %21 : vector<16xf32> to vector<16x1xf32>
    %cst_8 = arith.constant dense<0.000000e+00> : vector<16xf32>
    %23 = vector.multi_reduction <add>, %11, %cst_8 [1] : vector<16x16xf32> to vector<16xf32>
    %24 = vector.shape_cast %23 : vector<16xf32> to vector<16x1xf32>
    %25 = vector.broadcast %22 : vector<16x1xf32> to vector<16x16xf32>
    %26 = arith.mulf %5, %25 : vector<16x16xf32>
    %27 = vector.broadcast %18 : vector<1x16xf32> to vector<16x16xf32>
    %28 = arith.mulf %26, %27 : vector<16x16xf32>
    %cst_9 = arith.constant 0.000000e+00 : f32
    %29 = vector.broadcast %cst_9 : f32 to vector<16x16xf32>
    %30 = arith.subf %29, %28 : vector<16x16xf32>
    %cst_10 = arith.constant 1.000000e+00 : f32
    %31 = vector.broadcast %cst_10 : f32 to vector<16x1xf32>
    %32 = arith.addf %24, %31 : vector<16x1xf32>
    %33 = vector.broadcast %32 : vector<16x1xf32> to vector<16x16xf32>
    %34 = arith.divf %30, %33 : vector<16x16xf32>
    %cst_11 = arith.constant dense<0.000000e+00> : vector<16x16xf32>
    %35 = tpu.matmul %34, %34, %cst_11 {dimension_numbers = #tpu.dot_dimension_numbers<[1], [0], [0], [1], [0, 0, 1, 1], [], []>} : vector<16x16xf32>, vector<16x16xf32>, vector<16x16xf32> -> vector<16x16xf32>
    %cst_12 = arith.constant 2.000000e+00 : f32
    %36 = vector.broadcast %cst_12 : f32 to vector<16x16xf32>
    %37 = arith.mulf %36, %35 : vector<16x16xf32>
    %38 = arith.subf %37, %4 : vector<16x16xf32>
    %cst_13 = arith.constant dense<0.000000e+00> : vector<16x16xf32>
    %39 = tpu.matmul %34, %38, %cst_13 {dimension_numbers = #tpu.dot_dimension_numbers<[1], [0], [0], [1], [0, 0, 1, 1], [], []>} : vector<16x16xf32>, vector<16x16xf32>, vector<16x16xf32> -> vector<16x16xf32>
    %cst_14 = arith.constant 2.000000e+00 : f32
    %40 = vector.broadcast %cst_14 : f32 to vector<16x16xf32>
    %41 = arith.mulf %40, %39 : vector<16x16xf32>
    %42 = arith.subf %41, %34 : vector<16x16xf32>
    %c0_15 = arith.constant 0 : index
    %c0_16 = arith.constant 0 : index
    %43 = vector.load %arg2[%c0_15, %c0_16] : memref<552x32xf32, #tpu.memory_space<vmem>>, vector<8x16xf32>
    %cst_17 = arith.constant dense<0.000000e+00> : vector<16x16xf32>
    %44 = tpu.matmul %6, %43, %cst_17 {dimension_numbers = #tpu.dot_dimension_numbers<[1], [0], [0], [1], [0, 0, 1, 1], [], []>} : vector<16x8xf32>, vector<8x16xf32>, vector<16x16xf32> -> vector<16x16xf32>
    %cst_18 = arith.constant dense<0.000000e+00> : vector<16x8xf32>
    %45 = tpu.matmul %34, %6, %cst_18 {dimension_numbers = #tpu.dot_dimension_numbers<[1], [0], [0], [1], [0, 0, 1, 1], [], []>} : vector<16x16xf32>, vector<16x8xf32>, vector<16x8xf32> -> vector<16x8xf32>
    %c8 = arith.constant 8 : index
    %c0_19 = arith.constant 0 : index
    %46 = vector.load %arg2[%c8, %c0_19] : memref<552x32xf32, #tpu.memory_space<vmem>>, vector<8x16xf32>
    %cst_20 = arith.constant dense<0.000000e+00> : vector<16x16xf32>
    %47 = tpu.matmul %45, %46, %cst_20 {dimension_numbers = #tpu.dot_dimension_numbers<[1], [0], [0], [1], [0, 0, 1, 1], [], []>} : vector<16x8xf32>, vector<8x16xf32>, vector<16x16xf32> -> vector<16x16xf32>
    %48 = arith.addf %44, %47 : vector<16x16xf32>
    %cst_21 = arith.constant dense<0.000000e+00> : vector<16x8xf32>
    %49 = tpu.matmul %38, %6, %cst_21 {dimension_numbers = #tpu.dot_dimension_numbers<[1], [0], [0], [1], [0, 0, 1, 1], [], []>} : vector<16x16xf32>, vector<16x8xf32>, vector<16x8xf32> -> vector<16x8xf32>
    %c16 = arith.constant 16 : index
    %c0_22 = arith.constant 0 : index
    %50 = vector.load %arg2[%c16, %c0_22] : memref<552x32xf32, #tpu.memory_space<vmem>>, vector<8x16xf32>
    %cst_23 = arith.constant dense<0.000000e+00> : vector<16x16xf32>
    %51 = tpu.matmul %49, %50, %cst_23 {dimension_numbers = #tpu.dot_dimension_numbers<[1], [0], [0], [1], [0, 0, 1, 1], [], []>} : vector<16x8xf32>, vector<8x16xf32>, vector<16x16xf32> -> vector<16x16xf32>
    %52 = arith.addf %48, %51 : vector<16x16xf32>
    %cst_24 = arith.constant dense<0.000000e+00> : vector<16x8xf32>
    %53 = tpu.matmul %42, %6, %cst_24 {dimension_numbers = #tpu.dot_dimension_numbers<[1], [0], [0], [1], [0, 0, 1, 1], [], []>} : vector<16x16xf32>, vector<16x8xf32>, vector<16x8xf32> -> vector<16x8xf32>
    %c24 = arith.constant 24 : index
    %c0_25 = arith.constant 0 : index
    %54 = vector.load %arg2[%c24, %c0_25] : memref<552x32xf32, #tpu.memory_space<vmem>>, vector<8x16xf32>
    %cst_26 = arith.constant dense<0.000000e+00> : vector<16x16xf32>
    %55 = tpu.matmul %53, %54, %cst_26 {dimension_numbers = #tpu.dot_dimension_numbers<[1], [0], [0], [1], [0, 0, 1, 1], [], []>} : vector<16x8xf32>, vector<8x16xf32>, vector<16x16xf32> -> vector<16x16xf32>
    %56 = arith.addf %52, %55 : vector<16x16xf32>
    %c32 = arith.constant 32 : index
    %c0_27 = arith.constant 0 : index
    %57 = vector.load %arg2[%c32, %c0_27] : memref<552x32xf32, #tpu.memory_space<vmem>>, vector<1x16xf32>
    %58 = vector.broadcast %57 : vector<1x16xf32> to vector<16x16xf32>
    %59 = arith.addf %56, %58 : vector<16x16xf32>
    %cst_28 = arith.constant 0.000000e+00 : f32
    %60 = vector.broadcast %cst_28 : f32 to vector<16x16xf32>
    %61 = arith.maximumf %59, %60 : vector<16x16xf32>
    %c40 = arith.constant 40 : index
    %c0_29 = arith.constant 0 : index
    %62 = vector.load %arg2[%c40, %c0_29] : memref<552x32xf32, #tpu.memory_space<vmem>>, vector<16x32xf32>
    %cst_30 = arith.constant dense<0.000000e+00> : vector<16x32xf32>
    %63 = tpu.matmul %61, %62, %cst_30 {dimension_numbers = #tpu.dot_dimension_numbers<[1], [0], [0], [1], [0, 0, 1, 1], [], []>} : vector<16x16xf32>, vector<16x32xf32>, vector<16x32xf32> -> vector<16x32xf32>
    %cst_31 = arith.constant dense<0.000000e+00> : vector<16x16xf32>
    %64 = tpu.matmul %34, %61, %cst_31 {dimension_numbers = #tpu.dot_dimension_numbers<[1], [0], [0], [1], [0, 0, 1, 1], [], []>} : vector<16x16xf32>, vector<16x16xf32>, vector<16x16xf32> -> vector<16x16xf32>
    %c56 = arith.constant 56 : index
    %c0_32 = arith.constant 0 : index
    %65 = vector.load %arg2[%c56, %c0_32] : memref<552x32xf32, #tpu.memory_space<vmem>>, vector<16x32xf32>
    %cst_33 = arith.constant dense<0.000000e+00> : vector<16x32xf32>
    %66 = tpu.matmul %64, %65, %cst_33 {dimension_numbers = #tpu.dot_dimension_numbers<[1], [0], [0], [1], [0, 0, 1, 1], [], []>} : vector<16x16xf32>, vector<16x32xf32>, vector<16x32xf32> -> vector<16x32xf32>
    %67 = arith.addf %63, %66 : vector<16x32xf32>
    %cst_34 = arith.constant dense<0.000000e+00> : vector<16x16xf32>
    %68 = tpu.matmul %38, %61, %cst_34 {dimension_numbers = #tpu.dot_dimension_numbers<[1], [0], [0], [1], [0, 0, 1, 1], [], []>} : vector<16x16xf32>, vector<16x16xf32>, vector<16x16xf32> -> vector<16x16xf32>
    %c72 = arith.constant 72 : index
    %c0_35 = arith.constant 0 : index
    %69 = vector.load %arg2[%c72, %c0_35] : memref<552x32xf32, #tpu.memory_space<vmem>>, vector<16x32xf32>
    %cst_36 = arith.constant dense<0.000000e+00> : vector<16x32xf32>
    %70 = tpu.matmul %68, %69, %cst_36 {dimension_numbers = #tpu.dot_dimension_numbers<[1], [0], [0], [1], [0, 0, 1, 1], [], []>} : vector<16x16xf32>, vector<16x32xf32>, vector<16x32xf32> -> vector<16x32xf32>
    %71 = arith.addf %67, %70 : vector<16x32xf32>
    %cst_37 = arith.constant dense<0.000000e+00> : vector<16x16xf32>
    %72 = tpu.matmul %42, %61, %cst_37 {dimension_numbers = #tpu.dot_dimension_numbers<[1], [0], [0], [1], [0, 0, 1, 1], [], []>} : vector<16x16xf32>, vector<16x16xf32>, vector<16x16xf32> -> vector<16x16xf32>
    %c88 = arith.constant 88 : index
    %c0_38 = arith.constant 0 : index
    %73 = vector.load %arg2[%c88, %c0_38] : memref<552x32xf32, #tpu.memory_space<vmem>>, vector<16x32xf32>
    %cst_39 = arith.constant dense<0.000000e+00> : vector<16x32xf32>
    %74 = tpu.matmul %72, %73, %cst_39 {dimension_numbers = #tpu.dot_dimension_numbers<[1], [0], [0], [1], [0, 0, 1, 1], [], []>} : vector<16x16xf32>, vector<16x32xf32>, vector<16x32xf32> -> vector<16x32xf32>
    %75 = arith.addf %71, %74 : vector<16x32xf32>
    %c104 = arith.constant 104 : index
    %c0_40 = arith.constant 0 : index
    %76 = vector.load %arg2[%c104, %c0_40] : memref<552x32xf32, #tpu.memory_space<vmem>>, vector<1x32xf32>
    %77 = vector.broadcast %76 : vector<1x32xf32> to vector<16x32xf32>
    %78 = arith.addf %75, %77 : vector<16x32xf32>
    %cst_41 = arith.constant 0.000000e+00 : f32
    %79 = vector.broadcast %cst_41 : f32 to vector<16x32xf32>
    %80 = arith.maximumf %78, %79 : vector<16x32xf32>
    %81 = vector.broadcast %7 : vector<16x1xf32> to vector<16x32xf32>
    %82 = arith.mulf %80, %81 : vector<16x32xf32>
    %cst_42 = arith.constant dense<0.000000e+00> : vector<32xf32>
    %83 = vector.multi_reduction <add>, %82, %cst_42 [0] : vector<16x32xf32> to vector<32xf32>
    %84 = vector.shape_cast %83 : vector<32xf32> to vector<1x32xf32>
    %cst_43 = arith.constant 6.250000e-02 : f32
    %85 = vector.broadcast %cst_43 : f32 to vector<1x32xf32>
    %86 = arith.mulf %84, %85 : vector<1x32xf32>
    %c112 = arith.constant 112 : index
    %c0_44 = arith.constant 0 : index
    %87 = vector.load %arg2[%c112, %c0_44] : memref<552x32xf32, #tpu.memory_space<vmem>>, vector<32x32xf32>
    %cst_45 = arith.constant dense<0.000000e+00> : vector<16x32xf32>
    %88 = tpu.matmul %80, %87, %cst_45 {dimension_numbers = #tpu.dot_dimension_numbers<[1], [0], [0], [1], [0, 0, 1, 1], [], []>} : vector<16x32xf32>, vector<32x32xf32>, vector<16x32xf32> -> vector<16x32xf32>
    %cst_46 = arith.constant dense<0.000000e+00> : vector<16x32xf32>
    %89 = tpu.matmul %34, %80, %cst_46 {dimension_numbers = #tpu.dot_dimension_numbers<[1], [0], [0], [1], [0, 0, 1, 1], [], []>} : vector<16x16xf32>, vector<16x32xf32>, vector<16x32xf32> -> vector<16x32xf32>
    %c144 = arith.constant 144 : index
    %c0_47 = arith.constant 0 : index
    %90 = vector.load %arg2[%c144, %c0_47] : memref<552x32xf32, #tpu.memory_space<vmem>>, vector<32x32xf32>
    %cst_48 = arith.constant dense<0.000000e+00> : vector<16x32xf32>
    %91 = tpu.matmul %89, %90, %cst_48 {dimension_numbers = #tpu.dot_dimension_numbers<[1], [0], [0], [1], [0, 0, 1, 1], [], []>} : vector<16x32xf32>, vector<32x32xf32>, vector<16x32xf32> -> vector<16x32xf32>
    %92 = arith.addf %88, %91 : vector<16x32xf32>
    %c176 = arith.constant 176 : index
    %c0_49 = arith.constant 0 : index
    %93 = vector.load %arg2[%c176, %c0_49] : memref<552x32xf32, #tpu.memory_space<vmem>>, vector<1x32xf32>
    %94 = vector.broadcast %93 : vector<1x32xf32> to vector<16x32xf32>
    %95 = arith.addf %92, %94 : vector<16x32xf32>
    %cst_50 = arith.constant 0.000000e+00 : f32
    %96 = vector.broadcast %cst_50 : f32 to vector<16x32xf32>
    %97 = arith.maximumf %95, %96 : vector<16x32xf32>
    %98 = vector.broadcast %7 : vector<16x1xf32> to vector<16x32xf32>
    %99 = arith.mulf %97, %98 : vector<16x32xf32>
    %cst_51 = arith.constant dense<0.000000e+00> : vector<32xf32>
    %100 = vector.multi_reduction <add>, %99, %cst_51 [0] : vector<16x32xf32> to vector<32xf32>
    %101 = vector.shape_cast %100 : vector<32xf32> to vector<1x32xf32>
    %cst_52 = arith.constant 6.250000e-02 : f32
    %102 = vector.broadcast %cst_52 : f32 to vector<1x32xf32>
    %103 = arith.mulf %101, %102 : vector<1x32xf32>
    %cst_53 = arith.constant 0.000000e+00 : f32
    %104 = vector.broadcast %cst_53 : f32 to vector<16x16xf32>
    %105 = arith.cmpf oeq, %5, %104 : vector<16x16xf32>
    %cst_54 = arith.constant 1.000000e+00 : f32
    %cst_55 = arith.constant 0.000000e+00 : f32
    %106 = vector.broadcast %cst_54 : f32 to vector<16x16xf32>
    %107 = vector.broadcast %cst_55 : f32 to vector<16x16xf32>
    %108 = arith.select %105, %106, %107 : vector<16x16xi1>, vector<16x16xf32>
    %109 = arith.mulf %4, %108 : vector<16x16xf32>
    %110 = vector.broadcast %7 : vector<16x1xf32> to vector<16x16xf32>
    %111 = arith.mulf %109, %110 : vector<16x16xf32>
    %112 = arith.addf %5, %111 : vector<16x16xf32>
    %cst_56 = arith.constant 0.000000e+00 : f32
    %113 = vector.broadcast %cst_56 : f32 to vector<16x16xf32>
    %114 = arith.cmpf one, %112, %113 : vector<16x16xf32>
    %115 = arith.extui %114 : vector<16x16xi1> to vector<16x16xi32>
    %116 = arith.sitofp %115 : vector<16x16xi32> to vector<16x16xf32>
    %cst_57 = arith.constant dense<0.000000e+00> : vector<16xf32>
    %117 = vector.multi_reduction <add>, %116, %cst_57 [1] : vector<16x16xf32> to vector<16xf32>
    %118 = vector.shape_cast %117 : vector<16xf32> to vector<16x1xf32>
    %cst_58 = arith.constant -1.000000e+30 : f32
    %119 = vector.broadcast %cst_58 : f32 to vector<16x32xf32>
    %120 = vector.extract_strided_slice %116 {offsets = [0, 0], sizes = [16, 1], strides = [1, 1]} : vector<16x16xf32> to vector<16x1xf32>
    %cst_59 = arith.constant 0.000000e+00 : f32
    %121 = vector.broadcast %cst_59 : f32 to vector<16x1xf32>
    %122 = arith.cmpf ogt, %120, %121 : vector<16x1xf32>
    %123 = vector.extract_strided_slice %97 {offsets = [0, 0], sizes = [1, 32], strides = [1, 1]} : vector<16x32xf32> to vector<1x32xf32>
    %cst_60 = arith.constant -1.000000e+30 : f32
    %124 = vector.shape_cast %122 : vector<16x1xi1> to vector<16x1xi1>
    %125 = vector.broadcast %124 : vector<16x1xi1> to vector<16x32xi1>
    %126 = vector.shape_cast %123 : vector<1x32xf32> to vector<1x32xf32>
    %127 = vector.broadcast %126 : vector<1x32xf32> to vector<16x32xf32>
    %128 = vector.broadcast %cst_60 : f32 to vector<16x32xf32>
    %129 = arith.select %125, %127, %128 : vector<16x32xi1>, vector<16x32xf32>
    %130 = arith.maximumf %119, %129 : vector<16x32xf32>
    %131 = vector.extract_strided_slice %116 {offsets = [0, 1], sizes = [16, 1], strides = [1, 1]} : vector<16x16xf32> to vector<16x1xf32>
    %cst_61 = arith.constant 0.000000e+00 : f32
    %132 = vector.broadcast %cst_61 : f32 to vector<16x1xf32>
    %133 = arith.cmpf ogt, %131, %132 : vector<16x1xf32>
    %134 = vector.extract_strided_slice %97 {offsets = [1, 0], sizes = [1, 32], strides = [1, 1]} : vector<16x32xf32> to vector<1x32xf32>
    %cst_62 = arith.constant -1.000000e+30 : f32
    %135 = vector.shape_cast %133 : vector<16x1xi1> to vector<16x1xi1>
    %136 = vector.broadcast %135 : vector<16x1xi1> to vector<16x32xi1>
    %137 = vector.shape_cast %134 : vector<1x32xf32> to vector<1x32xf32>
    %138 = vector.broadcast %137 : vector<1x32xf32> to vector<16x32xf32>
    %139 = vector.broadcast %cst_62 : f32 to vector<16x32xf32>
    %140 = arith.select %136, %138, %139 : vector<16x32xi1>, vector<16x32xf32>
    %141 = arith.maximumf %130, %140 : vector<16x32xf32>
    %142 = vector.extract_strided_slice %116 {offsets = [0, 2], sizes = [16, 1], strides = [1, 1]} : vector<16x16xf32> to vector<16x1xf32>
    %cst_63 = arith.constant 0.000000e+00 : f32
    %143 = vector.broadcast %cst_63 : f32 to vector<16x1xf32>
    %144 = arith.cmpf ogt, %142, %143 : vector<16x1xf32>
    %145 = vector.extract_strided_slice %97 {offsets = [2, 0], sizes = [1, 32], strides = [1, 1]} : vector<16x32xf32> to vector<1x32xf32>
    %cst_64 = arith.constant -1.000000e+30 : f32
    %146 = vector.shape_cast %144 : vector<16x1xi1> to vector<16x1xi1>
    %147 = vector.broadcast %146 : vector<16x1xi1> to vector<16x32xi1>
    %148 = vector.shape_cast %145 : vector<1x32xf32> to vector<1x32xf32>
    %149 = vector.broadcast %148 : vector<1x32xf32> to vector<16x32xf32>
    %150 = vector.broadcast %cst_64 : f32 to vector<16x32xf32>
    %151 = arith.select %147, %149, %150 : vector<16x32xi1>, vector<16x32xf32>
    %152 = arith.maximumf %141, %151 : vector<16x32xf32>
    %153 = vector.extract_strided_slice %116 {offsets = [0, 3], sizes = [16, 1], strides = [1, 1]} : vector<16x16xf32> to vector<16x1xf32>
    %cst_65 = arith.constant 0.000000e+00 : f32
    %154 = vector.broadcast %cst_65 : f32 to vector<16x1xf32>
    %155 = arith.cmpf ogt, %153, %154 : vector<16x1xf32>
    %156 = vector.extract_strided_slice %97 {offsets = [3, 0], sizes = [1, 32], strides = [1, 1]} : vector<16x32xf32> to vector<1x32xf32>
    %cst_66 = arith.constant -1.000000e+30 : f32
    %157 = vector.shape_cast %155 : vector<16x1xi1> to vector<16x1xi1>
    %158 = vector.broadcast %157 : vector<16x1xi1> to vector<16x32xi1>
    %159 = vector.shape_cast %156 : vector<1x32xf32> to vector<1x32xf32>
    %160 = vector.broadcast %159 : vector<1x32xf32> to vector<16x32xf32>
    %161 = vector.broadcast %cst_66 : f32 to vector<16x32xf32>
    %162 = arith.select %158, %160, %161 : vector<16x32xi1>, vector<16x32xf32>
    %163 = arith.maximumf %152, %162 : vector<16x32xf32>
    %164 = vector.extract_strided_slice %116 {offsets = [0, 4], sizes = [16, 1], strides = [1, 1]} : vector<16x16xf32> to vector<16x1xf32>
    %cst_67 = arith.constant 0.000000e+00 : f32
    %165 = vector.broadcast %cst_67 : f32 to vector<16x1xf32>
    %166 = arith.cmpf ogt, %164, %165 : vector<16x1xf32>
    %167 = vector.extract_strided_slice %97 {offsets = [4, 0], sizes = [1, 32], strides = [1, 1]} : vector<16x32xf32> to vector<1x32xf32>
    %cst_68 = arith.constant -1.000000e+30 : f32
    %168 = vector.shape_cast %166 : vector<16x1xi1> to vector<16x1xi1>
    %169 = vector.broadcast %168 : vector<16x1xi1> to vector<16x32xi1>
    %170 = vector.shape_cast %167 : vector<1x32xf32> to vector<1x32xf32>
    %171 = vector.broadcast %170 : vector<1x32xf32> to vector<16x32xf32>
    %172 = vector.broadcast %cst_68 : f32 to vector<16x32xf32>
    %173 = arith.select %169, %171, %172 : vector<16x32xi1>, vector<16x32xf32>
    %174 = arith.maximumf %163, %173 : vector<16x32xf32>
    %175 = vector.extract_strided_slice %116 {offsets = [0, 5], sizes = [16, 1], strides = [1, 1]} : vector<16x16xf32> to vector<16x1xf32>
    %cst_69 = arith.constant 0.000000e+00 : f32
    %176 = vector.broadcast %cst_69 : f32 to vector<16x1xf32>
    %177 = arith.cmpf ogt, %175, %176 : vector<16x1xf32>
    %178 = vector.extract_strided_slice %97 {offsets = [5, 0], sizes = [1, 32], strides = [1, 1]} : vector<16x32xf32> to vector<1x32xf32>
    %cst_70 = arith.constant -1.000000e+30 : f32
    %179 = vector.shape_cast %177 : vector<16x1xi1> to vector<16x1xi1>
    %180 = vector.broadcast %179 : vector<16x1xi1> to vector<16x32xi1>
    %181 = vector.shape_cast %178 : vector<1x32xf32> to vector<1x32xf32>
    %182 = vector.broadcast %181 : vector<1x32xf32> to vector<16x32xf32>
    %183 = vector.broadcast %cst_70 : f32 to vector<16x32xf32>
    %184 = arith.select %180, %182, %183 : vector<16x32xi1>, vector<16x32xf32>
    %185 = arith.maximumf %174, %184 : vector<16x32xf32>
    %186 = vector.extract_strided_slice %116 {offsets = [0, 6], sizes = [16, 1], strides = [1, 1]} : vector<16x16xf32> to vector<16x1xf32>
    %cst_71 = arith.constant 0.000000e+00 : f32
    %187 = vector.broadcast %cst_71 : f32 to vector<16x1xf32>
    %188 = arith.cmpf ogt, %186, %187 : vector<16x1xf32>
    %189 = vector.extract_strided_slice %97 {offsets = [6, 0], sizes = [1, 32], strides = [1, 1]} : vector<16x32xf32> to vector<1x32xf32>
    %cst_72 = arith.constant -1.000000e+30 : f32
    %190 = vector.shape_cast %188 : vector<16x1xi1> to vector<16x1xi1>
    %191 = vector.broadcast %190 : vector<16x1xi1> to vector<16x32xi1>
    %192 = vector.shape_cast %189 : vector<1x32xf32> to vector<1x32xf32>
    %193 = vector.broadcast %192 : vector<1x32xf32> to vector<16x32xf32>
    %194 = vector.broadcast %cst_72 : f32 to vector<16x32xf32>
    %195 = arith.select %191, %193, %194 : vector<16x32xi1>, vector<16x32xf32>
    %196 = arith.maximumf %185, %195 : vector<16x32xf32>
    %197 = vector.extract_strided_slice %116 {offsets = [0, 7], sizes = [16, 1], strides = [1, 1]} : vector<16x16xf32> to vector<16x1xf32>
    %cst_73 = arith.constant 0.000000e+00 : f32
    %198 = vector.broadcast %cst_73 : f32 to vector<16x1xf32>
    %199 = arith.cmpf ogt, %197, %198 : vector<16x1xf32>
    %200 = vector.extract_strided_slice %97 {offsets = [7, 0], sizes = [1, 32], strides = [1, 1]} : vector<16x32xf32> to vector<1x32xf32>
    %cst_74 = arith.constant -1.000000e+30 : f32
    %201 = vector.shape_cast %199 : vector<16x1xi1> to vector<16x1xi1>
    %202 = vector.broadcast %201 : vector<16x1xi1> to vector<16x32xi1>
    %203 = vector.shape_cast %200 : vector<1x32xf32> to vector<1x32xf32>
    %204 = vector.broadcast %203 : vector<1x32xf32> to vector<16x32xf32>
    %205 = vector.broadcast %cst_74 : f32 to vector<16x32xf32>
    %206 = arith.select %202, %204, %205 : vector<16x32xi1>, vector<16x32xf32>
    %207 = arith.maximumf %196, %206 : vector<16x32xf32>
    %208 = vector.extract_strided_slice %116 {offsets = [0, 8], sizes = [16, 1], strides = [1, 1]} : vector<16x16xf32> to vector<16x1xf32>
    %cst_75 = arith.constant 0.000000e+00 : f32
    %209 = vector.broadcast %cst_75 : f32 to vector<16x1xf32>
    %210 = arith.cmpf ogt, %208, %209 : vector<16x1xf32>
    %211 = vector.extract_strided_slice %97 {offsets = [8, 0], sizes = [1, 32], strides = [1, 1]} : vector<16x32xf32> to vector<1x32xf32>
    %cst_76 = arith.constant -1.000000e+30 : f32
    %212 = vector.shape_cast %210 : vector<16x1xi1> to vector<16x1xi1>
    %213 = vector.broadcast %212 : vector<16x1xi1> to vector<16x32xi1>
    %214 = vector.shape_cast %211 : vector<1x32xf32> to vector<1x32xf32>
    %215 = vector.broadcast %214 : vector<1x32xf32> to vector<16x32xf32>
    %216 = vector.broadcast %cst_76 : f32 to vector<16x32xf32>
    %217 = arith.select %213, %215, %216 : vector<16x32xi1>, vector<16x32xf32>
    %218 = arith.maximumf %207, %217 : vector<16x32xf32>
    %219 = vector.extract_strided_slice %116 {offsets = [0, 9], sizes = [16, 1], strides = [1, 1]} : vector<16x16xf32> to vector<16x1xf32>
    %cst_77 = arith.constant 0.000000e+00 : f32
    %220 = vector.broadcast %cst_77 : f32 to vector<16x1xf32>
    %221 = arith.cmpf ogt, %219, %220 : vector<16x1xf32>
    %222 = vector.extract_strided_slice %97 {offsets = [9, 0], sizes = [1, 32], strides = [1, 1]} : vector<16x32xf32> to vector<1x32xf32>
    %cst_78 = arith.constant -1.000000e+30 : f32
    %223 = vector.shape_cast %221 : vector<16x1xi1> to vector<16x1xi1>
    %224 = vector.broadcast %223 : vector<16x1xi1> to vector<16x32xi1>
    %225 = vector.shape_cast %222 : vector<1x32xf32> to vector<1x32xf32>
    %226 = vector.broadcast %225 : vector<1x32xf32> to vector<16x32xf32>
    %227 = vector.broadcast %cst_78 : f32 to vector<16x32xf32>
    %228 = arith.select %224, %226, %227 : vector<16x32xi1>, vector<16x32xf32>
    %229 = arith.maximumf %218, %228 : vector<16x32xf32>
    %230 = vector.extract_strided_slice %116 {offsets = [0, 10], sizes = [16, 1], strides = [1, 1]} : vector<16x16xf32> to vector<16x1xf32>
    %cst_79 = arith.constant 0.000000e+00 : f32
    %231 = vector.broadcast %cst_79 : f32 to vector<16x1xf32>
    %232 = arith.cmpf ogt, %230, %231 : vector<16x1xf32>
    %233 = vector.extract_strided_slice %97 {offsets = [10, 0], sizes = [1, 32], strides = [1, 1]} : vector<16x32xf32> to vector<1x32xf32>
    %cst_80 = arith.constant -1.000000e+30 : f32
    %234 = vector.shape_cast %232 : vector<16x1xi1> to vector<16x1xi1>
    %235 = vector.broadcast %234 : vector<16x1xi1> to vector<16x32xi1>
    %236 = vector.shape_cast %233 : vector<1x32xf32> to vector<1x32xf32>
    %237 = vector.broadcast %236 : vector<1x32xf32> to vector<16x32xf32>
    %238 = vector.broadcast %cst_80 : f32 to vector<16x32xf32>
    %239 = arith.select %235, %237, %238 : vector<16x32xi1>, vector<16x32xf32>
    %240 = arith.maximumf %229, %239 : vector<16x32xf32>
    %241 = vector.extract_strided_slice %116 {offsets = [0, 11], sizes = [16, 1], strides = [1, 1]} : vector<16x16xf32> to vector<16x1xf32>
    %cst_81 = arith.constant 0.000000e+00 : f32
    %242 = vector.broadcast %cst_81 : f32 to vector<16x1xf32>
    %243 = arith.cmpf ogt, %241, %242 : vector<16x1xf32>
    %244 = vector.extract_strided_slice %97 {offsets = [11, 0], sizes = [1, 32], strides = [1, 1]} : vector<16x32xf32> to vector<1x32xf32>
    %cst_82 = arith.constant -1.000000e+30 : f32
    %245 = vector.shape_cast %243 : vector<16x1xi1> to vector<16x1xi1>
    %246 = vector.broadcast %245 : vector<16x1xi1> to vector<16x32xi1>
    %247 = vector.shape_cast %244 : vector<1x32xf32> to vector<1x32xf32>
    %248 = vector.broadcast %247 : vector<1x32xf32> to vector<16x32xf32>
    %249 = vector.broadcast %cst_82 : f32 to vector<16x32xf32>
    %250 = arith.select %246, %248, %249 : vector<16x32xi1>, vector<16x32xf32>
    %251 = arith.maximumf %240, %250 : vector<16x32xf32>
    %252 = vector.extract_strided_slice %116 {offsets = [0, 12], sizes = [16, 1], strides = [1, 1]} : vector<16x16xf32> to vector<16x1xf32>
    %cst_83 = arith.constant 0.000000e+00 : f32
    %253 = vector.broadcast %cst_83 : f32 to vector<16x1xf32>
    %254 = arith.cmpf ogt, %252, %253 : vector<16x1xf32>
    %255 = vector.extract_strided_slice %97 {offsets = [12, 0], sizes = [1, 32], strides = [1, 1]} : vector<16x32xf32> to vector<1x32xf32>
    %cst_84 = arith.constant -1.000000e+30 : f32
    %256 = vector.shape_cast %254 : vector<16x1xi1> to vector<16x1xi1>
    %257 = vector.broadcast %256 : vector<16x1xi1> to vector<16x32xi1>
    %258 = vector.shape_cast %255 : vector<1x32xf32> to vector<1x32xf32>
    %259 = vector.broadcast %258 : vector<1x32xf32> to vector<16x32xf32>
    %260 = vector.broadcast %cst_84 : f32 to vector<16x32xf32>
    %261 = arith.select %257, %259, %260 : vector<16x32xi1>, vector<16x32xf32>
    %262 = arith.maximumf %251, %261 : vector<16x32xf32>
    %263 = vector.extract_strided_slice %116 {offsets = [0, 13], sizes = [16, 1], strides = [1, 1]} : vector<16x16xf32> to vector<16x1xf32>
    %cst_85 = arith.constant 0.000000e+00 : f32
    %264 = vector.broadcast %cst_85 : f32 to vector<16x1xf32>
    %265 = arith.cmpf ogt, %263, %264 : vector<16x1xf32>
    %266 = vector.extract_strided_slice %97 {offsets = [13, 0], sizes = [1, 32], strides = [1, 1]} : vector<16x32xf32> to vector<1x32xf32>
    %cst_86 = arith.constant -1.000000e+30 : f32
    %267 = vector.shape_cast %265 : vector<16x1xi1> to vector<16x1xi1>
    %268 = vector.broadcast %267 : vector<16x1xi1> to vector<16x32xi1>
    %269 = vector.shape_cast %266 : vector<1x32xf32> to vector<1x32xf32>
    %270 = vector.broadcast %269 : vector<1x32xf32> to vector<16x32xf32>
    %271 = vector.broadcast %cst_86 : f32 to vector<16x32xf32>
    %272 = arith.select %268, %270, %271 : vector<16x32xi1>, vector<16x32xf32>
    %273 = arith.maximumf %262, %272 : vector<16x32xf32>
    %274 = vector.extract_strided_slice %116 {offsets = [0, 14], sizes = [16, 1], strides = [1, 1]} : vector<16x16xf32> to vector<16x1xf32>
    %cst_87 = arith.constant 0.000000e+00 : f32
    %275 = vector.broadcast %cst_87 : f32 to vector<16x1xf32>
    %276 = arith.cmpf ogt, %274, %275 : vector<16x1xf32>
    %277 = vector.extract_strided_slice %97 {offsets = [14, 0], sizes = [1, 32], strides = [1, 1]} : vector<16x32xf32> to vector<1x32xf32>
    %cst_88 = arith.constant -1.000000e+30 : f32
    %278 = vector.shape_cast %276 : vector<16x1xi1> to vector<16x1xi1>
    %279 = vector.broadcast %278 : vector<16x1xi1> to vector<16x32xi1>
    %280 = vector.shape_cast %277 : vector<1x32xf32> to vector<1x32xf32>
    %281 = vector.broadcast %280 : vector<1x32xf32> to vector<16x32xf32>
    %282 = vector.broadcast %cst_88 : f32 to vector<16x32xf32>
    %283 = arith.select %279, %281, %282 : vector<16x32xi1>, vector<16x32xf32>
    %284 = arith.maximumf %273, %283 : vector<16x32xf32>
    %285 = vector.extract_strided_slice %116 {offsets = [0, 15], sizes = [16, 1], strides = [1, 1]} : vector<16x16xf32> to vector<16x1xf32>
    %cst_89 = arith.constant 0.000000e+00 : f32
    %286 = vector.broadcast %cst_89 : f32 to vector<16x1xf32>
    %287 = arith.cmpf ogt, %285, %286 : vector<16x1xf32>
    %288 = vector.extract_strided_slice %97 {offsets = [15, 0], sizes = [1, 32], strides = [1, 1]} : vector<16x32xf32> to vector<1x32xf32>
    %cst_90 = arith.constant -1.000000e+30 : f32
    %289 = vector.shape_cast %287 : vector<16x1xi1> to vector<16x1xi1>
    %290 = vector.broadcast %289 : vector<16x1xi1> to vector<16x32xi1>
    %291 = vector.shape_cast %288 : vector<1x32xf32> to vector<1x32xf32>
    %292 = vector.broadcast %291 : vector<1x32xf32> to vector<16x32xf32>
    %293 = vector.broadcast %cst_90 : f32 to vector<16x32xf32>
    %294 = arith.select %290, %292, %293 : vector<16x32xi1>, vector<16x32xf32>
    %295 = arith.maximumf %284, %294 : vector<16x32xf32>
    %cst_91 = arith.constant 0.000000e+00 : f32
    %296 = vector.broadcast %cst_91 : f32 to vector<16x1xf32>
    %297 = arith.cmpf ogt, %118, %296 : vector<16x1xf32>
    %cst_92 = arith.constant 0.000000e+00 : f32
    %298 = vector.shape_cast %297 : vector<16x1xi1> to vector<16x1xi1>
    %299 = vector.broadcast %298 : vector<16x1xi1> to vector<16x32xi1>
    %300 = vector.broadcast %cst_92 : f32 to vector<16x32xf32>
    %301 = arith.select %299, %295, %300 : vector<16x32xi1>, vector<16x32xf32>
    %c256 = arith.constant 256 : index
    %c0_93 = arith.constant 0 : index
    %302 = vector.load %arg2[%c256, %c0_93] : memref<552x32xf32, #tpu.memory_space<vmem>>, vector<32x32xf32>
    %cst_94 = arith.constant dense<0.000000e+00> : vector<16x32xf32>
    %303 = tpu.matmul %301, %302, %cst_94 {dimension_numbers = #tpu.dot_dimension_numbers<[1], [0], [0], [1], [0, 0, 1, 1], [], []>} : vector<16x32xf32>, vector<32x32xf32>, vector<16x32xf32> -> vector<16x32xf32>
    %c288 = arith.constant 288 : index
    %c0_95 = arith.constant 0 : index
    %304 = vector.load %arg2[%c288, %c0_95] : memref<552x32xf32, #tpu.memory_space<vmem>>, vector<1x32xf32>
    %305 = vector.broadcast %304 : vector<1x32xf32> to vector<16x32xf32>
    %306 = arith.addf %303, %305 : vector<16x32xf32>
    %c296 = arith.constant 296 : index
    %c0_96 = arith.constant 0 : index
    %307 = vector.load %arg2[%c296, %c0_96] : memref<552x32xf32, #tpu.memory_space<vmem>>, vector<32x1xf32>
    %cst_97 = arith.constant dense<0.000000e+00> : vector<16x1xf32>
    %308 = tpu.matmul %306, %307, %cst_97 {dimension_numbers = #tpu.dot_dimension_numbers<[1], [0], [0], [1], [0, 0, 1, 1], [], []>} : vector<16x32xf32>, vector<32x1xf32>, vector<16x1xf32> -> vector<16x1xf32>
    %c360 = arith.constant 360 : index
    %c0_98 = arith.constant 0 : index
    %309 = vector.load %arg2[%c360, %c0_98] : memref<552x32xf32, #tpu.memory_space<vmem>>, vector<1x1xf32>
    %310 = vector.broadcast %309 : vector<1x1xf32> to vector<16x1xf32>
    %311 = arith.addf %308, %310 : vector<16x1xf32>
    %c328 = arith.constant 328 : index
    %c0_99 = arith.constant 0 : index
    %312 = vector.load %arg2[%c328, %c0_99] : memref<552x32xf32, #tpu.memory_space<vmem>>, vector<32x1xf32>
    %cst_100 = arith.constant dense<0.000000e+00> : vector<16x1xf32>
    %313 = tpu.matmul %97, %312, %cst_100 {dimension_numbers = #tpu.dot_dimension_numbers<[1], [0], [0], [1], [0, 0, 1, 1], [], []>} : vector<16x32xf32>, vector<32x1xf32>, vector<16x1xf32> -> vector<16x1xf32>
    %314 = vector.broadcast %313 : vector<16x1xf32> to vector<16x16xf32>
    %315 = arith.mulf %314, %4 : vector<16x16xf32>
    %cst_101 = arith.constant dense<0.000000e+00> : vector<16xf32>
    %316 = vector.multi_reduction <add>, %315, %cst_101 [0] : vector<16x16xf32> to vector<16xf32>
    %317 = vector.shape_cast %316 : vector<16xf32> to vector<1x16xf32>
    %318 = vector.broadcast %311 : vector<16x1xf32> to vector<16x16xf32>
    %319 = vector.broadcast %317 : vector<1x16xf32> to vector<16x16xf32>
    %320 = arith.addf %318, %319 : vector<16x16xf32>
    %cst_102 = arith.constant 0.000000e+00 : f32
    %321 = vector.broadcast %cst_102 : f32 to vector<16x16xf32>
    %322 = arith.cmpf oge, %320, %321 : vector<16x16xf32>
    %cst_103 = arith.constant 2.000000e-01 : f32
    %323 = vector.broadcast %cst_103 : f32 to vector<16x16xf32>
    %324 = arith.mulf %323, %320 : vector<16x16xf32>
    %325 = arith.select %322, %320, %324 : vector<16x16xi1>, vector<16x16xf32>
    %cst_104 = arith.constant 0.000000e+00 : f32
    %326 = vector.broadcast %cst_104 : f32 to vector<16x16xf32>
    %327 = arith.cmpf ogt, %116, %326 : vector<16x16xf32>
    %cst_105 = arith.constant -1.000000e+30 : f32
    %328 = vector.broadcast %cst_105 : f32 to vector<16x16xf32>
    %329 = arith.select %327, %325, %328 : vector<16x16xi1>, vector<16x16xf32>
    %cst_106 = arith.constant dense<0xFF800000> : vector<16xf32>
    %330 = vector.multi_reduction <maximumf>, %329, %cst_106 [1] : vector<16x16xf32> to vector<16xf32>
    %331 = vector.shape_cast %330 : vector<16xf32> to vector<16x1xf32>
    %332 = vector.broadcast %331 : vector<16x1xf32> to vector<16x16xf32>
    %333 = arith.subf %329, %332 : vector<16x16xf32>
    %334 = math.exp %333 : vector<16x16xf32>
    %335 = arith.mulf %334, %116 : vector<16x16xf32>
    %cst_107 = arith.constant dense<0.000000e+00> : vector<16xf32>
    %336 = vector.multi_reduction <add>, %335, %cst_107 [1] : vector<16x16xf32> to vector<16xf32>
    %337 = vector.shape_cast %336 : vector<16xf32> to vector<16x1xf32>
    %cst_108 = arith.constant 1.000000e-16 : f32
    %338 = vector.broadcast %cst_108 : f32 to vector<16x1xf32>
    %339 = arith.addf %337, %338 : vector<16x1xf32>
    %340 = tpu.reciprocal %339 {approx = true} : vector<16x1xf32> -> vector<16x1xf32>
    %341 = vector.broadcast %340 : vector<16x1xf32> to vector<16x16xf32>
    %342 = arith.mulf %335, %341 : vector<16x16xf32>
    %cst_109 = arith.constant dense<0.000000e+00> : vector<16x32xf32>
    %343 = tpu.matmul %342, %97, %cst_109 {dimension_numbers = #tpu.dot_dimension_numbers<[1], [0], [0], [1], [0, 0, 1, 1], [], []>} : vector<16x16xf32>, vector<16x32xf32>, vector<16x32xf32> -> vector<16x32xf32>
    %c368 = arith.constant 368 : index
    %c0_110 = arith.constant 0 : index
    %344 = vector.load %arg2[%c368, %c0_110] : memref<552x32xf32, #tpu.memory_space<vmem>>, vector<32x3xf32>
    %cst_111 = arith.constant dense<0.000000e+00> : vector<16x3xf32>
    %345 = tpu.matmul %343, %344, %cst_111 {dimension_numbers = #tpu.dot_dimension_numbers<[1], [0], [0], [1], [0, 0, 1, 1], [], []>} : vector<16x32xf32>, vector<32x3xf32>, vector<16x3xf32> -> vector<16x3xf32>
    %c400 = arith.constant 400 : index
    %c0_112 = arith.constant 0 : index
    %346 = vector.load %arg2[%c400, %c0_112] : memref<552x32xf32, #tpu.memory_space<vmem>>, vector<1x2xf32>
    %347 = vector.extract_strided_slice %345 {offsets = [0, 0], sizes = [16, 1], strides = [1, 1]} : vector<16x3xf32> to vector<16x1xf32>
    %348 = vector.extract_strided_slice %346 {offsets = [0, 0], sizes = [1, 1], strides = [1, 1]} : vector<1x2xf32> to vector<1x1xf32>
    %349 = vector.broadcast %348 : vector<1x1xf32> to vector<16x1xf32>
    %350 = arith.addf %347, %349 : vector<16x1xf32>
    %351 = vector.extract_strided_slice %345 {offsets = [0, 1], sizes = [16, 1], strides = [1, 1]} : vector<16x3xf32> to vector<16x1xf32>
    %352 = vector.extract_strided_slice %345 {offsets = [0, 2], sizes = [16, 1], strides = [1, 1]} : vector<16x3xf32> to vector<16x1xf32>
    %353 = vector.extract_strided_slice %346 {offsets = [0, 1], sizes = [1, 1], strides = [1, 1]} : vector<1x2xf32> to vector<1x1xf32>
    %354 = vector.broadcast %353 : vector<1x1xf32> to vector<16x1xf32>
    %355 = arith.addf %352, %354 : vector<16x1xf32>
    %cst_113 = arith.constant dense<0.000000e+00> : vector<16x1xf32>
    %356 = tpu.matmul %116, %350, %cst_113 {dimension_numbers = #tpu.dot_dimension_numbers<[1], [0], [0], [1], [0, 0, 1, 1], [], []>} : vector<16x16xf32>, vector<16x1xf32>, vector<16x1xf32> -> vector<16x1xf32>
    %357 = arith.mulf %118, %351 : vector<16x1xf32>
    %358 = arith.subf %356, %357 : vector<16x1xf32>
    %359 = arith.addf %358, %355 : vector<16x1xf32>
    %cst_114 = arith.constant 0.000000e+00 : f32
    %360 = vector.broadcast %cst_114 : f32 to vector<16x1xf32>
    %361 = arith.subf %360, %359 : vector<16x1xf32>
    %362 = math.exp %361 : vector<16x1xf32>
    %cst_115 = arith.constant 1.000000e+00 : f32
    %363 = vector.broadcast %cst_115 : f32 to vector<16x1xf32>
    %364 = arith.addf %363, %362 : vector<16x1xf32>
    %365 = tpu.reciprocal %364 {approx = true} : vector<16x1xf32> -> vector<16x1xf32>
    %cst_116 = arith.constant 0.000000e+00 : f32
    %366 = vector.broadcast %cst_116 : f32 to vector<16x1xf32>
    %367 = arith.cmpf ogt, %7, %366 : vector<16x1xf32>
    %cst_117 = arith.constant -1.000000e+00 : f32
    %368 = vector.broadcast %cst_117 : f32 to vector<16x1xf32>
    %369 = arith.select %367, %365, %368 : vector<16x1xi1>, vector<16x1xf32>
    %370 = vector.broadcast %369 : vector<16x1xf32> to vector<16x16xf32>
    %371 = arith.mulf %370, %4 : vector<16x16xf32>
    %cst_118 = arith.constant dense<0.000000e+00> : vector<16xf32>
    %372 = vector.multi_reduction <add>, %371, %cst_118 [0] : vector<16x16xf32> to vector<16xf32>
    %373 = vector.shape_cast %372 : vector<16xf32> to vector<1x16xf32>
    %374 = vector.broadcast %373 : vector<1x16xf32> to vector<16x16xf32>
    %375 = vector.broadcast %369 : vector<16x1xf32> to vector<16x16xf32>
    %376 = arith.cmpf ogt, %374, %375 : vector<16x16xf32>
    %377 = arith.extui %376 : vector<16x16xi1> to vector<16x16xi32>
    %378 = arith.sitofp %377 : vector<16x16xi32> to vector<16x16xf32>
    %379 = vector.broadcast %373 : vector<1x16xf32> to vector<16x16xf32>
    %380 = vector.broadcast %369 : vector<16x1xf32> to vector<16x16xf32>
    %381 = arith.cmpf oeq, %379, %380 : vector<16x16xf32>
    %382 = arith.cmpi slt, %1, %0 : vector<16x16xi32>
    %383 = arith.andi %381, %382 : vector<16x16xi1>
    %384 = arith.extui %383 : vector<16x16xi1> to vector<16x16xi32>
    %385 = arith.sitofp %384 : vector<16x16xi32> to vector<16x16xf32>
    %386 = arith.addf %378, %385 : vector<16x16xf32>
    %cst_119 = arith.constant dense<0.000000e+00> : vector<16xf32>
    %387 = vector.multi_reduction <add>, %386, %cst_119 [1] : vector<16x16xf32> to vector<16xf32>
    %388 = vector.shape_cast %387 : vector<16xf32> to vector<16x1xf32>
    %cst_120 = arith.constant dense<0.000000e+00> : vector<16xf32>
    %389 = vector.multi_reduction <add>, %386, %cst_120 [0] : vector<16x16xf32> to vector<16xf32>
    %390 = vector.shape_cast %389 : vector<16xf32> to vector<1x16xf32>
    %cst_121 = arith.constant 1.500000e+01 : f32
    %391 = vector.broadcast %cst_121 : f32 to vector<1x16xf32>
    %392 = arith.subf %391, %390 : vector<1x16xf32>
    %cst_122 = arith.constant 1.300000e+01 : f32
    %393 = vector.broadcast %cst_122 : f32 to vector<16x1xf32>
    %394 = arith.cmpf olt, %388, %393 : vector<16x1xf32>
    %395 = arith.extui %394 : vector<16x1xi1> to vector<16x1xi32>
    %396 = arith.sitofp %395 : vector<16x1xi32> to vector<16x1xf32>
    %cst_123 = arith.constant 1.300000e+01 : f32
    %397 = vector.broadcast %cst_123 : f32 to vector<1x16xf32>
    %398 = arith.cmpf olt, %392, %397 : vector<1x16xf32>
    %399 = arith.extui %398 : vector<1x16xi1> to vector<1x16xi32>
    %400 = arith.sitofp %399 : vector<1x16xi32> to vector<1x16xf32>
    %401 = vector.broadcast %365 : vector<16x1xf32> to vector<16x32xf32>
    %402 = arith.mulf %343, %401 : vector<16x32xf32>
    %403 = vector.broadcast %396 : vector<16x1xf32> to vector<16x32xf32>
    %404 = arith.mulf %402, %403 : vector<16x32xf32>
    %cst_124 = arith.constant dense<0.000000e+00> : vector<16x16xf32>
    %405 = tpu.matmul %112, %342, %cst_124 {dimension_numbers = #tpu.dot_dimension_numbers<[1], [1], [0], [0], [0, 0, 1, 0], [], []>} : vector<16x16xf32>, vector<16x16xf32>, vector<16x16xf32> -> vector<16x16xf32>
    %cst_125 = arith.constant dense<0.000000e+00> : vector<16x16xf32>
    %406 = tpu.matmul %342, %405, %cst_125 {dimension_numbers = #tpu.dot_dimension_numbers<[1], [0], [0], [1], [0, 0, 1, 1], [], []>} : vector<16x16xf32>, vector<16x16xf32>, vector<16x16xf32> -> vector<16x16xf32>
    %cst_126 = arith.constant 1.000000e+00 : f32
    %407 = vector.broadcast %cst_126 : f32 to vector<16x16xf32>
    %408 = arith.subf %407, %4 : vector<16x16xf32>
    %409 = arith.mulf %406, %408 : vector<16x16xf32>
    %410 = vector.broadcast %396 : vector<16x1xf32> to vector<16x16xf32>
    %411 = arith.mulf %409, %410 : vector<16x16xf32>
    %412 = vector.broadcast %400 : vector<1x16xf32> to vector<16x16xf32>
    %413 = arith.mulf %411, %412 : vector<16x16xf32>
    %cst_127 = arith.constant 0.000000e+00 : f32
    %414 = vector.broadcast %cst_127 : f32 to vector<16x16xf32>
    %415 = arith.cmpf one, %413, %414 : vector<16x16xf32>
    %416 = arith.extui %415 : vector<16x16xi1> to vector<16x16xi32>
    %417 = arith.sitofp %416 : vector<16x16xi32> to vector<16x16xf32>
    %cst_128 = arith.constant dense<0.000000e+00> : vector<16xf32>
    %418 = vector.multi_reduction <add>, %413, %cst_128 [0] : vector<16x16xf32> to vector<16xf32>
    %419 = vector.shape_cast %418 : vector<16xf32> to vector<1x16xf32>
    %cst_129 = arith.constant 0.000000e+00 : f32
    %420 = vector.broadcast %cst_129 : f32 to vector<1x16xf32>
    %421 = arith.cmpf ogt, %419, %420 : vector<1x16xf32>
    %422 = math.rsqrt %419 : vector<1x16xf32>
    %cst_130 = arith.constant 0.000000e+00 : f32
    %423 = vector.broadcast %cst_130 : f32 to vector<1x16xf32>
    %424 = arith.select %421, %422, %423 : vector<1x16xi1>, vector<1x16xf32>
    %425 = vector.broadcast %424 : vector<1x16xf32> to vector<16x16xf32>
    %426 = arith.mulf %425, %4 : vector<16x16xf32>
    %cst_131 = arith.constant dense<0.000000e+00> : vector<16xf32>
    %427 = vector.multi_reduction <add>, %426, %cst_131 [1] : vector<16x16xf32> to vector<16xf32>
    %428 = vector.shape_cast %427 : vector<16xf32> to vector<16x1xf32>
    %cst_132 = arith.constant dense<0.000000e+00> : vector<16xf32>
    %429 = vector.multi_reduction <add>, %417, %cst_132 [1] : vector<16x16xf32> to vector<16xf32>
    %430 = vector.shape_cast %429 : vector<16xf32> to vector<16x1xf32>
    %431 = vector.broadcast %428 : vector<16x1xf32> to vector<16x16xf32>
    %432 = arith.mulf %413, %431 : vector<16x16xf32>
    %433 = vector.broadcast %424 : vector<1x16xf32> to vector<16x16xf32>
    %434 = arith.mulf %432, %433 : vector<16x16xf32>
    %cst_133 = arith.constant 0.000000e+00 : f32
    %435 = vector.broadcast %cst_133 : f32 to vector<16x16xf32>
    %436 = arith.subf %435, %434 : vector<16x16xf32>
    %cst_134 = arith.constant 1.000000e+00 : f32
    %437 = vector.broadcast %cst_134 : f32 to vector<16x1xf32>
    %438 = arith.addf %430, %437 : vector<16x1xf32>
    %439 = vector.broadcast %438 : vector<16x1xf32> to vector<16x16xf32>
    %440 = arith.divf %436, %439 : vector<16x16xf32>
    %c184 = arith.constant 184 : index
    %c0_135 = arith.constant 0 : index
    %441 = vector.load %arg2[%c184, %c0_135] : memref<552x32xf32, #tpu.memory_space<vmem>>, vector<32x32xf32>
    %cst_136 = arith.constant dense<0.000000e+00> : vector<16x32xf32>
    %442 = tpu.matmul %404, %441, %cst_136 {dimension_numbers = #tpu.dot_dimension_numbers<[1], [0], [0], [1], [0, 0, 1, 1], [], []>} : vector<16x32xf32>, vector<32x32xf32>, vector<16x32xf32> -> vector<16x32xf32>
    %cst_137 = arith.constant dense<0.000000e+00> : vector<16x32xf32>
    %443 = tpu.matmul %440, %404, %cst_137 {dimension_numbers = #tpu.dot_dimension_numbers<[1], [0], [0], [1], [0, 0, 1, 1], [], []>} : vector<16x16xf32>, vector<16x32xf32>, vector<16x32xf32> -> vector<16x32xf32>
    %c216 = arith.constant 216 : index
    %c0_138 = arith.constant 0 : index
    %444 = vector.load %arg2[%c216, %c0_138] : memref<552x32xf32, #tpu.memory_space<vmem>>, vector<32x32xf32>
    %cst_139 = arith.constant dense<0.000000e+00> : vector<16x32xf32>
    %445 = tpu.matmul %443, %444, %cst_139 {dimension_numbers = #tpu.dot_dimension_numbers<[1], [0], [0], [1], [0, 0, 1, 1], [], []>} : vector<16x32xf32>, vector<32x32xf32>, vector<16x32xf32> -> vector<16x32xf32>
    %446 = arith.addf %442, %445 : vector<16x32xf32>
    %c248 = arith.constant 248 : index
    %c0_140 = arith.constant 0 : index
    %447 = vector.load %arg2[%c248, %c0_140] : memref<552x32xf32, #tpu.memory_space<vmem>>, vector<1x32xf32>
    %448 = vector.broadcast %447 : vector<1x32xf32> to vector<16x32xf32>
    %449 = arith.addf %446, %448 : vector<16x32xf32>
    %cst_141 = arith.constant 0.000000e+00 : f32
    %450 = vector.broadcast %cst_141 : f32 to vector<16x32xf32>
    %451 = arith.maximumf %449, %450 : vector<16x32xf32>
    %452 = vector.broadcast %396 : vector<16x1xf32> to vector<16x32xf32>
    %453 = arith.mulf %451, %452 : vector<16x32xf32>
    %cst_142 = arith.constant dense<0.000000e+00> : vector<32xf32>
    %454 = vector.multi_reduction <add>, %453, %cst_142 [0] : vector<16x32xf32> to vector<32xf32>
    %455 = vector.shape_cast %454 : vector<32xf32> to vector<1x32xf32>
    %cst_143 = arith.constant 0.0769230798 : f32
    %456 = vector.broadcast %cst_143 : f32 to vector<1x32xf32>
    %457 = arith.mulf %455, %456 : vector<1x32xf32>
    %c504 = arith.constant 504 : index
    %c0_144 = arith.constant 0 : index
    %458 = vector.load %arg2[%c504, %c0_144] : memref<552x32xf32, #tpu.memory_space<vmem>>, vector<1x32xf32>
    %c408 = arith.constant 408 : index
    %c0_145 = arith.constant 0 : index
    %459 = vector.load %arg2[%c408, %c0_145] : memref<552x32xf32, #tpu.memory_space<vmem>>, vector<32x32xf32>
    %cst_146 = arith.constant dense<0.000000e+00> : vector<1x32xf32>
    %460 = tpu.matmul %86, %459, %cst_146 {dimension_numbers = #tpu.dot_dimension_numbers<[1], [0], [0], [1], [0, 0, 1, 1], [], []>} : vector<1x32xf32>, vector<32x32xf32>, vector<1x32xf32> -> vector<1x32xf32>
    %461 = arith.addf %458, %460 : vector<1x32xf32>
    %c440 = arith.constant 440 : index
    %c0_147 = arith.constant 0 : index
    %462 = vector.load %arg2[%c440, %c0_147] : memref<552x32xf32, #tpu.memory_space<vmem>>, vector<32x32xf32>
    %cst_148 = arith.constant dense<0.000000e+00> : vector<1x32xf32>
    %463 = tpu.matmul %103, %462, %cst_148 {dimension_numbers = #tpu.dot_dimension_numbers<[1], [0], [0], [1], [0, 0, 1, 1], [], []>} : vector<1x32xf32>, vector<32x32xf32>, vector<1x32xf32> -> vector<1x32xf32>
    %464 = arith.addf %461, %463 : vector<1x32xf32>
    %c472 = arith.constant 472 : index
    %c0_149 = arith.constant 0 : index
    %465 = vector.load %arg2[%c472, %c0_149] : memref<552x32xf32, #tpu.memory_space<vmem>>, vector<32x32xf32>
    %cst_150 = arith.constant dense<0.000000e+00> : vector<1x32xf32>
    %466 = tpu.matmul %457, %465, %cst_150 {dimension_numbers = #tpu.dot_dimension_numbers<[1], [0], [0], [1], [0, 0, 1, 1], [], []>} : vector<1x32xf32>, vector<32x32xf32>, vector<1x32xf32> -> vector<1x32xf32>
    %467 = arith.addf %464, %466 : vector<1x32xf32>
    %cst_151 = arith.constant 0.000000e+00 : f32
    %468 = vector.broadcast %cst_151 : f32 to vector<1x32xf32>
    %469 = arith.maximumf %467, %468 : vector<1x32xf32>
    %c512 = arith.constant 512 : index
    %c0_152 = arith.constant 0 : index
    %470 = vector.load %arg2[%c512, %c0_152] : memref<552x32xf32, #tpu.memory_space<vmem>>, vector<32x4xf32>
    %cst_153 = arith.constant dense<0.000000e+00> : vector<1x4xf32>
    %471 = tpu.matmul %469, %470, %cst_153 {dimension_numbers = #tpu.dot_dimension_numbers<[1], [0], [0], [1], [0, 0, 1, 1], [], []>} : vector<1x32xf32>, vector<32x4xf32>, vector<1x4xf32> -> vector<1x4xf32>
    %c544 = arith.constant 544 : index
    %c0_154 = arith.constant 0 : index
    %472 = vector.load %arg2[%c544, %c0_154] : memref<552x32xf32, #tpu.memory_space<vmem>>, vector<1x4xf32>
    %473 = arith.addf %471, %472 : vector<1x4xf32>
    %cst_155 = arith.constant dense<0xFF800000> : vector<1xf32>
    %474 = vector.multi_reduction <maximumf>, %473, %cst_155 [1] : vector<1x4xf32> to vector<1xf32>
    %475 = vector.shape_cast %474 : vector<1xf32> to vector<1x1xf32>
    %476 = vector.broadcast %475 : vector<1x1xf32> to vector<1x4xf32>
    %477 = arith.subf %473, %476 : vector<1x4xf32>
    %478 = math.exp %477 : vector<1x4xf32>
    %cst_156 = arith.constant dense<0.000000e+00> : vector<1xf32>
    %479 = vector.multi_reduction <add>, %478, %cst_156 [1] : vector<1x4xf32> to vector<1xf32>
    %480 = vector.shape_cast %479 : vector<1xf32> to vector<1x1xf32>
    %481 = math.log %480 : vector<1x1xf32>
    %482 = vector.broadcast %481 : vector<1x1xf32> to vector<1x4xf32>
    %483 = arith.subf %477, %482 : vector<1x4xf32>
    %c0_157 = arith.constant 0 : index
    %c0_158 = arith.constant 0 : index
    %484 = vector.load %arg3[%c0_157, %c0_158] : memref<1x4xf32, #tpu.memory_space<vmem>>, vector<1x4xf32>
    tpu.vector_store %arg3[%c0_157, %c0_158], %483 {strides = array<i32>} : memref<1x4xf32, #tpu.memory_space<vmem>>, vector<1x4xf32>,
    return
  }
}

</mosaic_0001>

<llo_original>
// kernel: asap_forward.1
$region0: #{asap_forward.1}
  #allocation0 [shape = 'u32[]', space=smem, size = 0x4, offset = 0x4, fixed_abs, tag = 'smem constant byte address 0x4 - core index']
  #allocation1 [shape = 'u32[144,128]{1,0:T(1,128)}', space=vmem, size = 0x12000, scoped, tag = 'internal scratch']
  %s0 = inlined_call_operand.vmem [shape: f32[16,16], index: 0, kind: input, shape index: {}]
  %s1 = inlined_call_operand.vmem [shape: f32[16,8], index: 1, kind: input, shape index: {}]
  %s2 = inlined_call_operand.vmem [shape: f32[552,32], index: 2, kind: input, shape index: {}]
  %s3 = inlined_call_operand.hbm [shape: f32[1,4], index: 3, kind: output, shape index: {}]
  %s4 = sld [smem:[#allocation0]]
  $region22: #{asap_forward.1} parent=0
    _
  %s6 = ssub.s32 1, %s4
  %s7 = scalar_select 0, %s6, %s4
  $region1: #{asap_forward.1} parent=0
    #allocation2 [shape = 'u8[512]{0}', space=vmem, size = 0x400, scoped, tag = 'output window, operand 0, single buffered']
    #allocation3 [shape = 's32[1]{0}', space=sflag, size = 0x4, scoped, tag = 'scoped memory for asap_forward.1']
    %8 = vsyncpa [#allocation3], 0
    // Predicated region
    $region2: #{asap_forward.1} parent=1 // pred_check
      _
    $region3: #{asap_forward.1} parent=1 // pred_check_branch
      %10 = sbr.rel (0) target = $region5
    $region4: #{asap_forward.1} parent=1 // pred_region
      _
    $region5: #{asap_forward.1} parent=1 // pred_fallthru
      _
    // Predicated region
    $region6: #{asap_forward.1} parent=1 // pred_check
      _
    $region7: #{asap_forward.1} parent=1 // pred_check_branch
      %12 = sbr.rel (0) target = $region9
    $region8: #{asap_forward.1} parent=1 // pred_region
      _
    $region9: #{asap_forward.1} parent=1 // pred_fallthru
      _
    // Predicated region
    $region10: #{asap_forward.1} parent=1 // pred_check
      _
    $region11: #{asap_forward.1} parent=1 // pred_check_branch
      %14 = sbr.rel (0) target = $region13
    $region12: #{asap_forward.1} parent=1 // pred_region
      _
    $region13: #{asap_forward.1} parent=1 // pred_fallthru
      _
    %v15 = vlaneseq
    %v16 = vshrl.u32 %v15, 7
    %v17 = vadd.s32 %v16, 8
    %v18 = vlaneseq
    %v19 = vand.u32 %v18, 127
    %vm20 = vcmp.eq.s32.totalorder %v16, %v19
    %vm21 = vcmp.eq.s32.totalorder %v17, %v19
    %v22 = vsel %vm20, 1, 0
    %v23 = vsel %vm21, 1, 0
    %v24 = vcvt.s32.f32 %v22
    %v25 = vcvt.s32.f32 %v23
    %v26 = vld [vmem:[%s0] sm:$0xff]
    %v27 = vld [vmem:[%s0 + $0x8] sm:$0xff]
    %v28 = vld [vmem:[%s1] sm:$0xff]
    %v29 = vld [vmem:[%s1 + $0x8] sm:$0xff]
    %vm30 = vcmp.ne.f32.partialorder %v26, 0.0
    %vm31 = vcmp.ne.f32.partialorder %v27, 0.0
    %v32 = vsel %vm30, 1, 0
    %v33 = vsel %vm31, 1, 0
    %v34 = vcvt.s32.f32 %v32
    %v35 = vcvt.s32.f32 %v33
    %vm36 = vcmask 130048
    %v37 = vsel %vm36, %v26, 0.0
    %v38 = vsel %vm36, %v27, 0.0
    %v39 = vadd.f32 %v37, %v38
    %v40 = vrot.slane %v39, 4
    %v41 = vadd.f32 %v39, %v40
    %v42 = vrot.slane %v41, 2
    %v43 = vadd.f32 %v41, %v42
    %v44 = vrot.slane %v43, 1
    %v45 = vadd.f32 %v43, %v44
    %vm46 = vcmp.gt.f32.partialorder %v45, 0.0
    %v47 = vrsqrt.pop %v45
    %v48 = vsel %vm46, %v47, 0.0
    %v49 = vmul.f32 %v48, %v24
    %v50 = vmul.f32 %v48, %v25
    %v51 = vsel %vm36, %v49, 0.0
    %52 = vadd.xlane.f32.xlu0 %v51
    %v53 = vpop.xlane.xlu0 %52
    %v54 = vsel %vm36, %v50, 0.0
    %55 = vadd.xlane.f32.xlu0 %v54
    %v56 = vpop.xlane.xlu0 %55
    %v57 = vsel %vm36, %v34, 0.0
    %58 = vadd.xlane.f32.xlu0 %v57
    %v59 = vpop.xlane.xlu0 %58
    %v60 = vsel %vm36, %v35, 0.0
    %61 = vadd.xlane.f32.xlu0 %v60
    %v62 = vpop.xlane.xlu0 %61
    %v63 = vmul.f32 %v26, %v53
    %v64 = vmul.f32 %v27, %v56
    %v65 = vmul.f32 %v63, %v48
    %v66 = vmul.f32 %v64, %v48
    %v67 = vsub.f32 0.0, %v65
    %v68 = vsub.f32 0.0, %v66
    %v69 = vadd.f32 %v59, 1.0
    %v70 = vadd.f32 %v62, 1.0
    %v71 = vrcp.pop %v69
    %v72 = vmul.f32 %v67, %v71
    %v73 = vrcp.pop %v70
    %v74 = vmul.f32 %v68, %v73
    %v76 = vsel %vm36, %v72, 0
    %v79 = vsel %vm36, %v74, 0
    %81 = vmatprep.subr.mxu0 0.0
    %82 = vmatpush1.msra.mxu0 %v72
    %83 = vmatprep.subr.mxu0 0.0
    %84 = vmatpush1.msra.mxu0 %v74
    %85 = vmatprep.subr.mxu0 0.0
    %86 = vmatpush1.msra.mxu0 0.0
    %87 = vmatprep.subr.mxu0 0.0
    %88 = vmatpush1.msra.mxu0 0.0
    %89 = vmatprep.subr.mxu0 0.0
    %90 = vmatpush1.msra.mxu0 0.0
    %91 = vmatprep.subr.mxu0 0.0
    %92 = vmatpush1.msra.mxu0 0.0
    %93 = vmatprep.subr.mxu0 0.0
    %94 = vmatpush1.msra.mxu0 0.0
    %95 = vmatprep.subr.mxu0 0.0
    %96 = vmatpush1.msra.mxu0 0.0
    %97 = vmatprep.subr.mxu0 0.0
    %98 = vmatpush1.msra.mxu0 0.0
    %99 = vmatprep.subr.mxu0 0.0
    %100 = vmatpush1.msra.mxu0 0.0
    %101 = vmatprep.subr.mxu0 0.0
    %102 = vmatpush1.msra.mxu0 0.0
    %103 = vmatprep.subr.mxu0 0.0
    %104 = vmatpush1.msra.mxu0 0.0
    %105 = vmatprep.subr.mxu0 0.0
    %106 = vmatpush1.msra.mxu0 0.0
    %107 = vmatprep.subr.mxu0 0.0
    %108 = vmatpush1.msra.mxu0 0.0
    %109 = vmatprep.subr.mxu0 0.0
    %110 = vmatpush1.msra.mxu0 0.0
    %111 = vmatprep.subr.mxu0 0.0
    %112 = vmatpush1.msra.mxu0 0.0
    %113 = vmatprep.subr.mxu0 0.0
    %114 = vmatpush1.msra.mxu0 0.0
    %115 = vmatprep.subr.mxu0 0.0
    %116 = vmatpush1.msra.mxu0 0.0
    %117 = vmatprep.subr.mxu0 0.0
    %118 = vmatpush1.msra.mxu0 0.0
    %119 = vmatprep.subr.mxu0 0.0
    %120 = vmatpush1.msra.mxu0 0.0
    %121 = vmatprep.subr.mxu0 0.0
    %122 = vmatpush1.msra.mxu0 0.0
    %123 = vmatprep.subr.mxu0 0.0
    %124 = vmatpush1.msra.mxu0 0.0
    %125 = vmatprep.subr.mxu0 0.0
    %126 = vmatpush1.msra.mxu0 0.0
    %127 = vmatprep.subr.mxu0 0.0
    %128 = vmatpush1.msra.mxu0 0.0
    %129 = vmatprep.subr.mxu0 0.0
    %130 = vmatpush1.msra.mxu0 0.0
    %131 = vmatprep.subr.mxu0 0.0
    %132 = vmatpush1.msra.mxu0 0.0
    %133 = vmatprep.subr.mxu0 0.0
    %134 = vmatpush1.msra.mxu0 0.0
    %135 = vmatprep.subr.mxu0 0.0
    %136 = vmatpush1.msra.mxu0 0.0
    %137 = vmatprep.subr.mxu0 0.0
    %138 = vmatpush1.msra.mxu0 0.0
    %139 = vmatprep.subr.mxu0 0.0
    %140 = vmatpush1.msra.mxu0 0.0
    %141 = vmatprep.subr.mxu0 0.0
    %142 = vmatpush1.msra.mxu0 0.0
    %143 = vmatprep.subr.mxu0 0.0
    %144 = vmatpush1.msra.mxu0 0.0
    %145 = vmatprep.mubr.f32.mxu0 0.0
    %146 = vmatmul.mubr.f32.gmra.mrb[0].mxu0 %v76
    %v147 = vpop.f32.mrb[0].mxu0
    %v148 = vadd.f32 0.0, %v147
    %v149 = vpop.f32.mrb[0].mxu0
    %150 = vmatprep.mubr.f32.mxu0 0.0
    %151 = vmatmul.mubr.f32.gmra.mrb[0].mxu0 %v79
    %v152 = vpop.f32.mrb[0].mxu0
    %v153 = vadd.f32 0.0, %v152
    %v154 = vpop.f32.mrb[0].mxu0
    %155 = vdwg.mxu0
    %v156 = vmul.f32 %v148, 2.0
    %v157 = vmul.f32 %v153, 2.0
    %v158 = vsub.f32 %v156, %v24
    %v159 = vsub.f32 %v157, %v25
    %160 = vmatprep.subr.mxu0 0.0
    %161 = vmatpush1.msra.mxu0 %v158
    %162 = vmatprep.subr.mxu0 0.0
    %163 = vmatpush1.msra.mxu0 %v159
    %164 = vmatprep.subr.mxu0 0.0
    %165 = vmatpush1.msra.mxu0 0.0
    %166 = vmatprep.subr.mxu0 0.0
    %167 = vmatpush1.msra.mxu0 0.0
    %168 = vmatprep.subr.mxu0 0.0
    %169 = vmatpush1.msra.mxu0 0.0
    %170 = vmatprep.subr.mxu0 0.0
    %171 = vmatpush1.msra.mxu0 0.0
    %172 = vmatprep.subr.mxu0 0.0
    %173 = vmatpush1.msra.mxu0 0.0
    %174 = vmatprep.subr.mxu0 0.0
    %175 = vmatpush1.msra.mxu0 0.0
    %176 = vmatprep.subr.mxu0 0.0
    %177 = vmatpush1.msra.mxu0 0.0
    %178 = vmatprep.subr.mxu0 0.0
    %179 = vmatpush1.msra.mxu0 0.0
    %180 = vmatprep.subr.mxu0 0.0
    %181 = vmatpush1.msra.mxu0 0.0
    %182 = vmatprep.subr.mxu0 0.0
    %183 = vmatpush1.msra.mxu0 0.0
    %184 = vmatprep.subr.mxu0 0.0
    %185 = vmatpush1.msra.mxu0 0.0
    %186 = vmatprep.subr.mxu0 0.0
    %187 = vmatpush1.msra.mxu0 0.0
    %188 = vmatprep.subr.mxu0 0.0
    %189 = vmatpush1.msra.mxu0 0.0
    %190 = vmatprep.subr.mxu0 0.0
    %191 = vmatpush1.msra.mxu0 0.0
    %192 = vmatprep.subr.mxu0 0.0
    %193 = vmatpush1.msra.mxu0 0.0
    %194 = vmatprep.subr.mxu0 0.0
    %195 = vmatpush1.msra.mxu0 0.0
    %196 = vmatprep.subr.mxu0 0.0
    %197 = vmatpush1.msra.mxu0 0.0
    %198 = vmatprep.subr.mxu0 0.0
    %199 = vmatpush1.msra.mxu0 0.0
    %200 = vmatprep.subr.mxu0 0.0
    %201 = vmatpush1.msra.mxu0 0.0
    %202 = vmatprep.subr.mxu0 0.0
    %203 = vmatpush1.msra.mxu0 0.0
    %204 = vmatprep.subr.mxu0 0.0
    %205 = vmatpush1.msra.mxu0 0.0
    %206 = vmatprep.subr.mxu0 0.0
    %207 = vmatpush1.msra.mxu0 0.0
    %208 = vmatprep.subr.mxu0 0.0
    %209 = vmatpush1.msra.mxu0 0.0
    %210 = vmatprep.subr.mxu0 0.0
    %211 = vmatpush1.msra.mxu0 0.0
    %212 = vmatprep.subr.mxu0 0.0
    %213 = vmatpush1.msra.mxu0 0.0
    %214 = vmatprep.subr.mxu0 0.0
    %215 = vmatpush1.msra.mxu0 0.0
    %216 = vmatprep.subr.mxu0 0.0
    %217 = vmatpush1.msra.mxu0 0.0
    %218 = vmatprep.subr.mxu0 0.0
    %219 = vmatpush1.msra.mxu0 0.0
    %220 = vmatprep.subr.mxu0 0.0
    %221 = vmatpush1.msra.mxu0 0.0
    %222 = vmatprep.subr.mxu0 0.0
    %223 = vmatpush1.msra.mxu0 0.0
    %224 = vmatprep.mubr.f32.mxu0 0.0
    %225 = vmatmul.mubr.f32.gmra.mrb[0].mxu0 %v76
    %v226 = vpop.f32.mrb[0].mxu0
    %v227 = vadd.f32 0.0, %v226
    %v228 = vpop.f32.mrb[0].mxu0
    %229 = vmatprep.mubr.f32.mxu0 0.0
    %230 = vmatmul.mubr.f32.gmra.mrb[0].mxu0 %v79
    %v231 = vpop.f32.mrb[0].mxu0
    %v232 = vadd.f32 0.0, %v231
    %v233 = vpop.f32.mrb[0].mxu0
    %234 = vdwg.mxu0
    %v235 = vmul.f32 %v227, 2.0
    %v236 = vmul.f32 %v232, 2.0
    %v237 = vsub.f32 %v235, %v72
    %v238 = vsub.f32 %v236, %v74
    %v239 = vld [vmem:[%s2] sm:$0xff]
    %240 = vmatprep.subr.mxu0 0.0
    %241 = vmatpush1.msra.mxu0 %v28
    %242 = vmatprep.subr.mxu0 0.0
    %243 = vmatpush1.msra.mxu0 %v29
    %244 = vmatprep.subr.mxu0 0.0
    %245 = vmatpush1.msra.mxu0 0.0
    %246 = vmatprep.subr.mxu0 0.0
    %247 = vmatpush1.msra.mxu0 0.0
    %248 = vmatprep.subr.mxu0 0.0
    %249 = vmatpush1.msra.mxu0 0.0
    %250 = vmatprep.subr.mxu0 0.0
    %251 = vmatpush1.msra.mxu0 0.0
    %252 = vmatprep.subr.mxu0 0.0
    %253 = vmatpush1.msra.mxu0 0.0
    %254 = vmatprep.subr.mxu0 0.0
    %255 = vmatpush1.msra.mxu0 0.0
    %256 = vmatprep.subr.mxu0 0.0
    %257 = vmatpush1.msra.mxu0 0.0
    %258 = vmatprep.subr.mxu0 0.0
    %259 = vmatpush1.msra.mxu0 0.0
    %260 = vmatprep.subr.mxu0 0.0
    %261 = vmatpush1.msra.mxu0 0.0
    %262 = vmatprep.subr.mxu0 0.0
    %263 = vmatpush1.msra.mxu0 0.0
    %264 = vmatprep.subr.mxu0 0.0
    %265 = vmatpush1.msra.mxu0 0.0
    %266 = vmatprep.subr.mxu0 0.0
    %267 = vmatpush1.msra.mxu0 0.0
    %268 = vmatprep.subr.mxu0 0.0
    %269 = vmatpush1.msra.mxu0 0.0
    %270 = vmatprep.subr.mxu0 0.0
    %271 = vmatpush1.msra.mxu0 0.0
    %272 = vmatprep.subr.mxu0 0.0
    %273 = vmatpush1.msra.mxu0 0.0
    %274 = vmatprep.subr.mxu0 0.0
    %275 = vmatpush1.msra.mxu0 0.0
    %276 = vmatprep.subr.mxu0 0.0
    %277 = vmatpush1.msra.mxu0 0.0
    %278 = vmatprep.subr.mxu0 0.0
    %279 = vmatpush1.msra.mxu0 0.0
    %280 = vmatprep.subr.mxu0 0.0
    %281 = vmatpush1.msra.mxu0 0.0
    %282 = vmatprep.subr.mxu0 0.0
    %283 = vmatpush1.msra.mxu0 0.0
    %284 = vmatprep.subr.mxu0 0.0
    %285 = vmatpush1.msra.mxu0 0.0
    %286 = vmatprep.subr.mxu0 0.0
    %287 = vmatpush1.msra.mxu0 0.0
    %288 = vmatprep.subr.mxu0 0.0
    %289 = vmatpush1.msra.mxu0 0.0
    %290 = vmatprep.subr.mxu0 0.0
    %291 = vmatpush1.msra.mxu0 0.0
    %292 = vmatprep.subr.mxu0 0.0
    %293 = vmatpush1.msra.mxu0 0.0
    %294 = vmatprep.subr.mxu0 0.0
    %295 = vmatpush1.msra.mxu0 0.0
    %296 = vmatprep.subr.mxu0 0.0
    %297 = vmatpush1.msra.mxu0 0.0
    %298 = vmatprep.subr.mxu0 0.0
    %299 = vmatpush1.msra.mxu0 0.0
    %300 = vmatprep.subr.mxu0 0.0
    %301 = vmatpush1.msra.mxu0 0.0
    %302 = vmatprep.subr.mxu0 0.0
    %303 = vmatpush1.msra.mxu0 0.0
    %304 = vmatprep.mubr.f32.mxu0 0.0
    %305 = vmatmul.mubr.f32.gmra.mrb[0].mxu0 %v76
    %v306 = vpop.f32.mrb[0].mxu0
    %v307 = vadd.f32 0.0, %v306
    %v308 = vpop.f32.mrb[0].mxu0
    %309 = vmatprep.mubr.f32.mxu0 0.0
    %310 = vmatmul.mubr.f32.gmra.mrb[0].mxu0 %v79
    %v311 = vpop.f32.mrb[0].mxu0
    %v312 = vadd.f32 0.0, %v311
    %v313 = vpop.f32.mrb[0].mxu0
    %314 = vdwg.mxu0
    %v315 = vld [vmem:[%s2 + $0x8] sm:$0xff]
    %vm316 = vcmask 64512
    %v318 = vsel %vm316, %v307, 0
    %v321 = vsel %vm316, %v312, 0
    %323 = vmatprep.subr.mxu0 0.0
    %324 = vmatpush1.msra.mxu0 %v315
    %325 = vmatprep.subr.mxu0 0.0
    %326 = vmatpush1.msra.mxu0 0.0
    %327 = vmatprep.subr.mxu0 0.0
    %328 = vmatpush1.msra.mxu0 0.0
    %329 = vmatprep.subr.mxu0 0.0
    %330 = vmatpush1.msra.mxu0 0.0
    %331 = vmatprep.subr.mxu0 0.0
    %332 = vmatpush1.msra.mxu0 0.0
    %333 = vmatprep.subr.mxu0 0.0
    %334 = vmatpush1.msra.mxu0 0.0
    %335 = vmatprep.subr.mxu0 0.0
    %336 = vmatpush1.msra.mxu0 0.0
    %337 = vmatprep.subr.mxu0 0.0
    %338 = vmatpush1.msra.mxu0 0.0
    %339 = vmatprep.subr.mxu0 0.0
    %340 = vmatpush1.msra.mxu0 0.0
    %341 = vmatprep.subr.mxu0 0.0
    %342 = vmatpush1.msra.mxu0 0.0
    %343 = vmatprep.subr.mxu0 0.0
    %344 = vmatpush1.msra.mxu0 0.0
    %345 = vmatprep.subr.mxu0 0.0
    %346 = vmatpush1.msra.mxu0 0.0
    %347 = vmatprep.subr.mxu0 0.0
    %348 = vmatpush1.msra.mxu0 0.0
    %349 = vmatprep.subr.mxu0 0.0
    %350 = vmatpush1.msra.mxu0 0.0
    %351 = vmatprep.subr.mxu0 0.0
    %352 = vmatpush1.msra.mxu0 0.0
    %353 = vmatprep.subr.mxu0 0.0
    %354 = vmatpush1.msra.mxu0 0.0
    %355 = vmatprep.subr.mxu0 0.0
    %356 = vmatpush1.msra.mxu0 0.0
    %357 = vmatprep.subr.mxu0 0.0
    %358 = vmatpush1.msra.mxu0 0.0
    %359 = vmatprep.subr.mxu0 0.0
    %360 = vmatpush1.msra.mxu0 0.0
    %361 = vmatprep.subr.mxu0 0.0
    %362 = vmatpush1.msra.mxu0 0.0
    %363 = vmatprep.subr.mxu0 0.0
    %364 = vmatpush1.msra.mxu0 0.0
    %365 = vmatprep.subr.mxu0 0.0
    %366 = vmatpush1.msra.mxu0 0.0
    %367 = vmatprep.subr.mxu0 0.0
    %368 = vmatpush1.msra.mxu0 0.0
    %369 = vmatprep.subr.mxu0 0.0
    %370 = vmatpush1.msra.mxu0 0.0
    %371 = vmatprep.subr.mxu0 0.0
    %372 = vmatpush1.msra.mxu0 0.0
    %373 = vmatprep.subr.mxu0 0.0
    %374 = vmatpush1.msra.mxu0 0.0
    %375 = vmatprep.subr.mxu0 0.0
    %376 = vmatpush1.msra.mxu0 0.0
    %377 = vmatprep.subr.mxu0 0.0
    %378 = vmatpush1.msra.mxu0 0.0
    %379 = vmatprep.subr.mxu0 0.0
    %380 = vmatpush1.msra.mxu0 0.0
    %381 = vmatprep.subr.mxu0 0.0
    %382 = vmatpush1.msra.mxu0 0.0
    %383 = vmatprep.subr.mxu0 0.0
    %384 = vmatpush1.msra.mxu0 0.0
    %385 = vmatprep.subr.mxu0 0.0
    %386 = vmatpush1.msra.mxu0 0.0
    %387 = vmatprep.mubr.f32.mxu0 0.0
    %388 = vmatmul.mubr.f32.gmra.mrb[0].mxu0 %v318
    %v389 = vpop.f32.mrb[0].mxu0
    %v390 = vadd.f32 0.0, %v389
    %v391 = vpop.f32.mrb[0].mxu0
    %392 = vmatprep.mubr.f32.mxu0 0.0
    %393 = vmatmul.mubr.f32.gmra.mrb[0].mxu0 %v321
    %v394 = vpop.f32.mrb[0].mxu0
    %v395 = vadd.f32 0.0, %v394
    %v396 = vpop.f32.mrb[0].mxu0
    %397 = vdwg.mxu0
    %v399 = vsel %vm316, %v28, 0
    %v402 = vsel %vm316, %v29, 0
    %404 = vmatprep.subr.mxu0 0.0
    %405 = vmatpush1.msra.mxu0 %v239
    %406 = vmatprep.subr.mxu0 0.0
    %407 = vmatpush1.msra.mxu0 0.0
    %408 = vmatprep.subr.mxu0 0.0
    %409 = vmatpush1.msra.mxu0 0.0
    %410 = vmatprep.subr.mxu0 0.0
    %411 = vmatpush1.msra.mxu0 0.0
    %412 = vmatprep.subr.mxu0 0.0
    %413 = vmatpush1.msra.mxu0 0.0
    %414 = vmatprep.subr.mxu0 0.0
    %415 = vmatpush1.msra.mxu0 0.0
    %416 = vmatprep.subr.mxu0 0.0
    %417 = vmatpush1.msra.mxu0 0.0
    %418 = vmatprep.subr.mxu0 0.0
    %419 = vmatpush1.msra.mxu0 0.0
    %420 = vmatprep.subr.mxu0 0.0
    %421 = vmatpush1.msra.mxu0 0.0
    %422 = vmatprep.subr.mxu0 0.0
    %423 = vmatpush1.msra.mxu0 0.0
    %424 = vmatprep.subr.mxu0 0.0
    %425 = vmatpush1.msra.mxu0 0.0
    %426 = vmatprep.subr.mxu0 0.0
    %427 = vmatpush1.msra.mxu0 0.0
    %428 = vmatprep.subr.mxu0 0.0
    %429 = vmatpush1.msra.mxu0 0.0
    %430 = vmatprep.subr.mxu0 0.0
    %431 = vmatpush1.msra.mxu0 0.0
    %432 = vmatprep.subr.mxu0 0.0
    %433 = vmatpush1.msra.mxu0 0.0
    %434 = vmatprep.subr.mxu0 0.0
    %435 = vmatpush1.msra.mxu0 0.0
    %436 = vmatprep.subr.mxu0 0.0
    %437 = vmatpush1.msra.mxu0 0.0
    %438 = vmatprep.subr.mxu0 0.0
    %439 = vmatpush1.msra.mxu0 0.0
    %440 = vmatprep.subr.mxu0 0.0
    %441 = vmatpush1.msra.mxu0 0.0
    %442 = vmatprep.subr.mxu0 0.0
    %443 = vmatpush1.msra.mxu0 0.0
    %444 = vmatprep.subr.mxu0 0.0
    %445 = vmatpush1.msra.mxu0 0.0
    %446 = vmatprep.subr.mxu0 0.0
    %447 = vmatpush1.msra.mxu0 0.0
    %448 = vmatprep.subr.mxu0 0.0
    %449 = vmatpush1.msra.mxu0 0.0
    %450 = vmatprep.subr.mxu0 0.0
    %451 = vmatpush1.msra.mxu0 0.0
    %452 = vmatprep.subr.mxu0 0.0
    %453 = vmatpush1.msra.mxu0 0.0
    %454 = vmatprep.subr.mxu0 0.0
    %455 = vmatpush1.msra.mxu0 0.0
    %456 = vmatprep.subr.mxu0 0.0
    %457 = vmatpush1.msra.mxu0 0.0
    %458 = vmatprep.subr.mxu0 0.0
    %459 = vmatpush1.msra.mxu0 0.0
    %460 = vmatprep.subr.mxu0 0.0
    %461 = vmatpush1.msra.mxu0 0.0
    %462 = vmatprep.subr.mxu0 0.0
    %463 = vmatpush1.msra.mxu0 0.0
    %464 = vmatprep.subr.mxu0 0.0
    %465 = vmatpush1.msra.mxu0 0.0
    %466 = vmatprep.subr.mxu0 0.0
    %467 = vmatpush1.msra.mxu0 0.0
    %468 = vmatprep.mubr.f32.mxu0 0.0
    %469 = vmatmul.mubr.f32.gmra.mrb[0].mxu0 %v399
    %v470 = vpop.f32.mrb[0].mxu0
    %v471 = vadd.f32 %v390, %v470
    %v472 = vpop.f32.mrb[0].mxu0
    %473 = vmatprep.mubr.f32.mxu0 0.0
    %474 = vmatmul.mubr.f32.gmra.mrb[0].mxu0 %v402
    %v475 = vpop.f32.mrb[0].mxu0
    %v476 = vadd.f32 %v395, %v475
    %v477 = vpop.f32.mrb[0].mxu0
    %478 = vdwg.mxu0
    %v480 = vsel %vm36, %v158, 0
    %v483 = vsel %vm36, %v159, 0
    %485 = vmatprep.subr.mxu0 0.0
    %486 = vmatpush1.msra.mxu0 %v28
    %487 = vmatprep.subr.mxu0 0.0
    %488 = vmatpush1.msra.mxu0 %v29
    %489 = vmatprep.subr.mxu0 0.0
    %490 = vmatpush1.msra.mxu0 0.0
    %491 = vmatprep.subr.mxu0 0.0
    %492 = vmatpush1.msra.mxu0 0.0
    %493 = vmatprep.subr.mxu0 0.0
    %494 = vmatpush1.msra.mxu0 0.0
    %495 = vmatprep.subr.mxu0 0.0
    %496 = vmatpush1.msra.mxu0 0.0
    %497 = vmatprep.subr.mxu0 0.0
    %498 = vmatpush1.msra.mxu0 0.0
    %499 = vmatprep.subr.mxu0 0.0
    %500 = vmatpush1.msra.mxu0 0.0
    %501 = vmatprep.subr.mxu0 0.0
    %502 = vmatpush1.msra.mxu0 0.0
    %503 = vmatprep.subr.mxu0 0.0
    %504 = vmatpush1.msra.mxu0 0.0
    %505 = vmatprep.subr.mxu0 0.0
    %506 = vmatpush1.msra.mxu0 0.0
    %507 = vmatprep.subr.mxu0 0.0
    %508 = vmatpush1.msra.mxu0 0.0
    %509 = vmatprep.subr.mxu0 0.0
    %510 = vmatpush1.msra.mxu0 0.0
    %511 = vmatprep.subr.mxu0 0.0
    %512 = vmatpush1.msra.mxu0 0.0
    %513 = vmatprep.subr.mxu0 0.0
    %514 = vmatpush1.msra.mxu0 0.0
    %515 = vmatprep.subr.mxu0 0.0
    %516 = vmatpush1.msra.mxu0 0.0
    %517 = vmatprep.subr.mxu0 0.0
    %518 = vmatpush1.msra.mxu0 0.0
    %519 = vmatprep.subr.mxu0 0.0
    %520 = vmatpush1.msra.mxu0 0.0
    %521 = vmatprep.subr.mxu0 0.0
    %522 = vmatpush1.msra.mxu0 0.0
    %523 = vmatprep.subr.mxu0 0.0
    %524 = vmatpush1.msra.mxu0 0.0
    %525 = vmatprep.subr.mxu0 0.0
    %526 = vmatpush1.msra.mxu0 0.0
    %527 = vmatprep.subr.mxu0 0.0
    %528 = vmatpush1.msra.mxu0 0.0
    %529 = vmatprep.subr.mxu0 0.0
    %530 = vmatpush1.msra.mxu0 0.0
    %531 = vmatprep.subr.mxu0 0.0
    %532 = vmatpush1.msra.mxu0 0.0
    %533 = vmatprep.subr.mxu0 0.0
    %534 = vmatpush1.msra.mxu0 0.0
    %535 = vmatprep.subr.mxu0 0.0
    %536 = vmatpush1.msra.mxu0 0.0
    %537 = vmatprep.subr.mxu0 0.0
    %538 = vmatpush1.msra.mxu0 0.0
    %539 = vmatprep.subr.mxu0 0.0
    %540 = vmatpush1.msra.mxu0 0.0
    %541 = vmatprep.subr.mxu0 0.0
    %542 = vmatpush1.msra.mxu0 0.0
    %543 = vmatprep.subr.mxu0 0.0
    %544 = vmatpush1.msra.mxu0 0.0
    %545 = vmatprep.subr.mxu0 0.0
    %546 = vmatpush1.msra.mxu0 0.0
    %547 = vmatprep.subr.mxu0 0.0
    %548 = vmatpush1.msra.mxu0 0.0
    %549 = vmatprep.mubr.f32.mxu0 0.0
    %550 = vmatmul.mubr.f32.gmra.mrb[0].mxu0 %v480
    %v551 = vpop.f32.mrb[0].mxu0
    %v552 = vadd.f32 0.0, %v551
    %v553 = vpop.f32.mrb[0].mxu0
    %554 = vmatprep.mubr.f32.mxu0 0.0
    %555 = vmatmul.mubr.f32.gmra.mrb[0].mxu0 %v483
    %v556 = vpop.f32.mrb[0].mxu0
    %v557 = vadd.f32 0.0, %v556
    %v558 = vpop.f32.mrb[0].mxu0
    %559 = vdwg.mxu0
    %v560 = vld [vmem:[%s2 + $0x10] sm:$0xff]
    %v562 = vsel %vm316, %v552, 0
    %v565 = vsel %vm316, %v557, 0
    %567 = vmatprep.subr.mxu0 0.0
    %568 = vmatpush1.msra.mxu0 %v560
    %569 = vmatprep.subr.mxu0 0.0
    %570 = vmatpush1.msra.mxu0 0.0
    %571 = vmatprep.subr.mxu0 0.0
    %572 = vmatpush1.msra.mxu0 0.0
    %573 = vmatprep.subr.mxu0 0.0
    %574 = vmatpush1.msra.mxu0 0.0
    %575 = vmatprep.subr.mxu0 0.0
    %576 = vmatpush1.msra.mxu0 0.0
    %577 = vmatprep.subr.mxu0 0.0
    %578 = vmatpush1.msra.mxu0 0.0
    %579 = vmatprep.subr.mxu0 0.0
    %580 = vmatpush1.msra.mxu0 0.0
    %581 = vmatprep.subr.mxu0 0.0
    %582 = vmatpush1.msra.mxu0 0.0
    %583 = vmatprep.subr.mxu0 0.0
    %584 = vmatpush1.msra.mxu0 0.0
    %585 = vmatprep.subr.mxu0 0.0
    %586 = vmatpush1.msra.mxu0 0.0
    %587 = vmatprep.subr.mxu0 0.0
    %588 = vmatpush1.msra.mxu0 0.0
    %589 = vmatprep.subr.mxu0 0.0
    %590 = vmatpush1.msra.mxu0 0.0
    %591 = vmatprep.subr.mxu0 0.0
    %592 = vmatpush1.msra.mxu0 0.0
    %593 = vmatprep.subr.mxu0 0.0
    %594 = vmatpush1.msra.mxu0 0.0
    %595 = vmatprep.subr.mxu0 0.0
    %596 = vmatpush1.msra.mxu0 0.0
    %597 = vmatprep.subr.mxu0 0.0
    %598 = vmatpush1.msra.mxu0 0.0
    %599 = vmatprep.subr.mxu0 0.0
    %600 = vmatpush1.msra.mxu0 0.0
    %601 = vmatprep.subr.mxu0 0.0
    %602 = vmatpush1.msra.mxu0 0.0
    %603 = vmatprep.subr.mxu0 0.0
    %604 = vmatpush1.msra.mxu0 0.0
    %605 = vmatprep.subr.mxu0 0.0
    %606 = vmatpush1.msra.mxu0 0.0
    %607 = vmatprep.subr.mxu0 0.0
    %608 = vmatpush1.msra.mxu0 0.0
    %609 = vmatprep.subr.mxu0 0.0
    %610 = vmatpush1.msra.mxu0 0.0
    %611 = vmatprep.subr.mxu0 0.0
    %612 = vmatpush1.msra.mxu0 0.0
    %613 = vmatprep.subr.mxu0 0.0
    %614 = vmatpush1.msra.mxu0 0.0
    %615 = vmatprep.subr.mxu0 0.0
    %616 = vmatpush1.msra.mxu0 0.0
    %617 = vmatprep.subr.mxu0 0.0
    %618 = vmatpush1.msra.mxu0 0.0
    %619 = vmatprep.subr.mxu0 0.0
    %620 = vmatpush1.msra.mxu0 0.0
    %621 = vmatprep.subr.mxu0 0.0
    %622 = vmatpush1.msra.mxu0 0.0
    %623 = vmatprep.subr.mxu0 0.0
    %624 = vmatpush1.msra.mxu0 0.0
    %625 = vmatprep.subr.mxu0 0.0
    %626 = vmatpush1.msra.mxu0 0.0
    %627 = vmatprep.subr.mxu0 0.0
    %628 = vmatpush1.msra.mxu0 0.0
    %629 = vmatprep.subr.mxu0 0.0
    %630 = vmatpush1.msra.mxu0 0.0
    %631 = vmatprep.mubr.f32.mxu0 0.0
    %632 = vmatmul.mubr.f32.gmra.mrb[0].mxu0 %v562
    %v633 = vpop.f32.mrb[0].mxu0
    %v634 = vadd.f32 0.0, %v633
    %v635 = vpop.f32.mrb[0].mxu0
    %636 = vmatprep.mubr.f32.mxu0 0.0
    %637 = vmatmul.mubr.f32.gmra.mrb[0].mxu0 %v565
    %v638 = vpop.f32.mrb[0].mxu0
    %v639 = vadd.f32 0.0, %v638
    %v640 = vpop.f32.mrb[0].mxu0
    %641 = vdwg.mxu0
    %v642 = vadd.f32 %v471, %v634
    %v643 = vadd.f32 %v476, %v639
    %v645 = vsel %vm36, %v237, 0
    %v648 = vsel %vm36, %v238, 0
    %650 = vmatprep.subr.mxu0 0.0
    %651 = vmatpush1.msra.mxu0 %v28
    %652 = vmatprep.subr.mxu0 0.0
    %653 = vmatpush1.msra.mxu0 %v29
    %654 = vmatprep.subr.mxu0 0.0
    %655 = vmatpush1.msra.mxu0 0.0
    %656 = vmatprep.subr.mxu0 0.0
    %657 = vmatpush1.msra.mxu0 0.0
    %658 = vmatprep.subr.mxu0 0.0
    %659 = vmatpush1.msra.mxu0 0.0
    %660 = vmatprep.subr.mxu0 0.0
    %661 = vmatpush1.msra.mxu0 0.0
    %662 = vmatprep.subr.mxu0 0.0
    %663 = vmatpush1.msra.mxu0 0.0
    %664 = vmatprep.subr.mxu0 0.0
    %665 = vmatpush1.msra.mxu0 0.0
    %666 = vmatprep.subr.mxu0 0.0
    %667 = vmatpush1.msra.mxu0 0.0
    %668 = vmatprep.subr.mxu0 0.0
    %669 = vmatpush1.msra.mxu0 0.0
    %670 = vmatprep.subr.mxu0 0.0
    %671 = vmatpush1.msra.mxu0 0.0
    %672 = vmatprep.subr.mxu0 0.0
    %673 = vmatpush1.msra.mxu0 0.0
    %674 = vmatprep.subr.mxu0 0.0
    %675 = vmatpush1.msra.mxu0 0.0
    %676 = vmatprep.subr.mxu0 0.0
    %677 = vmatpush1.msra.mxu0 0.0
    %678 = vmatprep.subr.mxu0 0.0
    %679 = vmatpush1.msra.mxu0 0.0
    %680 = vmatprep.subr.mxu0 0.0
    %681 = vmatpush1.msra.mxu0 0.0
    %682 = vmatprep.subr.mxu0 0.0
    %683 = vmatpush1.msra.mxu0 0.0
    %684 = vmatprep.subr.mxu0 0.0
    %685 = vmatpush1.msra.mxu0 0.0
    %686 = vmatprep.subr.mxu0 0.0
    %687 = vmatpush1.msra.mxu0 0.0
    %688 = vmatprep.subr.mxu0 0.0
    %689 = vmatpush1.msra.mxu0 0.0
    %690 = vmatprep.subr.mxu0 0.0
    %691 = vmatpush1.msra.mxu0 0.0
    %692 = vmatprep.subr.mxu0 0.0
    %693 = vmatpush1.msra.mxu0 0.0
    %694 = vmatprep.subr.mxu0 0.0
    %695 = vmatpush1.msra.mxu0 0.0
    %696 = vmatprep.subr.mxu0 0.0
    %697 = vmatpush1.msra.mxu0 0.0
    %698 = vmatprep.subr.mxu0 0.0
    %699 = vmatpush1.msra.mxu0 0.0
    %700 = vmatprep.subr.mxu0 0.0
    %701 = vmatpush1.msra.mxu0 0.0
    %702 = vmatprep.subr.mxu0 0.0
    %703 = vmatpush1.msra.mxu0 0.0
    %704 = vmatprep.subr.mxu0 0.0
    %705 = vmatpush1.msra.mxu0 0.0
    %706 = vmatprep.subr.mxu0 0.0
    %707 = vmatpush1.msra.mxu0 0.0
    %708 = vmatprep.subr.mxu0 0.0
    %709 = vmatpush1.msra.mxu0 0.0
    %710 = vmatprep.subr.mxu0 0.0
    %711 = vmatpush1.msra.mxu0 0.0
    %712 = vmatprep.subr.mxu0 0.0
    %713 = vmatpush1.msra.mxu0 0.0
    %714 = vmatprep.mubr.f32.mxu0 0.0
    %715 = vmatmul.mubr.f32.gmra.mrb[0].mxu0 %v645
    %v716 = vpop.f32.mrb[0].mxu0
    %v717 = vadd.f32 0.0, %v716
    %v718 = vpop.f32.mrb[0].mxu0
    %719 = vmatprep.mubr.f32.mxu0 0.0
    %720 = vmatmul.mubr.f32.gmra.mrb[0].mxu0 %v648
    %v721 = vpop.f32.mrb[0].mxu0
    %v722 = vadd.f32 0.0, %v721
    %v723 = vpop.f32.mrb[0].mxu0
    %724 = vdwg.mxu0
    %v725 = vld [vmem:[%s2 + $0x18] sm:$0xff]
    %v727 = vsel %vm316, %v717, 0
    %v730 = vsel %vm316, %v722, 0
    %732 = vmatprep.subr.mxu0 0.0
    %733 = vmatpush1.msra.mxu0 %v725
    %734 = vmatprep.subr.mxu0 0.0
    %735 = vmatpush1.msra.mxu0 0.0
    %736 = vmatprep.subr.mxu0 0.0
    %737 = vmatpush1.msra.mxu0 0.0
    %738 = vmatprep.subr.mxu0 0.0
    %739 = vmatpush1.msra.mxu0 0.0
    %740 = vmatprep.subr.mxu0 0.0
    %741 = vmatpush1.msra.mxu0 0.0
    %742 = vmatprep.subr.mxu0 0.0
    %743 = vmatpush1.msra.mxu0 0.0
    %744 = vmatprep.subr.mxu0 0.0
    %745 = vmatpush1.msra.mxu0 0.0
    %746 = vmatprep.subr.mxu0 0.0
    %747 = vmatpush1.msra.mxu0 0.0
    %748 = vmatprep.subr.mxu0 0.0
    %749 = vmatpush1.msra.mxu0 0.0
    %750 = vmatprep.subr.mxu0 0.0
    %751 = vmatpush1.msra.mxu0 0.0
    %752 = vmatprep.subr.mxu0 0.0
    %753 = vmatpush1.msra.mxu0 0.0
    %754 = vmatprep.subr.mxu0 0.0
    %755 = vmatpush1.msra.mxu0 0.0
    %756 = vmatprep.subr.mxu0 0.0
    %757 = vmatpush1.msra.mxu0 0.0
    %758 = vmatprep.subr.mxu0 0.0
    %759 = vmatpush1.msra.mxu0 0.0
    %760 = vmatprep.subr.mxu0 0.0
    %761 = vmatpush1.msra.mxu0 0.0
    %762 = vmatprep.subr.mxu0 0.0
    %763 = vmatpush1.msra.mxu0 0.0
    %764 = vmatprep.subr.mxu0 0.0
    %765 = vmatpush1.msra.mxu0 0.0
    %766 = vmatprep.subr.mxu0 0.0
    %767 = vmatpush1.msra.mxu0 0.0
    %768 = vmatprep.subr.mxu0 0.0
    %769 = vmatpush1.msra.mxu0 0.0
    %770 = vmatprep.subr.mxu0 0.0
    %771 = vmatpush1.msra.mxu0 0.0
    %772 = vmatprep.subr.mxu0 0.0
    %773 = vmatpush1.msra.mxu0 0.0
    %774 = vmatprep.subr.mxu0 0.0
    %775 = vmatpush1.msra.mxu0 0.0
    %776 = vmatprep.subr.mxu0 0.0
    %777 = vmatpush1.msra.mxu0 0.0
    %778 = vmatprep.subr.mxu0 0.0
    %779 = vmatpush1.msra.mxu0 0.0
    %780 = vmatprep.subr.mxu0 0.0
    %781 = vmatpush1.msra.mxu0 0.0
    %782 = vmatprep.subr.mxu0 0.0
    %783 = vmatpush1.msra.mxu0 0.0
    %784 = vmatprep.subr.mxu0 0.0
    %785 = vmatpush1.msra.mxu0 0.0
    %786 = vmatprep.subr.mxu0 0.0
    %787 = vmatpush1.msra.mxu0 0.0
    %788 = vmatprep.subr.mxu0 0.0
    %789 = vmatpush1.msra.mxu0 0.0
    %790 = vmatprep.subr.mxu0 0.0
    %791 = vmatpush1.msra.mxu0 0.0
    %792 = vmatprep.subr.mxu0 0.0
    %793 = vmatpush1.msra.mxu0 0.0
    %794 = vmatprep.subr.mxu0 0.0
    %795 = vmatpush1.msra.mxu0 0.0
    %796 = vmatprep.mubr.f32.mxu0 0.0
    %797 = vmatmul.mubr.f32.gmra.mrb[0].mxu0 %v727
    %v798 = vpop.f32.mrb[0].mxu0
    %v799 = vadd.f32 0.0, %v798
    %v800 = vpop.f32.mrb[0].mxu0
    %801 = vmatprep.mubr.f32.mxu0 0.0
    %802 = vmatmul.mubr.f32.gmra.mrb[0].mxu0 %v730
    %v803 = vpop.f32.mrb[0].mxu0
    %v804 = vadd.f32 0.0, %v803
    %v805 = vpop.f32.mrb[0].mxu0
    %806 = vdwg.mxu0
    %v807 = vadd.f32 %v642, %v799
    %v808 = vadd.f32 %v643, %v804
    %v809 = vld [vmem:[%s2 + $0x20] sm:$0x1]
    %v810 = vlaneseq
    %v811 = vshrl.u32 %v810, 7
    %v812 = vsub.s32 0, %v811
    %v813 = vrot.slane %v809, %v812
    %v814 = vadd.f32 %v807, %v813
    %v815 = vadd.f32 %v808, %v813
    %v816 = vmax.f32 %v814, 0.0
    %v817 = vmax.f32 %v815, 0.0
    %v818 = vld [vmem:[%s2 + $0x28] sm:$0xff]
    %v819 = vld [vmem:[%s2 + $0x30] sm:$0xff]
    %820 = vmatprep.subr.mxu0 0.0
    %821 = vmatpush1.msra.mxu0 %v816
    %822 = vmatprep.subr.mxu0 0.0
    %823 = vmatpush1.msra.mxu0 %v817
    %824 = vmatprep.subr.mxu0 0.0
    %825 = vmatpush1.msra.mxu0 0.0
    %826 = vmatprep.subr.mxu0 0.0
    %827 = vmatpush1.msra.mxu0 0.0
    %828 = vmatprep.subr.mxu0 0.0
    %829 = vmatpush1.msra.mxu0 0.0
    %830 = vmatprep.subr.mxu0 0.0
    %831 = vmatpush1.msra.mxu0 0.0
    %832 = vmatprep.subr.mxu0 0.0
    %833 = vmatpush1.msra.mxu0 0.0
    %834 = vmatprep.subr.mxu0 0.0
    %835 = vmatpush1.msra.mxu0 0.0
    %836 = vmatprep.subr.mxu0 0.0
    %837 = vmatpush1.msra.mxu0 0.0
    %838 = vmatprep.subr.mxu0 0.0
    %839 = vmatpush1.msra.mxu0 0.0
    %840 = vmatprep.subr.mxu0 0.0
    %841 = vmatpush1.msra.mxu0 0.0
    %842 = vmatprep.subr.mxu0 0.0
    %843 = vmatpush1.msra.mxu0 0.0
    %844 = vmatprep.subr.mxu0 0.0
    %845 = vmatpush1.msra.mxu0 0.0
    %846 = vmatprep.subr.mxu0 0.0
    %847 = vmatpush1.msra.mxu0 0.0
    %848 = vmatprep.subr.mxu0 0.0
    %849 = vmatpush1.msra.mxu0 0.0
    %850 = vmatprep.subr.mxu0 0.0
    %851 = vmatpush1.msra.mxu0 0.0
    %852 = vmatprep.subr.mxu0 0.0
    %853 = vmatpush1.msra.mxu0 0.0
    %854 = vmatprep.subr.mxu0 0.0
    %855 = vmatpush1.msra.mxu0 0.0
    %856 = vmatprep.subr.mxu0 0.0
    %857 = vmatpush1.msra.mxu0 0.0
    %858 = vmatprep.subr.mxu0 0.0
    %859 = vmatpush1.msra.mxu0 0.0
    %860 = vmatprep.subr.mxu0 0.0
    %861 = vmatpush1.msra.mxu0 0.0
    %862 = vmatprep.subr.mxu0 0.0
    %863 = vmatpush1.msra.mxu0 0.0
    %864 = vmatprep.subr.mxu0 0.0
    %865 = vmatpush1.msra.mxu0 0.0
    %866 = vmatprep.subr.mxu0 0.0
    %867 = vmatpush1.msra.mxu0 0.0
    %868 = vmatprep.subr.mxu0 0.0
    %869 = vmatpush1.msra.mxu0 0.0
    %870 = vmatprep.subr.mxu0 0.0
    %871 = vmatpush1.msra.mxu0 0.0
    %872 = vmatprep.subr.mxu0 0.0
    %873 = vmatpush1.msra.mxu0 0.0
    %874 = vmatprep.subr.mxu0 0.0
    %875 = vmatpush1.msra.mxu0 0.0
    %876 = vmatprep.subr.mxu0 0.0
    %877 = vmatpush1.msra.mxu0 0.0
    %878 = vmatprep.subr.mxu0 0.0
    %879 = vmatpush1.msra.mxu0 0.0
    %880 = vmatprep.subr.mxu0 0.0
    %881 = vmatpush1.msra.mxu0 0.0
    %882 = vmatprep.subr.mxu0 0.0
    %883 = vmatpush1.msra.mxu0 0.0
    %884 = vmatprep.mubr.f32.mxu0 0.0
    %885 = vmatmul.mubr.f32.gmra.mrb[0].mxu0 %v76
    %v886 = vpop.f32.mrb[0].mxu0
    %v887 = vadd.f32 0.0, %v886
    %v888 = vpop.f32.mrb[0].mxu0
    %889 = vmatprep.mubr.f32.mxu0 0.0
    %890 = vmatmul.mubr.f32.gmra.mrb[0].mxu0 %v79
    %v891 = vpop.f32.mrb[0].mxu0
    %v892 = vadd.f32 0.0, %v891
    %v893 = vpop.f32.mrb[0].mxu0
    %894 = vdwg.mxu0
    %v895 = vld [vmem:[%s2 + $0x38] sm:$0xff]
    %v896 = vld [vmem:[%s2 + $0x40] sm:$0xff]
    %v898 = vsel %vm36, %v887, 0
    %v901 = vsel %vm36, %v892, 0
    %903 = vmatprep.subr.mxu0 0.0
    %904 = vmatpush1.msra.mxu0 %v895
    %905 = vmatprep.subr.mxu0 0.0
    %906 = vmatpush1.msra.mxu0 %v896
    %907 = vmatprep.subr.mxu0 0.0
    %908 = vmatpush1.msra.mxu0 0.0
    %909 = vmatprep.subr.mxu0 0.0
    %910 = vmatpush1.msra.mxu0 0.0
    %911 = vmatprep.subr.mxu0 0.0
    %912 = vmatpush1.msra.mxu0 0.0
    %913 = vmatprep.subr.mxu0 0.0
    %914 = vmatpush1.msra.mxu0 0.0
    %915 = vmatprep.subr.mxu0 0.0
    %916 = vmatpush1.msra.mxu0 0.0
    %917 = vmatprep.subr.mxu0 0.0
    %918 = vmatpush1.msra.mxu0 0.0
    %919 = vmatprep.subr.mxu0 0.0
    %920 = vmatpush1.msra.mxu0 0.0
    %921 = vmatprep.subr.mxu0 0.0
    %922 = vmatpush1.msra.mxu0 0.0
    %923 = vmatprep.subr.mxu0 0.0
    %924 = vmatpush1.msra.mxu0 0.0
    %925 = vmatprep.subr.mxu0 0.0
    %926 = vmatpush1.msra.mxu0 0.0
    %927 = vmatprep.subr.mxu0 0.0
    %928 = vmatpush1.msra.mxu0 0.0
    %929 = vmatprep.subr.mxu0 0.0
    %930 = vmatpush1.msra.mxu0 0.0
    %931 = vmatprep.subr.mxu0 0.0
    %932 = vmatpush1.msra.mxu0 0.0
    %933 = vmatprep.subr.mxu0 0.0
    %934 = vmatpush1.msra.mxu0 0.0
    %935 = vmatprep.subr.mxu0 0.0
    %936 = vmatpush1.msra.mxu0 0.0
    %937 = vmatprep.subr.mxu0 0.0
    %938 = vmatpush1.msra.mxu0 0.0
    %939 = vmatprep.subr.mxu0 0.0
    %940 = vmatpush1.msra.mxu0 0.0
    %941 = vmatprep.subr.mxu0 0.0
    %942 = vmatpush1.msra.mxu0 0.0
    %943 = vmatprep.subr.mxu0 0.0
    %944 = vmatpush1.msra.mxu0 0.0
    %945 = vmatprep.subr.mxu0 0.0
    %946 = vmatpush1.msra.mxu0 0.0
    %947 = vmatprep.subr.mxu0 0.0
    %948 = vmatpush1.msra.mxu0 0.0
    %949 = vmatprep.subr.mxu0 0.0
    %950 = vmatpush1.msra.mxu0 0.0
    %951 = vmatprep.subr.mxu0 0.0
    %952 = vmatpush1.msra.mxu0 0.0
    %953 = vmatprep.subr.mxu0 0.0
    %954 = vmatpush1.msra.mxu0 0.0
    %955 = vmatprep.subr.mxu0 0.0
    %956 = vmatpush1.msra.mxu0 0.0
    %957 = vmatprep.subr.mxu0 0.0
    %958 = vmatpush1.msra.mxu0 0.0
    %959 = vmatprep.subr.mxu0 0.0
    %960 = vmatpush1.msra.mxu0 0.0
    %961 = vmatprep.subr.mxu0 0.0
    %962 = vmatpush1.msra.mxu0 0.0
    %963 = vmatprep.subr.mxu0 0.0
    %964 = vmatpush1.msra.mxu0 0.0
    %965 = vmatprep.subr.mxu0 0.0
    %966 = vmatpush1.msra.mxu0 0.0
    %967 = vmatprep.mubr.f32.mxu0 0.0
    %968 = vmatmul.mubr.f32.gmra.mrb[0].mxu0 %v898
    %v969 = vpop.f32.mrb[0].mxu0
    %v970 = vadd.f32 0.0, %v969
    %v971 = vpop.f32.mrb[0].mxu0
    %972 = vmatprep.mubr.f32.mxu0 0.0
    %973 = vmatmul.mubr.f32.gmra.mrb[0].mxu0 %v901
    %v974 = vpop.f32.mrb[0].mxu0
    %v975 = vadd.f32 0.0, %v974
    %v976 = vpop.f32.mrb[0].mxu0
    %977 = vdwg.mxu0
    %v979 = vsel %vm36, %v816, 0
    %v982 = vsel %vm36, %v817, 0
    %984 = vmatprep.subr.mxu0 0.0
    %985 = vmatpush1.msra.mxu0 %v818
    %986 = vmatprep.subr.mxu0 0.0
    %987 = vmatpush1.msra.mxu0 %v819
    %988 = vmatprep.subr.mxu0 0.0
    %989 = vmatpush1.msra.mxu0 0.0
    %990 = vmatprep.subr.mxu0 0.0
    %991 = vmatpush1.msra.mxu0 0.0
    %992 = vmatprep.subr.mxu0 0.0
    %993 = vmatpush1.msra.mxu0 0.0
    %994 = vmatprep.subr.mxu0 0.0
    %995 = vmatpush1.msra.mxu0 0.0
    %996 = vmatprep.subr.mxu0 0.0
    %997 = vmatpush1.msra.mxu0 0.0
    %998 = vmatprep.subr.mxu0 0.0
    %999 = vmatpush1.msra.mxu0 0.0
    %1000 = vmatprep.subr.mxu0 0.0
    %1001 = vmatpush1.msra.mxu0 0.0
    %1002 = vmatprep.subr.mxu0 0.0
    %1003 = vmatpush1.msra.mxu0 0.0
    %1004 = vmatprep.subr.mxu0 0.0
    %1005 = vmatpush1.msra.mxu0 0.0
    %1006 = vmatprep.subr.mxu0 0.0
    %1007 = vmatpush1.msra.mxu0 0.0
    %1008 = vmatprep.subr.mxu0 0.0
    %1009 = vmatpush1.msra.mxu0 0.0
    %1010 = vmatprep.subr.mxu0 0.0
    %1011 = vmatpush1.msra.mxu0 0.0
    %1012 = vmatprep.subr.mxu0 0.0
    %1013 = vmatpush1.msra.mxu0 0.0
    %1014 = vmatprep.subr.mxu0 0.0
    %1015 = vmatpush1.msra.mxu0 0.0
    %1016 = vmatprep.subr.mxu0 0.0
    %1017 = vmatpush1.msra.mxu0 0.0
    %1018 = vmatprep.subr.mxu0 0.0
    %1019 = vmatpush1.msra.mxu0 0.0
    %1020 = vmatprep.subr.mxu0 0.0
    %1021 = vmatpush1.msra.mxu0 0.0
    %1022 = vmatprep.subr.mxu0 0.0
    %1023 = vmatpush1.msra.mxu0 0.0
    %1024 = vmatprep.subr.mxu0 0.0
    %1025 = vmatpush1.msra.mxu0 0.0
    %1026 = vmatprep.subr.mxu0 0.0
    %1027 = vmatpush1.msra.mxu0 0.0
    %1028 = vmatprep.subr.mxu0 0.0
    %1029 = vmatpush1.msra.mxu0 0.0
    %1030 = vmatprep.subr.mxu0 0.0
    %1031 = vmatpush1.msra.mxu0 0.0
    %1032 = vmatprep.subr.mxu0 0.0
    %1033 = vmatpush1.msra.mxu0 0.0
    %1034 = vmatprep.subr.mxu0 0.0
    %1035 = vmatpush1.msra.mxu0 0.0
    %1036 = vmatprep.subr.mxu0 0.0
    %1037 = vmatpush1.msra.mxu0 0.0
    %1038 = vmatprep.subr.mxu0 0.0
    %1039 = vmatpush1.msra.mxu0 0.0
    %1040 = vmatprep.subr.mxu0 0.0
    %1041 = vmatpush1.msra.mxu0 0.0
    %1042 = vmatprep.subr.mxu0 0.0
    %1043 = vmatpush1.msra.mxu0 0.0
    %1044 = vmatprep.subr.mxu0 0.0
    %1045 = vmatpush1.msra.mxu0 0.0
    %1046 = vmatprep.subr.mxu0 0.0
    %1047 = vmatpush1.msra.mxu0 0.0
    %1048 = vmatprep.mubr.f32.mxu0 0.0
    %1049 = vmatmul.mubr.f32.gmra.mrb[0].mxu0 %v979
    %v1050 = vpop.f32.mrb[0].mxu0
    %v1051 = vadd.f32 %v970, %v1050
    %v1052 = vpop.f32.mrb[0].mxu0
    %1053 = vmatprep.mubr.f32.mxu0 0.0
    %1054 = vmatmul.mubr.f32.gmra.mrb[0].mxu0 %v982
    %v1055 = vpop.f32.mrb[0].mxu0
    %v1056 = vadd.f32 %v975, %v1055
    %v1057 = vpop.f32.mrb[0].mxu0
    %1058 = vdwg.mxu0
    %1059 = vmatprep.subr.mxu0 0.0
    %1060 = vmatpush1.msra.mxu0 %v816
    %1061 = vmatprep.subr.mxu0 0.0
    %1062 = vmatpush1.msra.mxu0 %v817
    %1063 = vmatprep.subr.mxu0 0.0
    %1064 = vmatpush1.msra.mxu0 0.0
    %1065 = vmatprep.subr.mxu0 0.0
    %1066 = vmatpush1.msra.mxu0 0.0
    %1067 = vmatprep.subr.mxu0 0.0
    %1068 = vmatpush1.msra.mxu0 0.0
    %1069 = vmatprep.subr.mxu0 0.0
    %1070 = vmatpush1.msra.mxu0 0.0
    %1071 = vmatprep.subr.mxu0 0.0
    %1072 = vmatpush1.msra.mxu0 0.0
    %1073 = vmatprep.subr.mxu0 0.0
    %1074 = vmatpush1.msra.mxu0 0.0
    %1075 = vmatprep.subr.mxu0 0.0
    %1076 = vmatpush1.msra.mxu0 0.0
    %1077 = vmatprep.subr.mxu0 0.0
    %1078 = vmatpush1.msra.mxu0 0.0
    %1079 = vmatprep.subr.mxu0 0.0
    %1080 = vmatpush1.msra.mxu0 0.0
    %1081 = vmatprep.subr.mxu0 0.0
    %1082 = vmatpush1.msra.mxu0 0.0
    %1083 = vmatprep.subr.mxu0 0.0
    %1084 = vmatpush1.msra.mxu0 0.0
    %1085 = vmatprep.subr.mxu0 0.0
    %1086 = vmatpush1.msra.mxu0 0.0
    %1087 = vmatprep.subr.mxu0 0.0
    %1088 = vmatpush1.msra.mxu0 0.0
    %1089 = vmatprep.subr.mxu0 0.0
    %1090 = vmatpush1.msra.mxu0 0.0
    %1091 = vmatprep.subr.mxu0 0.0
    %1092 = vmatpush1.msra.mxu0 0.0
    %1093 = vmatprep.subr.mxu0 0.0
    %1094 = vmatpush1.msra.mxu0 0.0
    %1095 = vmatprep.subr.mxu0 0.0
    %1096 = vmatpush1.msra.mxu0 0.0
    %1097 = vmatprep.subr.mxu0 0.0
    %1098 = vmatpush1.msra.mxu0 0.0
    %1099 = vmatprep.subr.mxu0 0.0
    %1100 = vmatpush1.msra.mxu0 0.0
    %1101 = vmatprep.subr.mxu0 0.0
    %1102 = vmatpush1.msra.mxu0 0.0
    %1103 = vmatprep.subr.mxu0 0.0
    %1104 = vmatpush1.msra.mxu0 0.0
    %1105 = vmatprep.subr.mxu0 0.0
    %1106 = vmatpush1.msra.mxu0 0.0
    %1107 = vmatprep.subr.mxu0 0.0
    %1108 = vmatpush1.msra.mxu0 0.0
    %1109 = vmatprep.subr.mxu0 0.0
    %1110 = vmatpush1.msra.mxu0 0.0
    %1111 = vmatprep.subr.mxu0 0.0
    %1112 = vmatpush1.msra.mxu0 0.0
    %1113 = vmatprep.subr.mxu0 0.0
    %1114 = vmatpush1.msra.mxu0 0.0
    %1115 = vmatprep.subr.mxu0 0.0
    %1116 = vmatpush1.msra.mxu0 0.0
    %1117 = vmatprep.subr.mxu0 0.0
    %1118 = vmatpush1.msra.mxu0 0.0
    %1119 = vmatprep.subr.mxu0 0.0
    %1120 = vmatpush1.msra.mxu0 0.0
    %1121 = vmatprep.subr.mxu0 0.0
    %1122 = vmatpush1.msra.mxu0 0.0
    %1123 = vmatprep.mubr.f32.mxu0 0.0
    %1124 = vmatmul.mubr.f32.gmra.mrb[0].mxu0 %v480
    %v1125 = vpop.f32.mrb[0].mxu0
    %v1126 = vadd.f32 0.0, %v1125
    %v1127 = vpop.f32.mrb[0].mxu0
    %1128 = vmatprep.mubr.f32.mxu0 0.0
    %1129 = vmatmul.mubr.f32.gmra.mrb[0].mxu0 %v483
    %v1130 = vpop.f32.mrb[0].mxu0
    %v1131 = vadd.f32 0.0, %v1130
    %v1132 = vpop.f32.mrb[0].mxu0
    %1133 = vdwg.mxu0
    %v1134 = vld [vmem:[%s2 + $0x48] sm:$0xff]
    %v1135 = vld [vmem:[%s2 + $0x50] sm:$0xff]
    %v1137 = vsel %vm36, %v1126, 0
    %v1140 = vsel %vm36, %v1131, 0
    %1142 = vmatprep.subr.mxu0 0.0
    %1143 = vmatpush1.msra.mxu0 %v1134
    %1144 = vmatprep.subr.mxu0 0.0
    %1145 = vmatpush1.msra.mxu0 %v1135
    %1146 = vmatprep.subr.mxu0 0.0
    %1147 = vmatpush1.msra.mxu0 0.0
    %1148 = vmatprep.subr.mxu0 0.0
    %1149 = vmatpush1.msra.mxu0 0.0
    %1150 = vmatprep.subr.mxu0 0.0
    %1151 = vmatpush1.msra.mxu0 0.0
    %1152 = vmatprep.subr.mxu0 0.0
    %1153 = vmatpush1.msra.mxu0 0.0
    %1154 = vmatprep.subr.mxu0 0.0
    %1155 = vmatpush1.msra.mxu0 0.0
    %1156 = vmatprep.subr.mxu0 0.0
    %1157 = vmatpush1.msra.mxu0 0.0
    %1158 = vmatprep.subr.mxu0 0.0
    %1159 = vmatpush1.msra.mxu0 0.0
    %1160 = vmatprep.subr.mxu0 0.0
    %1161 = vmatpush1.msra.mxu0 0.0
    %1162 = vmatprep.subr.mxu0 0.0
    %1163 = vmatpush1.msra.mxu0 0.0
    %1164 = vmatprep.subr.mxu0 0.0
    %1165 = vmatpush1.msra.mxu0 0.0
    %1166 = vmatprep.subr.mxu0 0.0
    %1167 = vmatpush1.msra.mxu0 0.0
    %1168 = vmatprep.subr.mxu0 0.0
    %1169 = vmatpush1.msra.mxu0 0.0
    %1170 = vmatprep.subr.mxu0 0.0
    %1171 = vmatpush1.msra.mxu0 0.0
    %1172 = vmatprep.subr.mxu0 0.0
    %1173 = vmatpush1.msra.mxu0 0.0
    %1174 = vmatprep.subr.mxu0 0.0
    %1175 = vmatpush1.msra.mxu0 0.0
    %1176 = vmatprep.subr.mxu0 0.0
    %1177 = vmatpush1.msra.mxu0 0.0
    %1178 = vmatprep.subr.mxu0 0.0
    %1179 = vmatpush1.msra.mxu0 0.0
    %1180 = vmatprep.subr.mxu0 0.0
    %1181 = vmatpush1.msra.mxu0 0.0
    %1182 = vmatprep.subr.mxu0 0.0
    %1183 = vmatpush1.msra.mxu0 0.0
    %1184 = vmatprep.subr.mxu0 0.0
    %1185 = vmatpush1.msra.mxu0 0.0
    %1186 = vmatprep.subr.mxu0 0.0
    %1187 = vmatpush1.msra.mxu0 0.0
    %1188 = vmatprep.subr.mxu0 0.0
    %1189 = vmatpush1.msra.mxu0 0.0
    %1190 = vmatprep.subr.mxu0 0.0
    %1191 = vmatpush1.msra.mxu0 0.0
    %1192 = vmatprep.subr.mxu0 0.0
    %1193 = vmatpush1.msra.mxu0 0.0
    %1194 = vmatprep.subr.mxu0 0.0
    %1195 = vmatpush1.msra.mxu0 0.0
    %1196 = vmatprep.subr.mxu0 0.0
    %1197 = vmatpush1.msra.mxu0 0.0
    %1198 = vmatprep.subr.mxu0 0.0
    %1199 = vmatpush1.msra.mxu0 0.0
    %1200 = vmatprep.subr.mxu0 0.0
    %1201 = vmatpush1.msra.mxu0 0.0
    %1202 = vmatprep.subr.mxu0 0.0
    %1203 = vmatpush1.msra.mxu0 0.0
    %1204 = vmatprep.subr.mxu0 0.0
    %1205 = vmatpush1.msra.mxu0 0.0
    %1206 = vmatprep.mubr.f32.mxu0 0.0
    %1207 = vmatmul.mubr.f32.gmra.mrb[0].mxu0 %v1137
    %v1208 = vpop.f32.mrb[0].mxu0
    %v1209 = vadd.f32 0.0, %v1208
    %v1210 = vpop.f32.mrb[0].mxu0
    %1211 = vmatprep.mubr.f32.mxu0 0.0
    %1212 = vmatmul.mubr.f32.gmra.mrb[0].mxu0 %v1140
    %v1213 = vpop.f32.mrb[0].mxu0
    %v1214 = vadd.f32 0.0, %v1213
    %v1215 = vpop.f32.mrb[0].mxu0
    %1216 = vdwg.mxu0
    %v1217 = vadd.f32 %v1051, %v1209
    %v1218 = vadd.f32 %v1056, %v1214
    %1219 = vmatprep.subr.mxu0 0.0
    %1220 = vmatpush1.msra.mxu0 %v816
    %1221 = vmatprep.subr.mxu0 0.0
    %1222 = vmatpush1.msra.mxu0 %v817
    %1223 = vmatprep.subr.mxu0 0.0
    %1224 = vmatpush1.msra.mxu0 0.0
    %1225 = vmatprep.subr.mxu0 0.0
    %1226 = vmatpush1.msra.mxu0 0.0
    %1227 = vmatprep.subr.mxu0 0.0
    %1228 = vmatpush1.msra.mxu0 0.0
    %1229 = vmatprep.subr.mxu0 0.0
    %1230 = vmatpush1.msra.mxu0 0.0
    %1231 = vmatprep.subr.mxu0 0.0
    %1232 = vmatpush1.msra.mxu0 0.0
    %1233 = vmatprep.subr.mxu0 0.0
    %1234 = vmatpush1.msra.mxu0 0.0
    %1235 = vmatprep.subr.mxu0 0.0
    %1236 = vmatpush1.msra.mxu0 0.0
    %1237 = vmatprep.subr.mxu0 0.0
    %1238 = vmatpush1.msra.mxu0 0.0
    %1239 = vmatprep.subr.mxu0 0.0
    %1240 = vmatpush1.msra.mxu0 0.0
    %1241 = vmatprep.subr.mxu0 0.0
    %1242 = vmatpush1.msra.mxu0 0.0
    %1243 = vmatprep.subr.mxu0 0.0
    %1244 = vmatpush1.msra.mxu0 0.0
    %1245 = vmatprep.subr.mxu0 0.0
    %1246 = vmatpush1.msra.mxu0 0.0
    %1247 = vmatprep.subr.mxu0 0.0
    %1248 = vmatpush1.msra.mxu0 0.0
    %1249 = vmatprep.subr.mxu0 0.0
    %1250 = vmatpush1.msra.mxu0 0.0
    %1251 = vmatprep.subr.mxu0 0.0
    %1252 = vmatpush1.msra.mxu0 0.0
    %1253 = vmatprep.subr.mxu0 0.0
    %1254 = vmatpush1.msra.mxu0 0.0
    %1255 = vmatprep.subr.mxu0 0.0
    %1256 = vmatpush1.msra.mxu0 0.0
    %1257 = vmatprep.subr.mxu0 0.0
    %1258 = vmatpush1.msra.mxu0 0.0
    %1259 = vmatprep.subr.mxu0 0.0
    %1260 = vmatpush1.msra.mxu0 0.0
    %1261 = vmatprep.subr.mxu0 0.0
    %1262 = vmatpush1.msra.mxu0 0.0
    %1263 = vmatprep.subr.mxu0 0.0
    %1264 = vmatpush1.msra.mxu0 0.0
    %1265 = vmatprep.subr.mxu0 0.0
    %1266 = vmatpush1.msra.mxu0 0.0
    %1267 = vmatprep.subr.mxu0 0.0
    %1268 = vmatpush1.msra.mxu0 0.0
    %1269 = vmatprep.subr.mxu0 0.0
    %1270 = vmatpush1.msra.mxu0 0.0
    %1271 = vmatprep.subr.mxu0 0.0
    %1272 = vmatpush1.msra.mxu0 0.0
    %1273 = vmatprep.subr.mxu0 0.0
    %1274 = vmatpush1.msra.mxu0 0.0
    %1275 = vmatprep.subr.mxu0 0.0
    %1276 = vmatpush1.msra.mxu0 0.0
    %1277 = vmatprep.subr.mxu0 0.0
    %1278 = vmatpush1.msra.mxu0 0.0
    %1279 = vmatprep.subr.mxu0 0.0
    %1280 = vmatpush1.msra.mxu0 0.0
    %1281 = vmatprep.subr.mxu0 0.0
    %1282 = vmatpush1.msra.mxu0 0.0
    %1283 = vmatprep.mubr.f32.mxu0 0.0
    %1284 = vmatmul.mubr.f32.gmra.mrb[0].mxu0 %v645
    %v1285 = vpop.f32.mrb[0].mxu0
    %v1286 = vadd.f32 0.0, %v1285
    %v1287 = vpop.f32.mrb[0].mxu0
    %1288 = vmatprep.mubr.f32.mxu0 0.0
    %1289 = vmatmul.mubr.f32.gmra.mrb[0].mxu0 %v648
    %v1290 = vpop.f32.mrb[0].mxu0
    %v1291 = vadd.f32 0.0, %v1290
    %v1292 = vpop.f32.mrb[0].mxu0
    %1293 = vdwg.mxu0
    %v1294 = vld [vmem:[%s2 + $0x58] sm:$0xff]
    %v1295 = vld [vmem:[%s2 + $0x60] sm:$0xff]
    %v1297 = vsel %vm36, %v1286, 0
    %v1300 = vsel %vm36, %v1291, 0
    %1302 = vmatprep.subr.mxu0 0.0
    %1303 = vmatpush1.msra.mxu0 %v1294
    %1304 = vmatprep.subr.mxu0 0.0
    %1305 = vmatpush1.msra.mxu0 %v1295
    %1306 = vmatprep.subr.mxu0 0.0
    %1307 = vmatpush1.msra.mxu0 0.0
    %1308 = vmatprep.subr.mxu0 0.0
    %1309 = vmatpush1.msra.mxu0 0.0
    %1310 = vmatprep.subr.mxu0 0.0
    %1311 = vmatpush1.msra.mxu0 0.0
    %1312 = vmatprep.subr.mxu0 0.0
    %1313 = vmatpush1.msra.mxu0 0.0
    %1314 = vmatprep.subr.mxu0 0.0
    %1315 = vmatpush1.msra.mxu0 0.0
    %1316 = vmatprep.subr.mxu0 0.0
    %1317 = vmatpush1.msra.mxu0 0.0
    %1318 = vmatprep.subr.mxu0 0.0
    %1319 = vmatpush1.msra.mxu0 0.0
    %1320 = vmatprep.subr.mxu0 0.0
    %1321 = vmatpush1.msra.mxu0 0.0
    %1322 = vmatprep.subr.mxu0 0.0
    %1323 = vmatpush1.msra.mxu0 0.0
    %1324 = vmatprep.subr.mxu0 0.0
    %1325 = vmatpush1.msra.mxu0 0.0
    %1326 = vmatprep.subr.mxu0 0.0
    %1327 = vmatpush1.msra.mxu0 0.0
    %1328 = vmatprep.subr.mxu0 0.0
    %1329 = vmatpush1.msra.mxu0 0.0
    %1330 = vmatprep.subr.mxu0 0.0
    %1331 = vmatpush1.msra.mxu0 0.0
    %1332 = vmatprep.subr.mxu0 0.0
    %1333 = vmatpush1.msra.mxu0 0.0
    %1334 = vmatprep.subr.mxu0 0.0
    %1335 = vmatpush1.msra.mxu0 0.0
    %1336 = vmatprep.subr.mxu0 0.0
    %1337 = vmatpush1.msra.mxu0 0.0
    %1338 = vmatprep.subr.mxu0 0.0
    %1339 = vmatpush1.msra.mxu0 0.0
    %1340 = vmatprep.subr.mxu0 0.0
    %1341 = vmatpush1.msra.mxu0 0.0
    %1342 = vmatprep.subr.mxu0 0.0
    %1343 = vmatpush1.msra.mxu0 0.0
    %1344 = vmatprep.subr.mxu0 0.0
    %1345 = vmatpush1.msra.mxu0 0.0
    %1346 = vmatprep.subr.mxu0 0.0
    %1347 = vmatpush1.msra.mxu0 0.0
    %1348 = vmatprep.subr.mxu0 0.0
    %1349 = vmatpush1.msra.mxu0 0.0
    %1350 = vmatprep.subr.mxu0 0.0
    %1351 = vmatpush1.msra.mxu0 0.0
    %1352 = vmatprep.subr.mxu0 0.0
    %1353 = vmatpush1.msra.mxu0 0.0
    %1354 = vmatprep.subr.mxu0 0.0
    %1355 = vmatpush1.msra.mxu0 0.0
    %1356 = vmatprep.subr.mxu0 0.0
    %1357 = vmatpush1.msra.mxu0 0.0
    %1358 = vmatprep.subr.mxu0 0.0
    %1359 = vmatpush1.msra.mxu0 0.0
    %1360 = vmatprep.subr.mxu0 0.0
    %1361 = vmatpush1.msra.mxu0 0.0
    %1362 = vmatprep.subr.mxu0 0.0
    %1363 = vmatpush1.msra.mxu0 0.0
    %1364 = vmatprep.subr.mxu0 0.0
    %1365 = vmatpush1.msra.mxu0 0.0
    %1366 = vmatprep.mubr.f32.mxu0 0.0
    %1367 = vmatmul.mubr.f32.gmra.mrb[0].mxu0 %v1297
    %v1368 = vpop.f32.mrb[0].mxu0
    %v1369 = vadd.f32 0.0, %v1368
    %v1370 = vpop.f32.mrb[0].mxu0
    %1371 = vmatprep.mubr.f32.mxu0 0.0
    %1372 = vmatmul.mubr.f32.gmra.mrb[0].mxu0 %v1300
    %v1373 = vpop.f32.mrb[0].mxu0
    %v1374 = vadd.f32 0.0, %v1373
    %v1375 = vpop.f32.mrb[0].mxu0
    %1376 = vdwg.mxu0
    %v1377 = vadd.f32 %v1217, %v1369
    %v1378 = vadd.f32 %v1218, %v1374
    %v1379 = vld [vmem:[%s2 + $0x68] sm:$0x1]
    %v1380 = vlaneseq
    %v1381 = vshrl.u32 %v1380, 7
    %v1382 = vsub.s32 0, %v1381
    %v1383 = vrot.slane %v1379, %v1382
    %v1384 = vadd.f32 %v1377, %v1383
    %v1385 = vadd.f32 %v1378, %v1383
    %v1386 = vmax.f32 %v1384, 0.0
    %v1387 = vmax.f32 %v1385, 0.0
    %vm1388 = vcmask 261120
    %v1389 = vsel %vm1388, %v1386, 0.0
    %v1390 = vsel %vm1388, %v1387, 0.0
    %v1391 = vadd.f32 %v1389, %v1390
    %v1392 = vrot.slane %v1391, 4
    %v1393 = vadd.f32 %v1391, %v1392
    %v1394 = vrot.slane %v1393, 2
    %v1395 = vadd.f32 %v1393, %v1394
    %v1396 = vrot.slane %v1395, 1
    %v1397 = vadd.f32 %v1395, %v1396
    %v1398 = vmul.f32 %v1397, 0.0625
    %v1399 = vld [vmem:[%s2 + $0x70] sm:$0xff]
    %v1400 = vld [vmem:[%s2 + $0x78] sm:$0xff]
    %v1401 = vld [vmem:[%s2 + $0x80] sm:$0xff]
    %v1402 = vld [vmem:[%s2 + $0x88] sm:$0xff]
    %1403 = vmatprep.subr.mxu0 0.0
    %1404 = vmatpush1.msra.mxu0 %v1386
    %1405 = vmatprep.subr.mxu0 0.0
    %1406 = vmatpush1.msra.mxu0 %v1387
    %1407 = vmatprep.subr.mxu0 0.0
    %1408 = vmatpush1.msra.mxu0 0.0
    %1409 = vmatprep.subr.mxu0 0.0
    %1410 = vmatpush1.msra.mxu0 0.0
    %1411 = vmatprep.subr.mxu0 0.0
    %1412 = vmatpush1.msra.mxu0 0.0
    %1413 = vmatprep.subr.mxu0 0.0
    %1414 = vmatpush1.msra.mxu0 0.0
    %1415 = vmatprep.subr.mxu0 0.0
    %1416 = vmatpush1.msra.mxu0 0.0
    %1417 = vmatprep.subr.mxu0 0.0
    %1418 = vmatpush1.msra.mxu0 0.0
    %1419 = vmatprep.subr.mxu0 0.0
    %1420 = vmatpush1.msra.mxu0 0.0
    %1421 = vmatprep.subr.mxu0 0.0
    %1422 = vmatpush1.msra.mxu0 0.0
    %1423 = vmatprep.subr.mxu0 0.0
    %1424 = vmatpush1.msra.mxu0 0.0
    %1425 = vmatprep.subr.mxu0 0.0
    %1426 = vmatpush1.msra.mxu0 0.0
    %1427 = vmatprep.subr.mxu0 0.0
    %1428 = vmatpush1.msra.mxu0 0.0
    %1429 = vmatprep.subr.mxu0 0.0
    %1430 = vmatpush1.msra.mxu0 0.0
    %1431 = vmatprep.subr.mxu0 0.0
    %1432 = vmatpush1.msra.mxu0 0.0
    %1433 = vmatprep.subr.mxu0 0.0
    %1434 = vmatpush1.msra.mxu0 0.0
    %1435 = vmatprep.subr.mxu0 0.0
    %1436 = vmatpush1.msra.mxu0 0.0
    %1437 = vmatprep.subr.mxu0 0.0
    %1438 = vmatpush1.msra.mxu0 0.0
    %1439 = vmatprep.subr.mxu0 0.0
    %1440 = vmatpush1.msra.mxu0 0.0
    %1441 = vmatprep.subr.mxu0 0.0
    %1442 = vmatpush1.msra.mxu0 0.0
    %1443 = vmatprep.subr.mxu0 0.0
    %1444 = vmatpush1.msra.mxu0 0.0
    %1445 = vmatprep.subr.mxu0 0.0
    %1446 = vmatpush1.msra.mxu0 0.0
    %1447 = vmatprep.subr.mxu0 0.0
    %1448 = vmatpush1.msra.mxu0 0.0
    %1449 = vmatprep.subr.mxu0 0.0
    %1450 = vmatpush1.msra.mxu0 0.0
    %1451 = vmatprep.subr.mxu0 0.0
    %1452 = vmatpush1.msra.mxu0 0.0
    %1453 = vmatprep.subr.mxu0 0.0
    %1454 = vmatpush1.msra.mxu0 0.0
    %1455 = vmatprep.subr.mxu0 0.0
    %1456 = vmatpush1.msra.mxu0 0.0
    %1457 = vmatprep.subr.mxu0 0.0
    %1458 = vmatpush1.msra.mxu0 0.0
    %1459 = vmatprep.subr.mxu0 0.0
    %1460 = vmatpush1.msra.mxu0 0.0
    %1461 = vmatprep.subr.mxu0 0.0
    %1462 = vmatpush1.msra.mxu0 0.0
    %1463 = vmatprep.subr.mxu0 0.0
    %1464 = vmatpush1.msra.mxu0 0.0
    %1465 = vmatprep.subr.mxu0 0.0
    %1466 = vmatpush1.msra.mxu0 0.0
    %1467 = vmatprep.mubr.f32.mxu0 0.0
    %1468 = vmatmul.mubr.f32.gmra.mrb[0].mxu0 %v76
    %v1469 = vpop.f32.mrb[0].mxu0
    %v1470 = vadd.f32 0.0, %v1469
    %v1471 = vpop.f32.mrb[0].mxu0
    %1472 = vmatprep.mubr.f32.mxu0 0.0
    %1473 = vmatmul.mubr.f32.gmra.mrb[0].mxu0 %v79
    %v1474 = vpop.f32.mrb[0].mxu0
    %v1475 = vadd.f32 0.0, %v1474
    %v1476 = vpop.f32.mrb[0].mxu0
    %1477 = vdwg.mxu0
    %v1478 = vld [vmem:[%s2 + $0x90] sm:$0xff]
    %v1479 = vld [vmem:[%s2 + $0x98] sm:$0xff]
    %v1480 = vld [vmem:[%s2 + $0xa0] sm:$0xff]
    %v1481 = vld [vmem:[%s2 + $0xa8] sm:$0xff]
    %v1483 = vsel %vm1388, %v1470, 0
    %v1486 = vsel %vm1388, %v1475, 0
    %1488 = vmatprep.subr.mxu0 0.0
    %1489 = vmatpush1.msra.mxu0 %v1478
    %1490 = vmatprep.subr.mxu0 0.0
    %1491 = vmatpush1.msra.mxu0 %v1479
    %1492 = vmatprep.subr.mxu0 0.0
    %1493 = vmatpush1.msra.mxu0 %v1480
    %1494 = vmatprep.subr.mxu0 0.0
    %1495 = vmatpush1.msra.mxu0 %v1481
    %1496 = vmatprep.subr.mxu0 0.0
    %1497 = vmatpush1.msra.mxu0 0.0
    %1498 = vmatprep.subr.mxu0 0.0
    %1499 = vmatpush1.msra.mxu0 0.0
    %1500 = vmatprep.subr.mxu0 0.0
    %1501 = vmatpush1.msra.mxu0 0.0
    %1502 = vmatprep.subr.mxu0 0.0
    %1503 = vmatpush1.msra.mxu0 0.0
    %1504 = vmatprep.subr.mxu0 0.0
    %1505 = vmatpush1.msra.mxu0 0.0
    %1506 = vmatprep.subr.mxu0 0.0
    %1507 = vmatpush1.msra.mxu0 0.0
    %1508 = vmatprep.subr.mxu0 0.0
    %1509 = vmatpush1.msra.mxu0 0.0
    %1510 = vmatprep.subr.mxu0 0.0
    %1511 = vmatpush1.msra.mxu0 0.0
    %1512 = vmatprep.subr.mxu0 0.0
    %1513 = vmatpush1.msra.mxu0 0.0
    %1514 = vmatprep.subr.mxu0 0.0
    %1515 = vmatpush1.msra.mxu0 0.0
    %1516 = vmatprep.subr.mxu0 0.0
    %1517 = vmatpush1.msra.mxu0 0.0
    %1518 = vmatprep.subr.mxu0 0.0
    %1519 = vmatpush1.msra.mxu0 0.0
    %1520 = vmatprep.subr.mxu0 0.0
    %1521 = vmatpush1.msra.mxu0 0.0
    %1522 = vmatprep.subr.mxu0 0.0
    %1523 = vmatpush1.msra.mxu0 0.0
    %1524 = vmatprep.subr.mxu0 0.0
    %1525 = vmatpush1.msra.mxu0 0.0
    %1526 = vmatprep.subr.mxu0 0.0
    %1527 = vmatpush1.msra.mxu0 0.0
    %1528 = vmatprep.subr.mxu0 0.0
    %1529 = vmatpush1.msra.mxu0 0.0
    %1530 = vmatprep.subr.mxu0 0.0
    %1531 = vmatpush1.msra.mxu0 0.0
    %1532 = vmatprep.subr.mxu0 0.0
    %1533 = vmatpush1.msra.mxu0 0.0
    %1534 = vmatprep.subr.mxu0 0.0
    %1535 = vmatpush1.msra.mxu0 0.0
    %1536 = vmatprep.subr.mxu0 0.0
    %1537 = vmatpush1.msra.mxu0 0.0
    %1538 = vmatprep.subr.mxu0 0.0
    %1539 = vmatpush1.msra.mxu0 0.0
    %1540 = vmatprep.subr.mxu0 0.0
    %1541 = vmatpush1.msra.mxu0 0.0
    %1542 = vmatprep.subr.mxu0 0.0
    %1543 = vmatpush1.msra.mxu0 0.0
    %1544 = vmatprep.subr.mxu0 0.0
    %1545 = vmatpush1.msra.mxu0 0.0
    %1546 = vmatprep.subr.mxu0 0.0
    %1547 = vmatpush1.msra.mxu0 0.0
    %1548 = vmatprep.subr.mxu0 0.0
    %1549 = vmatpush1.msra.mxu0 0.0
    %1550 = vmatprep.subr.mxu0 0.0
    %1551 = vmatpush1.msra.mxu0 0.0
    %1552 = vmatprep.mubr.f32.mxu0 0.0
    %1553 = vmatmul.mubr.f32.gmra.mrb[0].mxu0 %v1483
    %v1554 = vpop.f32.mrb[0].mxu0
    %v1555 = vadd.f32 0.0, %v1554
    %v1556 = vpop.f32.mrb[0].mxu0
    %1557 = vmatprep.mubr.f32.mxu0 0.0
    %1558 = vmatmul.mubr.f32.gmra.mrb[0].mxu0 %v1486
    %v1559 = vpop.f32.mrb[0].mxu0
    %v1560 = vadd.f32 0.0, %v1559
    %v1561 = vpop.f32.mrb[0].mxu0
    %1562 = vdwg.mxu0
    %v1564 = vsel %vm1388, %v1386, 0
    %v1567 = vsel %vm1388, %v1387, 0
    %1569 = vmatprep.subr.mxu0 0.0
    %1570 = vmatpush1.msra.mxu0 %v1399
    %1571 = vmatprep.subr.mxu0 0.0
    %1572 = vmatpush1.msra.mxu0 %v1400
    %1573 = vmatprep.subr.mxu0 0.0
    %1574 = vmatpush1.msra.mxu0 %v1401
    %1575 = vmatprep.subr.mxu0 0.0
    %1576 = vmatpush1.msra.mxu0 %v1402
    %1577 = vmatprep.subr.mxu0 0.0
    %1578 = vmatpush1.msra.mxu0 0.0
    %1579 = vmatprep.subr.mxu0 0.0
    %1580 = vmatpush1.msra.mxu0 0.0
    %1581 = vmatprep.subr.mxu0 0.0
    %1582 = vmatpush1.msra.mxu0 0.0
    %1583 = vmatprep.subr.mxu0 0.0
    %1584 = vmatpush1.msra.mxu0 0.0
    %1585 = vmatprep.subr.mxu0 0.0
    %1586 = vmatpush1.msra.mxu0 0.0
    %1587 = vmatprep.subr.mxu0 0.0
    %1588 = vmatpush1.msra.mxu0 0.0
    %1589 = vmatprep.subr.mxu0 0.0
    %1590 = vmatpush1.msra.mxu0 0.0
    %1591 = vmatprep.subr.mxu0 0.0
    %1592 = vmatpush1.msra.mxu0 0.0
    %1593 = vmatprep.subr.mxu0 0.0
    %1594 = vmatpush1.msra.mxu0 0.0
    %1595 = vmatprep.subr.mxu0 0.0
    %1596 = vmatpush1.msra.mxu0 0.0
    %1597 = vmatprep.subr.mxu0 0.0
    %1598 = vmatpush1.msra.mxu0 0.0
    %1599 = vmatprep.subr.mxu0 0.0
    %1600 = vmatpush1.msra.mxu0 0.0
    %1601 = vmatprep.subr.mxu0 0.0
    %1602 = vmatpush1.msra.mxu0 0.0
    %1603 = vmatprep.subr.mxu0 0.0
    %1604 = vmatpush1.msra.mxu0 0.0
    %1605 = vmatprep.subr.mxu0 0.0
    %1606 = vmatpush1.msra.mxu0 0.0
    %1607 = vmatprep.subr.mxu0 0.0
    %1608 = vmatpush1.msra.mxu0 0.0
    %1609 = vmatprep.subr.mxu0 0.0
    %1610 = vmatpush1.msra.mxu0 0.0
    %1611 = vmatprep.subr.mxu0 0.0
    %1612 = vmatpush1.msra.mxu0 0.0
    %1613 = vmatprep.subr.mxu0 0.0
    %1614 = vmatpush1.msra.mxu0 0.0
    %1615 = vmatprep.subr.mxu0 0.0
    %1616 = vmatpush1.msra.mxu0 0.0
    %1617 = vmatprep.subr.mxu0 0.0
    %1618 = vmatpush1.msra.mxu0 0.0
    %1619 = vmatprep.subr.mxu0 0.0
    %1620 = vmatpush1.msra.mxu0 0.0
    %1621 = vmatprep.subr.mxu0 0.0
    %1622 = vmatpush1.msra.mxu0 0.0
    %1623 = vmatprep.subr.mxu0 0.0
    %1624 = vmatpush1.msra.mxu0 0.0
    %1625 = vmatprep.subr.mxu0 0.0
    %1626 = vmatpush1.msra.mxu0 0.0
    %1627 = vmatprep.subr.mxu0 0.0
    %1628 = vmatpush1.msra.mxu0 0.0
    %1629 = vmatprep.subr.mxu0 0.0
    %1630 = vmatpush1.msra.mxu0 0.0
    %1631 = vmatprep.subr.mxu0 0.0
    %1632 = vmatpush1.msra.mxu0 0.0
    %1633 = vmatprep.mubr.f32.mxu0 0.0
    %1634 = vmatmul.mubr.f32.gmra.mrb[0].mxu0 %v1564
    %v1635 = vpop.f32.mrb[0].mxu0
    %v1636 = vadd.f32 %v1555, %v1635
    %v1637 = vpop.f32.mrb[0].mxu0
    %1638 = vmatprep.mubr.f32.mxu0 0.0
    %1639 = vmatmul.mubr.f32.gmra.mrb[0].mxu0 %v1567
    %v1640 = vpop.f32.mrb[0].mxu0
    %v1641 = vadd.f32 %v1560, %v1640
    %v1642 = vpop.f32.mrb[0].mxu0
    %1643 = vdwg.mxu0
    %v1644 = vld [vmem:[%s2 + $0xb0] sm:$0x1]
    %v1645 = vlaneseq
    %v1646 = vshrl.u32 %v1645, 7
    %v1647 = vsub.s32 0, %v1646
    %v1648 = vrot.slane %v1644, %v1647
    %v1649 = vadd.f32 %v1636, %v1648
    %v1650 = vadd.f32 %v1641, %v1648
    %v1651 = vmax.f32 %v1649, 0.0
    %v1652 = vmax.f32 %v1650, 0.0
    %v1653 = vsel %vm1388, %v1651, 0.0
    %v1654 = vsel %vm1388, %v1652, 0.0
    %v1655 = vadd.f32 %v1653, %v1654
    %v1656 = vrot.slane %v1655, 4
    %v1657 = vadd.f32 %v1655, %v1656
    %v1658 = vrot.slane %v1657, 2
    %v1659 = vadd.f32 %v1657, %v1658
    %v1660 = vrot.slane %v1659, 1
    %v1661 = vadd.f32 %v1659, %v1660
    %v1662 = vmul.f32 %v1661, 0.0625
    %vm1663 = vcmp.eq.f32.partialorder %v26, 0.0
    %vm1664 = vcmp.eq.f32.partialorder %v27, 0.0
    %v1665 = vsel %vm1663, 1.0, 0.0
    %v1666 = vsel %vm1664, 1.0, 0.0
    %v1667 = vmul.f32 %v24, %v1665
    %v1668 = vmul.f32 %v25, %v1666
    %v1669 = vadd.f32 %v26, %v1667
    %v1670 = vadd.f32 %v27, %v1668
    %vm1671 = vcmp.ne.f32.partialorder %v1669, 0.0
    %vm1672 = vcmp.ne.f32.partialorder %v1670, 0.0
    %v1673 = vsel %vm1671, 1, 0
    %v1674 = vsel %vm1672, 1, 0
    %v1675 = vcvt.s32.f32 %v1673
    %v1676 = vcvt.s32.f32 %v1674
    %v1677 = vsel %vm36, %v1675, 0.0
    %1678 = vadd.xlane.f32.xlu0 %v1677
    %v1679 = vpop.xlane.xlu0 %1678
    %v1680 = vsel %vm36, %v1676, 0.0
    %1681 = vadd.xlane.f32.xlu0 %v1680
    %v1682 = vpop.xlane.xlu0 %1681
    %vm1683 = vcmp.gt.f32.partialorder %v1675, 0.0
    %vm1684 = vcmp.gt.f32.partialorder %v1676, 0.0
    %v1685 = vsel %vm1683, 1, 0
    %v1686 = vsel %vm1684, 1, 0
    %1687 = vset.pattern.permute.xlu0 0
    %1688 = vperm.xlu0 %1687, %v1685
    %v1689 = vpop.permute.xlu0 %1688
    %1690 = vset.pattern.permute.xlu0 0
    %1691 = vperm.xlu0 %1690, %v1686
    %v1692 = vpop.permute.xlu0 %1691
    %vm1693 = vcmp.eq.s32.totalorder %v1689, 1
    %vm1694 = vcmp.eq.s32.totalorder %v1692, 1
    %v1695 = vlaneseq
    %v1696 = vshrl.u32 %v1695, 7
    %v1697 = vsub.s32 0, %v1696
    %v1698 = vrot.slane %v1651, %v1697
    %v1699 = vsel %vm1693, %v1698, -1e+30
    %v1700 = vsel %vm1694, %v1698, -1e+30
    %v1701 = vmax.f32 %v1699, -1e+30
    %v1702 = vmax.f32 %v1700, -1e+30
    %1703 = vset.pattern.permute.xlu0 1
    %1704 = vperm.xlu0 %1703, %v1685
    %v1705 = vpop.permute.xlu0 %1704
    %1706 = vset.pattern.permute.xlu0 1
    %1707 = vperm.xlu0 %1706, %v1686
    %v1708 = vpop.permute.xlu0 %1707
    %vm1709 = vcmp.eq.s32.totalorder %v1705, 1
    %vm1710 = vcmp.eq.s32.totalorder %v1708, 1
    %v1711 = vlaneseq
    %v1712 = vshrl.u32 %v1711, 7
    %v1713 = vsub.s32 1, %v1712
    %v1714 = vrot.slane %v1651, %v1713
    %v1715 = vsel %vm1709, %v1714, -1e+30
    %v1716 = vsel %vm1710, %v1714, -1e+30
    %v1717 = vmax.f32 %v1701, %v1715
    %v1718 = vmax.f32 %v1702, %v1716
    %1719 = vset.pattern.permute.xlu0 2
    %1720 = vperm.xlu0 %1719, %v1685
    %v1721 = vpop.permute.xlu0 %1720
    %1722 = vset.pattern.permute.xlu0 2
    %1723 = vperm.xlu0 %1722, %v1686
    %v1724 = vpop.permute.xlu0 %1723
    %vm1725 = vcmp.eq.s32.totalorder %v1721, 1
    %vm1726 = vcmp.eq.s32.totalorder %v1724, 1
    %v1727 = vlaneseq
    %v1728 = vshrl.u32 %v1727, 7
    %v1729 = vsub.s32 2, %v1728
    %v1730 = vrot.slane %v1651, %v1729
    %v1731 = vsel %vm1725, %v1730, -1e+30
    %v1732 = vsel %vm1726, %v1730, -1e+30
    %v1733 = vmax.f32 %v1717, %v1731
    %v1734 = vmax.f32 %v1718, %v1732
    %1735 = vset.pattern.permute.xlu0 3
    %1736 = vperm.xlu0 %1735, %v1685
    %v1737 = vpop.permute.xlu0 %1736
    %1738 = vset.pattern.permute.xlu0 3
    %1739 = vperm.xlu0 %1738, %v1686
    %v1740 = vpop.permute.xlu0 %1739
    %vm1741 = vcmp.eq.s32.totalorder %v1737, 1
    %vm1742 = vcmp.eq.s32.totalorder %v1740, 1
    %v1743 = vlaneseq
    %v1744 = vshrl.u32 %v1743, 7
    %v1745 = vsub.s32 3, %v1744
    %v1746 = vrot.slane %v1651, %v1745
    %v1747 = vsel %vm1741, %v1746, -1e+30
    %v1748 = vsel %vm1742, %v1746, -1e+30
    %v1749 = vmax.f32 %v1733, %v1747
    %v1750 = vmax.f32 %v1734, %v1748
    %1751 = vset.pattern.permute.xlu0 4
    %1752 = vperm.xlu0 %1751, %v1685
    %v1753 = vpop.permute.xlu0 %1752
    %1754 = vset.pattern.permute.xlu0 4
    %1755 = vperm.xlu0 %1754, %v1686
    %v1756 = vpop.permute.xlu0 %1755
    %vm1757 = vcmp.eq.s32.totalorder %v1753, 1
    %vm1758 = vcmp.eq.s32.totalorder %v1756, 1
    %v1759 = vlaneseq
    %v1760 = vshrl.u32 %v1759, 7
    %v1761 = vsub.s32 4, %v1760
    %v1762 = vrot.slane %v1651, %v1761
    %v1763 = vsel %vm1757, %v1762, -1e+30
    %v1764 = vsel %vm1758, %v1762, -1e+30
    %v1765 = vmax.f32 %v1749, %v1763
    %v1766 = vmax.f32 %v1750, %v1764
    %1767 = vset.pattern.permute.xlu0 5
    %1768 = vperm.xlu0 %1767, %v1685
    %v1769 = vpop.permute.xlu0 %1768
    %1770 = vset.pattern.permute.xlu0 5
    %1771 = vperm.xlu0 %1770, %v1686
    %v1772 = vpop.permute.xlu0 %1771
    %vm1773 = vcmp.eq.s32.totalorder %v1769, 1
    %vm1774 = vcmp.eq.s32.totalorder %v1772, 1
    %v1775 = vlaneseq
    %v1776 = vshrl.u32 %v1775, 7
    %v1777 = vsub.s32 5, %v1776
    %v1778 = vrot.slane %v1651, %v1777
    %v1779 = vsel %vm1773, %v1778, -1e+30
    %v1780 = vsel %vm1774, %v1778, -1e+30
    %v1781 = vmax.f32 %v1765, %v1779
    %v1782 = vmax.f32 %v1766, %v1780
    %1783 = vset.pattern.permute.xlu0 6
    %1784 = vperm.xlu0 %1783, %v1685
    %v1785 = vpop.permute.xlu0 %1784
    %1786 = vset.pattern.permute.xlu0 6
    %1787 = vperm.xlu0 %1786, %v1686
    %v1788 = vpop.permute.xlu0 %1787
    %vm1789 = vcmp.eq.s32.totalorder %v1785, 1
    %vm1790 = vcmp.eq.s32.totalorder %v1788, 1
    %v1791 = vlaneseq
    %v1792 = vshrl.u32 %v1791, 7
    %v1793 = vsub.s32 6, %v1792
    %v1794 = vrot.slane %v1651, %v1793
    %v1795 = vsel %vm1789, %v1794, -1e+30
    %v1796 = vsel %vm1790, %v1794, -1e+30
    %v1797 = vmax.f32 %v1781, %v1795
    %v1798 = vmax.f32 %v1782, %v1796
    %1799 = vset.pattern.permute.xlu0 7
    %1800 = vperm.xlu0 %1799, %v1685
    %v1801 = vpop.permute.xlu0 %1800
    %1802 = vset.pattern.permute.xlu0 7
    %1803 = vperm.xlu0 %1802, %v1686
    %v1804 = vpop.permute.xlu0 %1803
    %vm1805 = vcmp.eq.s32.totalorder %v1801, 1
    %vm1806 = vcmp.eq.s32.totalorder %v1804, 1
    %v1807 = vlaneseq
    %v1808 = vshrl.u32 %v1807, 7
    %v1809 = vsub.s32 7, %v1808
    %v1810 = vrot.slane %v1651, %v1809
    %v1811 = vsel %vm1805, %v1810, -1e+30
    %v1812 = vsel %vm1806, %v1810, -1e+30
    %v1813 = vmax.f32 %v1797, %v1811
    %v1814 = vmax.f32 %v1798, %v1812
    %1815 = vset.pattern.permute.xlu0 8
    %1816 = vperm.xlu0 %1815, %v1685
    %v1817 = vpop.permute.xlu0 %1816
    %1818 = vset.pattern.permute.xlu0 8
    %1819 = vperm.xlu0 %1818, %v1686
    %v1820 = vpop.permute.xlu0 %1819
    %vm1821 = vcmp.eq.s32.totalorder %v1817, 1
    %vm1822 = vcmp.eq.s32.totalorder %v1820, 1
    %v1823 = vlaneseq
    %v1824 = vshrl.u32 %v1823, 7
    %v1825 = vsub.s32 0, %v1824
    %v1826 = vrot.slane %v1652, %v1825
    %v1827 = vsel %vm1821, %v1826, -1e+30
    %v1828 = vsel %vm1822, %v1826, -1e+30
    %v1829 = vmax.f32 %v1813, %v1827
    %v1830 = vmax.f32 %v1814, %v1828
    %1831 = vset.pattern.permute.xlu0 9
    %1832 = vperm.xlu0 %1831, %v1685
    %v1833 = vpop.permute.xlu0 %1832
    %1834 = vset.pattern.permute.xlu0 9
    %1835 = vperm.xlu0 %1834, %v1686
    %v1836 = vpop.permute.xlu0 %1835
    %vm1837 = vcmp.eq.s32.totalorder %v1833, 1
    %vm1838 = vcmp.eq.s32.totalorder %v1836, 1
    %v1839 = vlaneseq
    %v1840 = vshrl.u32 %v1839, 7
    %v1841 = vsub.s32 1, %v1840
    %v1842 = vrot.slane %v1652, %v1841
    %v1843 = vsel %vm1837, %v1842, -1e+30
    %v1844 = vsel %vm1838, %v1842, -1e+30
    %v1845 = vmax.f32 %v1829, %v1843
    %v1846 = vmax.f32 %v1830, %v1844
    %1847 = vset.pattern.permute.xlu0 10
    %1848 = vperm.xlu0 %1847, %v1685
    %v1849 = vpop.permute.xlu0 %1848
    %1850 = vset.pattern.permute.xlu0 10
    %1851 = vperm.xlu0 %1850, %v1686
    %v1852 = vpop.permute.xlu0 %1851
    %vm1853 = vcmp.eq.s32.totalorder %v1849, 1
    %vm1854 = vcmp.eq.s32.totalorder %v1852, 1
    %v1855 = vlaneseq
    %v1856 = vshrl.u32 %v1855, 7
    %v1857 = vsub.s32 2, %v1856
    %v1858 = vrot.slane %v1652, %v1857
    %v1859 = vsel %vm1853, %v1858, -1e+30
    %v1860 = vsel %vm1854, %v1858, -1e+30
    %v1861 = vmax.f32 %v1845, %v1859
    %v1862 = vmax.f32 %v1846, %v1860
    %1863 = vset.pattern.permute.xlu0 11
    %1864 = vperm.xlu0 %1863, %v1685
    %v1865 = vpop.permute.xlu0 %1864
    %1866 = vset.pattern.permute.xlu0 11
    %1867 = vperm.xlu0 %1866, %v1686
    %v1868 = vpop.permute.xlu0 %1867
    %vm1869 = vcmp.eq.s32.totalorder %v1865, 1
    %vm1870 = vcmp.eq.s32.totalorder %v1868, 1
    %v1871 = vlaneseq
    %v1872 = vshrl.u32 %v1871, 7
    %v1873 = vsub.s32 3, %v1872
    %v1874 = vrot.slane %v1652, %v1873
    %v1875 = vsel %vm1869, %v1874, -1e+30
    %v1876 = vsel %vm1870, %v1874, -1e+30
    %v1877 = vmax.f32 %v1861, %v1875
    %v1878 = vmax.f32 %v1862, %v1876
    %1879 = vset.pattern.permute.xlu0 12
    %1880 = vperm.xlu0 %1879, %v1685
    %v1881 = vpop.permute.xlu0 %1880
    %1882 = vset.pattern.permute.xlu0 12
    %1883 = vperm.xlu0 %1882, %v1686
    %v1884 = vpop.permute.xlu0 %1883
    %vm1885 = vcmp.eq.s32.totalorder %v1881, 1
    %vm1886 = vcmp.eq.s32.totalorder %v1884, 1
    %v1887 = vlaneseq
    %v1888 = vshrl.u32 %v1887, 7
    %v1889 = vsub.s32 4, %v1888
    %v1890 = vrot.slane %v1652, %v1889
    %v1891 = vsel %vm1885, %v1890, -1e+30
    %v1892 = vsel %vm1886, %v1890, -1e+30
    %v1893 = vmax.f32 %v1877, %v1891
    %v1894 = vmax.f32 %v1878, %v1892
    %1895 = vset.pattern.permute.xlu0 13
    %1896 = vperm.xlu0 %1895, %v1685
    %v1897 = vpop.permute.xlu0 %1896
    %1898 = vset.pattern.permute.xlu0 13
    %1899 = vperm.xlu0 %1898, %v1686
    %v1900 = vpop.permute.xlu0 %1899
    %vm1901 = vcmp.eq.s32.totalorder %v1897, 1
    %vm1902 = vcmp.eq.s32.totalorder %v1900, 1
    %v1903 = vlaneseq
    %v1904 = vshrl.u32 %v1903, 7
    %v1905 = vsub.s32 5, %v1904
    %v1906 = vrot.slane %v1652, %v1905
    %v1907 = vsel %vm1901, %v1906, -1e+30
    %v1908 = vsel %vm1902, %v1906, -1e+30
    %v1909 = vmax.f32 %v1893, %v1907
    %v1910 = vmax.f32 %v1894, %v1908
    %1911 = vset.pattern.permute.xlu0 14
    %1912 = vperm.xlu0 %1911, %v1685
    %v1913 = vpop.permute.xlu0 %1912
    %1914 = vset.pattern.permute.xlu0 14
    %1915 = vperm.xlu0 %1914, %v1686
    %v1916 = vpop.permute.xlu0 %1915
    %vm1917 = vcmp.eq.s32.totalorder %v1913, 1
    %vm1918 = vcmp.eq.s32.totalorder %v1916, 1
    %v1919 = vlaneseq
    %v1920 = vshrl.u32 %v1919, 7
    %v1921 = vsub.s32 6, %v1920
    %v1922 = vrot.slane %v1652, %v1921
    %v1923 = vsel %vm1917, %v1922, -1e+30
    %v1924 = vsel %vm1918, %v1922, -1e+30
    %v1925 = vmax.f32 %v1909, %v1923
    %v1926 = vmax.f32 %v1910, %v1924
    %1927 = vset.pattern.permute.xlu0 15
    %1928 = vperm.xlu0 %1927, %v1685
    %v1929 = vpop.permute.xlu0 %1928
    %1930 = vset.pattern.permute.xlu0 15
    %1931 = vperm.xlu0 %1930, %v1686
    %v1932 = vpop.permute.xlu0 %1931
    %vm1933 = vcmp.eq.s32.totalorder %v1929, 1
    %vm1934 = vcmp.eq.s32.totalorder %v1932, 1
    %v1935 = vlaneseq
    %v1936 = vshrl.u32 %v1935, 7
    %v1937 = vsub.s32 7, %v1936
    %v1938 = vrot.slane %v1652, %v1937
    %v1939 = vsel %vm1933, %v1938, -1e+30
    %v1940 = vsel %vm1934, %v1938, -1e+30
    %v1941 = vmax.f32 %v1925, %v1939
    %v1942 = vmax.f32 %v1926, %v1940
    %vm1943 = vcmp.gt.f32.partialorder %v1679, 0.0
    %vm1944 = vcmp.gt.f32.partialorder %v1682, 0.0
    %v1945 = vsel %vm1943, 1, 0
    %v1946 = vsel %vm1944, 1, 0
    %vm1947 = vcmp.eq.s32.totalorder %v1945, 1
    %vm1948 = vcmp.eq.s32.totalorder %v1946, 1
    %v1949 = vsel %vm1947, %v1941, 0.0
    %v1950 = vsel %vm1948, %v1942, 0.0
    %v1951 = vld [vmem:[%s2 + $0x100] sm:$0xff]
    %v1952 = vld [vmem:[%s2 + $0x108] sm:$0xff]
    %v1953 = vld [vmem:[%s2 + $0x110] sm:$0xff]
    %v1954 = vld [vmem:[%s2 + $0x118] sm:$0xff]
    %v1955 = vld [vmem:[%s2 + $0x120] sm:$0x1]
    %v1956 = vlaneseq
    %v1957 = vshrl.u32 %v1956, 7
    %v1958 = vsub.s32 0, %v1957
    %v1959 = vrot.slane %v1955, %v1958
    %v1961 = vsel %vm1388, %v1949, 0
    %v1964 = vsel %vm1388, %v1950, 0
    %1966 = vmatprep.subr.mxu0 0.0
    %1967 = vmatpush1.msra.mxu0 %v1951
    %1968 = vmatprep.subr.mxu0 0.0
    %1969 = vmatpush1.msra.mxu0 %v1952
    %1970 = vmatprep.subr.mxu0 0.0
    %1971 = vmatpush1.msra.mxu0 %v1953
    %1972 = vmatprep.subr.mxu0 0.0
    %1973 = vmatpush1.msra.mxu0 %v1954
    %1974 = vmatprep.subr.mxu0 0.0
    %1975 = vmatpush1.msra.mxu0 0.0
    %1976 = vmatprep.subr.mxu0 0.0
    %1977 = vmatpush1.msra.mxu0 0.0
    %1978 = vmatprep.subr.mxu0 0.0
    %1979 = vmatpush1.msra.mxu0 0.0
    %1980 = vmatprep.subr.mxu0 0.0
    %1981 = vmatpush1.msra.mxu0 0.0
    %1982 = vmatprep.subr.mxu0 0.0
    %1983 = vmatpush1.msra.mxu0 0.0
    %1984 = vmatprep.subr.mxu0 0.0
    %1985 = vmatpush1.msra.mxu0 0.0
    %1986 = vmatprep.subr.mxu0 0.0
    %1987 = vmatpush1.msra.mxu0 0.0
    %1988 = vmatprep.subr.mxu0 0.0
    %1989 = vmatpush1.msra.mxu0 0.0
    %1990 = vmatprep.subr.mxu0 0.0
    %1991 = vmatpush1.msra.mxu0 0.0
    %1992 = vmatprep.subr.mxu0 0.0
    %1993 = vmatpush1.msra.mxu0 0.0
    %1994 = vmatprep.subr.mxu0 0.0
    %1995 = vmatpush1.msra.mxu0 0.0
    %1996 = vmatprep.subr.mxu0 0.0
    %1997 = vmatpush1.msra.mxu0 0.0
    %1998 = vmatprep.subr.mxu0 0.0
    %1999 = vmatpush1.msra.mxu0 0.0
    %2000 = vmatprep.subr.mxu0 0.0
    %2001 = vmatpush1.msra.mxu0 0.0
    %2002 = vmatprep.subr.mxu0 0.0
    %2003 = vmatpush1.msra.mxu0 0.0
    %2004 = vmatprep.subr.mxu0 0.0
    %2005 = vmatpush1.msra.mxu0 0.0
    %2006 = vmatprep.subr.mxu0 0.0
    %2007 = vmatpush1.msra.mxu0 0.0
    %2008 = vmatprep.subr.mxu0 0.0
    %2009 = vmatpush1.msra.mxu0 0.0
    %2010 = vmatprep.subr.mxu0 0.0
    %2011 = vmatpush1.msra.mxu0 0.0
    %2012 = vmatprep.subr.mxu0 0.0
    %2013 = vmatpush1.msra.mxu0 0.0
    %2014 = vmatprep.subr.mxu0 0.0
    %2015 = vmatpush1.msra.mxu0 0.0
    %2016 = vmatprep.subr.mxu0 0.0
    %2017 = vmatpush1.msra.mxu0 0.0
    %2018 = vmatprep.subr.mxu0 0.0
    %2019 = vmatpush1.msra.mxu0 0.0
    %2020 = vmatprep.subr.mxu0 0.0
    %2021 = vmatpush1.msra.mxu0 0.0
    %2022 = vmatprep.subr.mxu0 0.0
    %2023 = vmatpush1.msra.mxu0 0.0
    %2024 = vmatprep.subr.mxu0 0.0
    %2025 = vmatpush1.msra.mxu0 0.0
    %2026 = vmatprep.subr.mxu0 0.0
    %2027 = vmatpush1.msra.mxu0 0.0
    %2028 = vmatprep.subr.mxu0 0.0
    %2029 = vmatpush1.msra.mxu0 0.0
    %2030 = vmatprep.mubr.f32.mxu0 0.0
    %2031 = vmatmul.mubr.f32.gmra.mrb[0].mxu0 %v1961
    %v2032 = vpop.f32.mrb[0].mxu0
    %v2033 = vadd.f32 %v1959, %v2032
    %v2034 = vpop.f32.mrb[0].mxu0
    %2035 = vmatprep.mubr.f32.mxu0 0.0
    %2036 = vmatmul.mubr.f32.gmra.mrb[0].mxu0 %v1964
    %v2037 = vpop.f32.mrb[0].mxu0
    %v2038 = vadd.f32 %v1959, %v2037
    %v2039 = vpop.f32.mrb[0].mxu0
    %2040 = vdwg.mxu0
    %v2041 = vld [vmem:[%s2 + $0x128] sm:$0xff]
    %v2042 = vld [vmem:[%s2 + $0x130] sm:$0xff]
    %v2043 = vld [vmem:[%s2 + $0x138] sm:$0xff]
    %v2044 = vld [vmem:[%s2 + $0x140] sm:$0xff]
    %v2045 = vld [vmem:[%s2 + $0x168] sm:$0x1]
    %v2046 = vlaneseq
    %v2047 = vshrl.u32 %v2046, 7
    %v2048 = vsub.s32 0, %v2047
    %v2049 = vrot.slane %v2045, %v2048
    %v2051 = vsel %vm1388, %v2033, 0
    %v2054 = vsel %vm1388, %v2038, 0
    %2056 = vmatprep.subr.mxu0 0.0
    %2057 = vmatpush1.msra.mxu0 %v2041
    %2058 = vmatprep.subr.mxu0 0.0
    %2059 = vmatpush1.msra.mxu0 %v2042
    %2060 = vmatprep.subr.mxu0 0.0
    %2061 = vmatpush1.msra.mxu0 %v2043
    %2062 = vmatprep.subr.mxu0 0.0
    %2063 = vmatpush1.msra.mxu0 %v2044
    %2064 = vmatprep.subr.mxu0 0.0
    %2065 = vmatpush1.msra.mxu0 0.0
    %2066 = vmatprep.subr.mxu0 0.0
    %2067 = vmatpush1.msra.mxu0 0.0
    %2068 = vmatprep.subr.mxu0 0.0
    %2069 = vmatpush1.msra.mxu0 0.0
    %2070 = vmatprep.subr.mxu0 0.0
    %2071 = vmatpush1.msra.mxu0 0.0
    %2072 = vmatprep.subr.mxu0 0.0
    %2073 = vmatpush1.msra.mxu0 0.0
    %2074 = vmatprep.subr.mxu0 0.0
    %2075 = vmatpush1.msra.mxu0 0.0
    %2076 = vmatprep.subr.mxu0 0.0
    %2077 = vmatpush1.msra.mxu0 0.0
    %2078 = vmatprep.subr.mxu0 0.0
    %2079 = vmatpush1.msra.mxu0 0.0
    %2080 = vmatprep.subr.mxu0 0.0
    %2081 = vmatpush1.msra.mxu0 0.0
    %2082 = vmatprep.subr.mxu0 0.0
    %2083 = vmatpush1.msra.mxu0 0.0
    %2084 = vmatprep.subr.mxu0 0.0
    %2085 = vmatpush1.msra.mxu0 0.0
    %2086 = vmatprep.subr.mxu0 0.0
    %2087 = vmatpush1.msra.mxu0 0.0
    %2088 = vmatprep.subr.mxu0 0.0
    %2089 = vmatpush1.msra.mxu0 0.0
    %2090 = vmatprep.subr.mxu0 0.0
    %2091 = vmatpush1.msra.mxu0 0.0
    %2092 = vmatprep.subr.mxu0 0.0
    %2093 = vmatpush1.msra.mxu0 0.0
    %2094 = vmatprep.subr.mxu0 0.0
    %2095 = vmatpush1.msra.mxu0 0.0
    %2096 = vmatprep.subr.mxu0 0.0
    %2097 = vmatpush1.msra.mxu0 0.0
    %2098 = vmatprep.subr.mxu0 0.0
    %2099 = vmatpush1.msra.mxu0 0.0
    %2100 = vmatprep.subr.mxu0 0.0
    %2101 = vmatpush1.msra.mxu0 0.0
    %2102 = vmatprep.subr.mxu0 0.0
    %2103 = vmatpush1.msra.mxu0 0.0
    %2104 = vmatprep.subr.mxu0 0.0
    %2105 = vmatpush1.msra.mxu0 0.0
    %2106 = vmatprep.subr.mxu0 0.0
    %2107 = vmatpush1.msra.mxu0 0.0
    %2108 = vmatprep.subr.mxu0 0.0
    %2109 = vmatpush1.msra.mxu0 0.0
    %2110 = vmatprep.subr.mxu0 0.0
    %2111 = vmatpush1.msra.mxu0 0.0
    %2112 = vmatprep.subr.mxu0 0.0
    %2113 = vmatpush1.msra.mxu0 0.0
    %2114 = vmatprep.subr.mxu0 0.0
    %2115 = vmatpush1.msra.mxu0 0.0
    %2116 = vmatprep.subr.mxu0 0.0
    %2117 = vmatpush1.msra.mxu0 0.0
    %2118 = vmatprep.subr.mxu0 0.0
    %2119 = vmatpush1.msra.mxu0 0.0
    %2120 = vmatprep.mubr.f32.mxu0 0.0
    %2121 = vmatmul.mubr.f32.gmra.mrb[0].mxu0 %v2051
    %v2122 = vpop.f32.mrb[0].mxu0
    %v2123 = vadd.f32 %v2049, %v2122
    %v2124 = vpop.f32.mrb[0].mxu0
    %2125 = vmatprep.mubr.f32.mxu0 0.0
    %2126 = vmatmul.mubr.f32.gmra.mrb[0].mxu0 %v2054
    %v2127 = vpop.f32.mrb[0].mxu0
    %v2128 = vadd.f32 %v2049, %v2127
    %v2129 = vpop.f32.mrb[0].mxu0
    %2130 = vdwg.mxu0
    %v2131 = vld [vmem:[%s2 + $0x148] sm:$0xff]
    %v2132 = vld [vmem:[%s2 + $0x150] sm:$0xff]
    %v2133 = vld [vmem:[%s2 + $0x158] sm:$0xff]
    %v2134 = vld [vmem:[%s2 + $0x160] sm:$0xff]
    %v2136 = vsel %vm1388, %v1651, 0
    %v2139 = vsel %vm1388, %v1652, 0
    %2141 = vmatprep.subr.mxu0 0.0
    %2142 = vmatpush1.msra.mxu0 %v2131
    %2143 = vmatprep.subr.mxu0 0.0
    %2144 = vmatpush1.msra.mxu0 %v2132
    %2145 = vmatprep.subr.mxu0 0.0
    %2146 = vmatpush1.msra.mxu0 %v2133
    %2147 = vmatprep.subr.mxu0 0.0
    %2148 = vmatpush1.msra.mxu0 %v2134
    %2149 = vmatprep.subr.mxu0 0.0
    %2150 = vmatpush1.msra.mxu0 0.0
    %2151 = vmatprep.subr.mxu0 0.0
    %2152 = vmatpush1.msra.mxu0 0.0
    %2153 = vmatprep.subr.mxu0 0.0
    %2154 = vmatpush1.msra.mxu0 0.0
    %2155 = vmatprep.subr.mxu0 0.0
    %2156 = vmatpush1.msra.mxu0 0.0
    %2157 = vmatprep.subr.mxu0 0.0
    %2158 = vmatpush1.msra.mxu0 0.0
    %2159 = vmatprep.subr.mxu0 0.0
    %2160 = vmatpush1.msra.mxu0 0.0
    %2161 = vmatprep.subr.mxu0 0.0
    %2162 = vmatpush1.msra.mxu0 0.0
    %2163 = vmatprep.subr.mxu0 0.0
    %2164 = vmatpush1.msra.mxu0 0.0
    %2165 = vmatprep.subr.mxu0 0.0
    %2166 = vmatpush1.msra.mxu0 0.0
    %2167 = vmatprep.subr.mxu0 0.0
    %2168 = vmatpush1.msra.mxu0 0.0
    %2169 = vmatprep.subr.mxu0 0.0
    %2170 = vmatpush1.msra.mxu0 0.0
    %2171 = vmatprep.subr.mxu0 0.0
    %2172 = vmatpush1.msra.mxu0 0.0
    %2173 = vmatprep.subr.mxu0 0.0
    %2174 = vmatpush1.msra.mxu0 0.0
    %2175 = vmatprep.subr.mxu0 0.0
    %2176 = vmatpush1.msra.mxu0 0.0
    %2177 = vmatprep.subr.mxu0 0.0
    %2178 = vmatpush1.msra.mxu0 0.0
    %2179 = vmatprep.subr.mxu0 0.0
    %2180 = vmatpush1.msra.mxu0 0.0
    %2181 = vmatprep.subr.mxu0 0.0
    %2182 = vmatpush1.msra.mxu0 0.0
    %2183 = vmatprep.subr.mxu0 0.0
    %2184 = vmatpush1.msra.mxu0 0.0
    %2185 = vmatprep.subr.mxu0 0.0
    %2186 = vmatpush1.msra.mxu0 0.0
    %2187 = vmatprep.subr.mxu0 0.0
    %2188 = vmatpush1.msra.mxu0 0.0
    %2189 = vmatprep.subr.mxu0 0.0
    %2190 = vmatpush1.msra.mxu0 0.0
    %2191 = vmatprep.subr.mxu0 0.0
    %2192 = vmatpush1.msra.mxu0 0.0
    %2193 = vmatprep.subr.mxu0 0.0
    %2194 = vmatpush1.msra.mxu0 0.0
    %2195 = vmatprep.subr.mxu0 0.0
    %2196 = vmatpush1.msra.mxu0 0.0
    %2197 = vmatprep.subr.mxu0 0.0
    %2198 = vmatpush1.msra.mxu0 0.0
    %2199 = vmatprep.subr.mxu0 0.0
    %2200 = vmatpush1.msra.mxu0 0.0
    %2201 = vmatprep.subr.mxu0 0.0
    %2202 = vmatpush1.msra.mxu0 0.0
    %2203 = vmatprep.subr.mxu0 0.0
    %2204 = vmatpush1.msra.mxu0 0.0
    %2205 = vmatprep.mubr.f32.mxu0 0.0
    %2206 = vmatmul.mubr.f32.gmra.mrb[0].mxu0 %v2136
    %v2207 = vpop.f32.mrb[0].mxu0
    %v2208 = vadd.f32 0.0, %v2207
    %v2209 = vpop.f32.mrb[0].mxu0
    %2210 = vmatprep.mubr.f32.mxu0 0.0
    %2211 = vmatmul.mubr.f32.gmra.mrb[0].mxu0 %v2139
    %v2212 = vpop.f32.mrb[0].mxu0
    %v2213 = vadd.f32 0.0, %v2212
    %v2214 = vpop.f32.mrb[0].mxu0
    %2215 = vdwg.mxu0
    %2217 = vset.pattern.permute.xlu0 0
    %2218 = vperm.xlu0 %2217, %v2208
    %v2219 = vpop.permute.xlu0 %2218
    %2222 = vset.pattern.permute.xlu0 0
    %2223 = vperm.xlu0 %2222, %v2213
    %v2224 = vpop.permute.xlu0 %2223
    %v2226 = vmul.f32 %v2219, %v24
    %v2227 = vmul.f32 %v2224, %v25
    %v2228 = vsel %vm36, %v2226, 0.0
    %v2229 = vsel %vm36, %v2227, 0.0
    %v2230 = vadd.f32 %v2228, %v2229
    %v2231 = vrot.slane %v2230, 4
    %v2232 = vadd.f32 %v2230, %v2231
    %v2233 = vrot.slane %v2232, 2
    %v2234 = vadd.f32 %v2232, %v2233
    %v2235 = vrot.slane %v2234, 1
    %v2236 = vadd.f32 %v2234, %v2235
    %2238 = vset.pattern.permute.xlu0 0
    %2239 = vperm.xlu0 %2238, %v2123
    %v2240 = vpop.permute.xlu0 %2239
    %2243 = vset.pattern.permute.xlu0 0
    %2244 = vperm.xlu0 %2243, %v2128
    %v2245 = vpop.permute.xlu0 %2244
    %v2247 = vadd.f32 %v2240, %v2236
    %v2248 = vadd.f32 %v2245, %v2236
    %vm2249 = vcmp.ge.f32.partialorder %v2247, 0.0
    %vm2250 = vcmp.ge.f32.partialorder %v2248, 0.0
    %v2251 = vmul.f32 %v2247, 0.2
    %v2252 = vmul.f32 %v2248, 0.2
    %v2253 = vsel %vm2249, %v2247, %v2251
    %v2254 = vsel %vm2250, %v2248, %v2252
    %v2255 = vsel %vm1683, %v2253, -1e+30
    %v2256 = vsel %vm1684, %v2254, -1e+30
    %v2257 = vsel %vm36, %v2255, -inf
    %2258 = vmax.xlane.f32.xlu0 %v2257
    %v2259 = vpop.xlane.xlu0 %2258
    %v2260 = vsel %vm36, %v2256, -inf
    %2261 = vmax.xlane.f32.xlu0 %v2260
    %v2262 = vpop.xlane.xlu0 %2261
    %v2263 = vsub.f32 %v2255, %v2259
    %v2264 = vsub.f32 %v2256, %v2262
    %v2265 = vmul.f32 %v2263, 1.442695
    %v2266 = vpow.pop %v2265
    %v2267 = vmul.f32 %v2264, 1.442695
    %v2268 = vpow.pop %v2267
    %v2269 = vmul.f32 %v2266, %v1675
    %v2270 = vmul.f32 %v2268, %v1676
    %v2271 = vsel %vm36, %v2269, 0.0
    %2272 = vadd.xlane.f32.xlu0 %v2271
    %v2273 = vpop.xlane.xlu0 %2272
    %v2274 = vsel %vm36, %v2270, 0.0
    %2275 = vadd.xlane.f32.xlu0 %v2274
    %v2276 = vpop.xlane.xlu0 %2275
    %v2277 = vadd.f32 %v2273, 1e-16
    %v2278 = vadd.f32 %v2276, 1e-16
    %v2279 = vrcp.pop %v2277
    %v2280 = vrcp.pop %v2278
    %v2281 = vmul.f32 %v2269, %v2279
    %v2282 = vmul.f32 %v2270, %v2280
    %v2284 = vsel %vm36, %v2281, 0
    %v2287 = vsel %vm36, %v2282, 0
    %2289 = vmatprep.subr.mxu0 0.0
    %2290 = vmatpush1.msra.mxu0 %v1651
    %2291 = vmatprep.subr.mxu0 0.0
    %2292 = vmatpush1.msra.mxu0 %v1652
    %2293 = vmatprep.subr.mxu0 0.0
    %2294 = vmatpush1.msra.mxu0 0.0
    %2295 = vmatprep.subr.mxu0 0.0
    %2296 = vmatpush1.msra.mxu0 0.0
    %2297 = vmatprep.subr.mxu0 0.0
    %2298 = vmatpush1.msra.mxu0 0.0
    %2299 = vmatprep.subr.mxu0 0.0
    %2300 = vmatpush1.msra.mxu0 0.0
    %2301 = vmatprep.subr.mxu0 0.0
    %2302 = vmatpush1.msra.mxu0 0.0
    %2303 = vmatprep.subr.mxu0 0.0
    %2304 = vmatpush1.msra.mxu0 0.0
    %2305 = vmatprep.subr.mxu0 0.0
    %2306 = vmatpush1.msra.mxu0 0.0
    %2307 = vmatprep.subr.mxu0 0.0
    %2308 = vmatpush1.msra.mxu0 0.0
    %2309 = vmatprep.subr.mxu0 0.0
    %2310 = vmatpush1.msra.mxu0 0.0
    %2311 = vmatprep.subr.mxu0 0.0
    %2312 = vmatpush1.msra.mxu0 0.0
    %2313 = vmatprep.subr.mxu0 0.0
    %2314 = vmatpush1.msra.mxu0 0.0
    %2315 = vmatprep.subr.mxu0 0.0
    %2316 = vmatpush1.msra.mxu0 0.0
    %2317 = vmatprep.subr.mxu0 0.0
    %2318 = vmatpush1.msra.mxu0 0.0
    %2319 = vmatprep.subr.mxu0 0.0
    %2320 = vmatpush1.msra.mxu0 0.0
    %2321 = vmatprep.subr.mxu0 0.0
    %2322 = vmatpush1.msra.mxu0 0.0
    %2323 = vmatprep.subr.mxu0 0.0
    %2324 = vmatpush1.msra.mxu0 0.0
    %2325 = vmatprep.subr.mxu0 0.0
    %2326 = vmatpush1.msra.mxu0 0.0
    %2327 = vmatprep.subr.mxu0 0.0
    %2328 = vmatpush1.msra.mxu0 0.0
    %2329 = vmatprep.subr.mxu0 0.0
    %2330 = vmatpush1.msra.mxu0 0.0
    %2331 = vmatprep.subr.mxu0 0.0
    %2332 = vmatpush1.msra.mxu0 0.0
    %2333 = vmatprep.subr.mxu0 0.0
    %2334 = vmatpush1.msra.mxu0 0.0
    %2335 = vmatprep.subr.mxu0 0.0
    %2336 = vmatpush1.msra.mxu0 0.0
    %2337 = vmatprep.subr.mxu0 0.0
    %2338 = vmatpush1.msra.mxu0 0.0
    %2339 = vmatprep.subr.mxu0 0.0
    %2340 = vmatpush1.msra.mxu0 0.0
    %2341 = vmatprep.subr.mxu0 0.0
    %2342 = vmatpush1.msra.mxu0 0.0
    %2343 = vmatprep.subr.mxu0 0.0
    %2344 = vmatpush1.msra.mxu0 0.0
    %2345 = vmatprep.subr.mxu0 0.0
    %2346 = vmatpush1.msra.mxu0 0.0
    %2347 = vmatprep.subr.mxu0 0.0
    %2348 = vmatpush1.msra.mxu0 0.0
    %2349 = vmatprep.subr.mxu0 0.0
    %2350 = vmatpush1.msra.mxu0 0.0
    %2351 = vmatprep.subr.mxu0 0.0
    %2352 = vmatpush1.msra.mxu0 0.0
    %2353 = vmatprep.mubr.f32.mxu0 0.0
    %2354 = vmatmul.mubr.f32.gmra.mrb[0].mxu0 %v2284
    %v2355 = vpop.f32.mrb[0].mxu0
    %v2356 = vadd.f32 0.0, %v2355
    %v2357 = vpop.f32.mrb[0].mxu0
    %2358 = vmatprep.mubr.f32.mxu0 0.0
    %2359 = vmatmul.mubr.f32.gmra.mrb[0].mxu0 %v2287
    %v2360 = vpop.f32.mrb[0].mxu0
    %v2361 = vadd.f32 0.0, %v2360
    %v2362 = vpop.f32.mrb[0].mxu0
    %2363 = vdwg.mxu0
    %v2364 = vld [vmem:[%s2 + $0x170] sm:$0xff]
    %v2365 = vld [vmem:[%s2 + $0x178] sm:$0xff]
    %v2366 = vld [vmem:[%s2 + $0x180] sm:$0xff]
    %v2367 = vld [vmem:[%s2 + $0x188] sm:$0xff]
    %v2369 = vsel %vm1388, %v2356, 0
    %v2372 = vsel %vm1388, %v2361, 0
    %2374 = vmatprep.subr.mxu0 0.0
    %2375 = vmatpush1.msra.mxu0 %v2364
    %2376 = vmatprep.subr.mxu0 0.0
    %2377 = vmatpush1.msra.mxu0 %v2365
    %2378 = vmatprep.subr.mxu0 0.0
    %2379 = vmatpush1.msra.mxu0 %v2366
    %2380 = vmatprep.subr.mxu0 0.0
    %2381 = vmatpush1.msra.mxu0 %v2367
    %2382 = vmatprep.subr.mxu0 0.0
    %2383 = vmatpush1.msra.mxu0 0.0
    %2384 = vmatprep.subr.mxu0 0.0
    %2385 = vmatpush1.msra.mxu0 0.0
    %2386 = vmatprep.subr.mxu0 0.0
    %2387 = vmatpush1.msra.mxu0 0.0
    %2388 = vmatprep.subr.mxu0 0.0
    %2389 = vmatpush1.msra.mxu0 0.0
    %2390 = vmatprep.subr.mxu0 0.0
    %2391 = vmatpush1.msra.mxu0 0.0
    %2392 = vmatprep.subr.mxu0 0.0
    %2393 = vmatpush1.msra.mxu0 0.0
    %2394 = vmatprep.subr.mxu0 0.0
    %2395 = vmatpush1.msra.mxu0 0.0
    %2396 = vmatprep.subr.mxu0 0.0
    %2397 = vmatpush1.msra.mxu0 0.0
    %2398 = vmatprep.subr.mxu0 0.0
    %2399 = vmatpush1.msra.mxu0 0.0
    %2400 = vmatprep.subr.mxu0 0.0
    %2401 = vmatpush1.msra.mxu0 0.0
    %2402 = vmatprep.subr.mxu0 0.0
    %2403 = vmatpush1.msra.mxu0 0.0
    %2404 = vmatprep.subr.mxu0 0.0
    %2405 = vmatpush1.msra.mxu0 0.0
    %2406 = vmatprep.subr.mxu0 0.0
    %2407 = vmatpush1.msra.mxu0 0.0
    %2408 = vmatprep.subr.mxu0 0.0
    %2409 = vmatpush1.msra.mxu0 0.0
    %2410 = vmatprep.subr.mxu0 0.0
    %2411 = vmatpush1.msra.mxu0 0.0
    %2412 = vmatprep.subr.mxu0 0.0
    %2413 = vmatpush1.msra.mxu0 0.0
    %2414 = vmatprep.subr.mxu0 0.0
    %2415 = vmatpush1.msra.mxu0 0.0
    %2416 = vmatprep.subr.mxu0 0.0
    %2417 = vmatpush1.msra.mxu0 0.0
    %2418 = vmatprep.subr.mxu0 0.0
    %2419 = vmatpush1.msra.mxu0 0.0
    %2420 = vmatprep.subr.mxu0 0.0
    %2421 = vmatpush1.msra.mxu0 0.0
    %2422 = vmatprep.subr.mxu0 0.0
    %2423 = vmatpush1.msra.mxu0 0.0
    %2424 = vmatprep.subr.mxu0 0.0
    %2425 = vmatpush1.msra.mxu0 0.0
    %2426 = vmatprep.subr.mxu0 0.0
    %2427 = vmatpush1.msra.mxu0 0.0
    %2428 = vmatprep.subr.mxu0 0.0
    %2429 = vmatpush1.msra.mxu0 0.0
    %2430 = vmatprep.subr.mxu0 0.0
    %2431 = vmatpush1.msra.mxu0 0.0
    %2432 = vmatprep.subr.mxu0 0.0
    %2433 = vmatpush1.msra.mxu0 0.0
    %2434 = vmatprep.subr.mxu0 0.0
    %2435 = vmatpush1.msra.mxu0 0.0
    %2436 = vmatprep.subr.mxu0 0.0
    %2437 = vmatpush1.msra.mxu0 0.0
    %2438 = vmatprep.mubr.f32.mxu0 0.0
    %2439 = vmatmul.mubr.f32.gmra.mrb[0].mxu0 %v2369
    %v2440 = vpop.f32.mrb[0].mxu0
    %v2441 = vadd.f32 0.0, %v2440
    %v2442 = vpop.f32.mrb[0].mxu0
    %2443 = vmatprep.mubr.f32.mxu0 0.0
    %2444 = vmatmul.mubr.f32.gmra.mrb[0].mxu0 %v2372
    %v2445 = vpop.f32.mrb[0].mxu0
    %v2446 = vadd.f32 0.0, %v2445
    %v2447 = vpop.f32.mrb[0].mxu0
    %2448 = vdwg.mxu0
    %v2449 = vld [vmem:[%s2 + $0x190] sm:$0x1]
    %v2450 = vlaneseq
    %v2451 = vshrl.u32 %v2450, 7
    %v2452 = vsub.s32 0, %v2451
    %v2453 = vrot.slane %v2449, %v2452
    %v2454 = vadd.f32 %v2441, %v2453
    %v2455 = vadd.f32 %v2446, %v2453
    %2457 = vrot.lane.b32.xlu0 %v2453, 1
    %v2458 = vpop.permute.xlu0 %2457
    %v2460 = vadd.f32 %v2441, %v2458
    %v2461 = vadd.f32 %v2446, %v2458
    %v2463 = vsel %vm36, %v1675, 0
    %v2466 = vsel %vm36, %v1676, 0
    %2468 = vmatprep.subr.mxu0 0.0
    %2469 = vmatpush1.msra.mxu0 %v2454
    %2470 = vmatprep.subr.mxu0 0.0
    %2471 = vmatpush1.msra.mxu0 %v2455
    %2472 = vmatprep.subr.mxu0 0.0
    %2473 = vmatpush1.msra.mxu0 0.0
    %2474 = vmatprep.subr.mxu0 0.0
    %2475 = vmatpush1.msra.mxu0 0.0
    %2476 = vmatprep.subr.mxu0 0.0
    %2477 = vmatpush1.msra.mxu0 0.0
    %2478 = vmatprep.subr.mxu0 0.0
    %2479 = vmatpush1.msra.mxu0 0.0
    %2480 = vmatprep.subr.mxu0 0.0
    %2481 = vmatpush1.msra.mxu0 0.0
    %2482 = vmatprep.subr.mxu0 0.0
    %2483 = vmatpush1.msra.mxu0 0.0
    %2484 = vmatprep.subr.mxu0 0.0
    %2485 = vmatpush1.msra.mxu0 0.0
    %2486 = vmatprep.subr.mxu0 0.0
    %2487 = vmatpush1.msra.mxu0 0.0
    %2488 = vmatprep.subr.mxu0 0.0
    %2489 = vmatpush1.msra.mxu0 0.0
    %2490 = vmatprep.subr.mxu0 0.0
    %2491 = vmatpush1.msra.mxu0 0.0
    %2492 = vmatprep.subr.mxu0 0.0
    %2493 = vmatpush1.msra.mxu0 0.0
    %2494 = vmatprep.subr.mxu0 0.0
    %2495 = vmatpush1.msra.mxu0 0.0
    %2496 = vmatprep.subr.mxu0 0.0
    %2497 = vmatpush1.msra.mxu0 0.0
    %2498 = vmatprep.subr.mxu0 0.0
    %2499 = vmatpush1.msra.mxu0 0.0
    %2500 = vmatprep.subr.mxu0 0.0
    %2501 = vmatpush1.msra.mxu0 0.0
    %2502 = vmatprep.subr.mxu0 0.0
    %2503 = vmatpush1.msra.mxu0 0.0
    %2504 = vmatprep.subr.mxu0 0.0
    %2505 = vmatpush1.msra.mxu0 0.0
    %2506 = vmatprep.subr.mxu0 0.0
    %2507 = vmatpush1.msra.mxu0 0.0
    %2508 = vmatprep.subr.mxu0 0.0
    %2509 = vmatpush1.msra.mxu0 0.0
    %2510 = vmatprep.subr.mxu0 0.0
    %2511 = vmatpush1.msra.mxu0 0.0
    %2512 = vmatprep.subr.mxu0 0.0
    %2513 = vmatpush1.msra.mxu0 0.0
    %2514 = vmatprep.subr.mxu0 0.0
    %2515 = vmatpush1.msra.mxu0 0.0
    %2516 = vmatprep.subr.mxu0 0.0
    %2517 = vmatpush1.msra.mxu0 0.0
    %2518 = vmatprep.subr.mxu0 0.0
    %2519 = vmatpush1.msra.mxu0 0.0
    %2520 = vmatprep.subr.mxu0 0.0
    %2521 = vmatpush1.msra.mxu0 0.0
    %2522 = vmatprep.subr.mxu0 0.0
    %2523 = vmatpush1.msra.mxu0 0.0
    %2524 = vmatprep.subr.mxu0 0.0
    %2525 = vmatpush1.msra.mxu0 0.0
    %2526 = vmatprep.subr.mxu0 0.0
    %2527 = vmatpush1.msra.mxu0 0.0
    %2528 = vmatprep.subr.mxu0 0.0
    %2529 = vmatpush1.msra.mxu0 0.0
    %2530 = vmatprep.subr.mxu0 0.0
    %2531 = vmatpush1.msra.mxu0 0.0
    %2532 = vmatprep.mubr.f32.mxu0 0.0
    %2533 = vmatmul.mubr.f32.gmra.mrb[0].mxu0 %v2463
    %v2534 = vpop.f32.mrb[0].mxu0
    %v2535 = vadd.f32 0.0, %v2534
    %v2536 = vpop.f32.mrb[0].mxu0
    %2537 = vmatprep.mubr.f32.mxu0 0.0
    %2538 = vmatmul.mubr.f32.gmra.mrb[0].mxu0 %v2466
    %v2539 = vpop.f32.mrb[0].mxu0
    %v2540 = vadd.f32 0.0, %v2539
    %v2541 = vpop.f32.mrb[0].mxu0
    %2542 = vdwg.mxu0
    %v2543 = vmul.f32 %v1679, %v2441
    %v2544 = vmul.f32 %v1682, %v2446
    %2547 = vrot.lane.b32.xlu0 %v2543, 127
    %v2548 = vpop.permute.xlu0 %2547
    %2549 = vrot.lane.b32.xlu0 %v2544, 127
    %v2550 = vpop.permute.xlu0 %2549
    %v2553 = vsub.f32 %v2535, %v2548
    %v2554 = vsub.f32 %v2540, %v2550
    %2557 = vrot.lane.b32.xlu0 %v2460, 126
    %v2558 = vpop.permute.xlu0 %2557
    %2559 = vrot.lane.b32.xlu0 %v2461, 126
    %v2560 = vpop.permute.xlu0 %2559
    %v2563 = vadd.f32 %v2553, %v2558
    %v2564 = vadd.f32 %v2554, %v2560
    %v2565 = vsub.f32 0.0, %v2563
    %v2566 = vsub.f32 0.0, %v2564
    %v2567 = vmul.f32 %v2565, 1.442695
    %v2568 = vpow.pop %v2567
    %v2569 = vmul.f32 %v2566, 1.442695
    %v2570 = vpow.pop %v2569
    %v2571 = vadd.f32 %v2568, 1.0
    %v2572 = vadd.f32 %v2570, 1.0
    %v2573 = vrcp.pop %v2571
    %v2574 = vrcp.pop %v2572
    %vm2575 = vcmp.gt.f32.partialorder 1.0, 0.0
    %v2576 = vsel %vm2575, %v2573, -1.0
    %v2577 = vsel %vm2575, %v2574, -1.0
    %2579 = vset.pattern.permute.xlu0 0
    %2580 = vperm.xlu0 %2579, %v2576
    %v2581 = vpop.permute.xlu0 %2580
    %2584 = vset.pattern.permute.xlu0 0
    %2585 = vperm.xlu0 %2584, %v2577
    %v2586 = vpop.permute.xlu0 %2585
    %v2588 = vmul.f32 %v2581, %v24
    %v2589 = vmul.f32 %v2586, %v25
    %v2590 = vsel %vm36, %v2588, 0.0
    %v2591 = vsel %vm36, %v2589, 0.0
    %v2592 = vadd.f32 %v2590, %v2591
    %v2593 = vrot.slane %v2592, 4
    %v2594 = vadd.f32 %v2592, %v2593
    %v2595 = vrot.slane %v2594, 2
    %v2596 = vadd.f32 %v2594, %v2595
    %v2597 = vrot.slane %v2596, 1
    %v2598 = vadd.f32 %v2596, %v2597
    %vm2599 = vcmp.gt.f32.partialorder %v2598, %v2581
    %vm2600 = vcmp.gt.f32.partialorder %v2598, %v2586
    %v2601 = vsel %vm2599, 1, 0
    %v2602 = vsel %vm2600, 1, 0
    %v2603 = vcvt.s32.f32 %v2601
    %v2604 = vcvt.s32.f32 %v2602
    %vm2605 = vcmp.eq.f32.partialorder %v2598, %v2581
    %vm2606 = vcmp.eq.f32.partialorder %v2598, %v2586
    %vm2607 = vcmp.lt.s32.totalorder %v19, %v16
    %vm2608 = vcmp.lt.s32.totalorder %v19, %v17
    %vm2609 = vmand %vm2605, %vm2607
    %vm2610 = vmand %vm2606, %vm2608
    %v2611 = vsel %vm2609, 1, 0
    %v2612 = vsel %vm2610, 1, 0
    %v2613 = vcvt.s32.f32 %v2611
    %v2614 = vcvt.s32.f32 %v2612
    %v2615 = vadd.f32 %v2603, %v2613
    %v2616 = vadd.f32 %v2604, %v2614
    %v2617 = vsel %vm36, %v2615, 0.0
    %2618 = vadd.xlane.f32.xlu0 %v2617
    %v2619 = vpop.xlane.xlu0 %2618
    %v2620 = vsel %vm36, %v2616, 0.0
    %2621 = vadd.xlane.f32.xlu0 %v2620
    %v2622 = vpop.xlane.xlu0 %2621
    %v2623 = vadd.f32 %v2617, %v2620
    %v2624 = vrot.slane %v2623, 4
    %v2625 = vadd.f32 %v2623, %v2624
    %v2626 = vrot.slane %v2625, 2
    %v2627 = vadd.f32 %v2625, %v2626
    %v2628 = vrot.slane %v2627, 1
    %v2629 = vadd.f32 %v2627, %v2628
    %v2630 = vsub.f32 15.0, %v2629
    %vm2631 = vcmp.lt.f32.partialorder %v2619, 13.0
    %vm2632 = vcmp.lt.f32.partialorder %v2622, 13.0
    %v2633 = vsel %vm2631, 1, 0
    %v2634 = vsel %vm2632, 1, 0
    %v2635 = vcvt.s32.f32 %v2633
    %v2636 = vcvt.s32.f32 %v2634
    %vm2637 = vcmp.lt.f32.partialorder %v2630, 13.0
    %v2638 = vsel %vm2637, 1, 0
    %v2639 = vcvt.s32.f32 %v2638
    %2641 = vset.pattern.permute.xlu0 0
    %2642 = vperm.xlu0 %2641, %v2573
    %v2643 = vpop.permute.xlu0 %2642
    %2646 = vset.pattern.permute.xlu0 0
    %2647 = vperm.xlu0 %2646, %v2574
    %v2648 = vpop.permute.xlu0 %2647
    %v2650 = vmul.f32 %v2356, %v2643
    %v2651 = vmul.f32 %v2361, %v2648
    %v2652 = vmul.f32 %v2650, %v2635
    %v2653 = vmul.f32 %v2651, %v2636
    %v2655 = vsel %vm36, %v1669, 0
    %v2658 = vsel %vm36, %v1670, 0
    %2660 = vmatprep.subr.mxu0 0.0
    %2661 = vmatpush1.xpose.msra.mxu0 %v2284
    %2662 = vmatprep.subr.mxu0 0.0
    %2663 = vmatpush1.xpose.msra.mxu0 %v2287
    %2664 = vmatprep.subr.mxu0 0.0
    %2665 = vmatpush1.xpose.msra.mxu0 0.0
    %2666 = vmatprep.subr.mxu0 0.0
    %2667 = vmatpush1.xpose.msra.mxu0 0.0
    %2668 = vmatprep.subr.mxu0 0.0
    %2669 = vmatpush1.xpose.msra.mxu0 0.0
    %2670 = vmatprep.subr.mxu0 0.0
    %2671 = vmatpush1.xpose.msra.mxu0 0.0
    %2672 = vmatprep.subr.mxu0 0.0
    %2673 = vmatpush1.xpose.msra.mxu0 0.0
    %2674 = vmatprep.subr.mxu0 0.0
    %2675 = vmatpush1.xpose.msra.mxu0 0.0
    %2676 = vmatprep.subr.mxu0 0.0
    %2677 = vmatpush1.xpose.msra.mxu0 0.0
    %2678 = vmatprep.subr.mxu0 0.0
    %2679 = vmatpush1.xpose.msra.mxu0 0.0
    %2680 = vmatprep.subr.mxu0 0.0
    %2681 = vmatpush1.xpose.msra.mxu0 0.0
    %2682 = vmatprep.subr.mxu0 0.0
    %2683 = vmatpush1.xpose.msra.mxu0 0.0
    %2684 = vmatprep.subr.mxu0 0.0
    %2685 = vmatpush1.xpose.msra.mxu0 0.0
    %2686 = vmatprep.subr.mxu0 0.0
    %2687 = vmatpush1.xpose.msra.mxu0 0.0
    %2688 = vmatprep.subr.mxu0 0.0
    %2689 = vmatpush1.xpose.msra.mxu0 0.0
    %2690 = vmatprep.subr.mxu0 0.0
    %2691 = vmatpush1.xpose.msra.mxu0 0.0
    %2692 = vmatprep.subr.mxu0 0.0
    %2693 = vmatpush1.xpose.msra.mxu0 0.0
    %2694 = vmatprep.subr.mxu0 0.0
    %2695 = vmatpush1.xpose.msra.mxu0 0.0
    %2696 = vmatprep.subr.mxu0 0.0
    %2697 = vmatpush1.xpose.msra.mxu0 0.0
    %2698 = vmatprep.subr.mxu0 0.0
    %2699 = vmatpush1.xpose.msra.mxu0 0.0
    %2700 = vmatprep.subr.mxu0 0.0
    %2701 = vmatpush1.xpose.msra.mxu0 0.0
    %2702 = vmatprep.subr.mxu0 0.0
    %2703 = vmatpush1.xpose.msra.mxu0 0.0
    %2704 = vmatprep.subr.mxu0 0.0
    %2705 = vmatpush1.xpose.msra.mxu0 0.0
    %2706 = vmatprep.subr.mxu0 0.0
    %2707 = vmatpush1.xpose.msra.mxu0 0.0
    %2708 = vmatprep.subr.mxu0 0.0
    %2709 = vmatpush1.xpose.msra.mxu0 0.0
    %2710 = vmatprep.subr.mxu0 0.0
    %2711 = vmatpush1.xpose.msra.mxu0 0.0
    %2712 = vmatprep.subr.mxu0 0.0
    %2713 = vmatpush1.xpose.msra.mxu0 0.0
    %2714 = vmatprep.subr.mxu0 0.0
    %2715 = vmatpush1.xpose.msra.mxu0 0.0
    %2716 = vmatprep.subr.mxu0 0.0
    %2717 = vmatpush1.xpose.msra.mxu0 0.0
    %2718 = vmatprep.subr.mxu0 0.0
    %2719 = vmatpush1.xpose.msra.mxu0 0.0
    %2720 = vmatprep.subr.mxu0 0.0
    %2721 = vmatpush1.xpose.msra.mxu0 0.0
    %2722 = vmatprep.subr.mxu0 0.0
    %2723 = vmatpush1.xpose.msra.mxu0 0.0
    %2724 = vmatprep.mubr.f32.mxu0 0.0
    %2725 = vmatmul.mubr.f32.gmra.mrb[0].mxu0 %v2655
    %v2726 = vpop.f32.mrb[0].mxu0
    %v2727 = vadd.f32 0.0, %v2726
    %v2728 = vpop.f32.mrb[0].mxu0
    %2729 = vmatprep.mubr.f32.mxu0 0.0
    %2730 = vmatmul.mubr.f32.gmra.mrb[0].mxu0 %v2658
    %v2731 = vpop.f32.mrb[0].mxu0
    %v2732 = vadd.f32 0.0, %v2731
    %v2733 = vpop.f32.mrb[0].mxu0
    %2734 = vdwg.mxu0
    %2735 = vmatprep.subr.mxu0 0.0
    %2736 = vmatpush1.msra.mxu0 %v2727
    %2737 = vmatprep.subr.mxu0 0.0
    %2738 = vmatpush1.msra.mxu0 %v2732
    %2739 = vmatprep.subr.mxu0 0.0
    %2740 = vmatpush1.msra.mxu0 0.0
    %2741 = vmatprep.subr.mxu0 0.0
    %2742 = vmatpush1.msra.mxu0 0.0
    %2743 = vmatprep.subr.mxu0 0.0
    %2744 = vmatpush1.msra.mxu0 0.0
    %2745 = vmatprep.subr.mxu0 0.0
    %2746 = vmatpush1.msra.mxu0 0.0
    %2747 = vmatprep.subr.mxu0 0.0
    %2748 = vmatpush1.msra.mxu0 0.0
    %2749 = vmatprep.subr.mxu0 0.0
    %2750 = vmatpush1.msra.mxu0 0.0
    %2751 = vmatprep.subr.mxu0 0.0
    %2752 = vmatpush1.msra.mxu0 0.0
    %2753 = vmatprep.subr.mxu0 0.0
    %2754 = vmatpush1.msra.mxu0 0.0
    %2755 = vmatprep.subr.mxu0 0.0
    %2756 = vmatpush1.msra.mxu0 0.0
    %2757 = vmatprep.subr.mxu0 0.0
    %2758 = vmatpush1.msra.mxu0 0.0
    %2759 = vmatprep.subr.mxu0 0.0
    %2760 = vmatpush1.msra.mxu0 0.0
    %2761 = vmatprep.subr.mxu0 0.0
    %2762 = vmatpush1.msra.mxu0 0.0
    %2763 = vmatprep.subr.mxu0 0.0
    %2764 = vmatpush1.msra.mxu0 0.0
    %2765 = vmatprep.subr.mxu0 0.0
    %2766 = vmatpush1.msra.mxu0 0.0
    %2767 = vmatprep.subr.mxu0 0.0
    %2768 = vmatpush1.msra.mxu0 0.0
    %2769 = vmatprep.subr.mxu0 0.0
    %2770 = vmatpush1.msra.mxu0 0.0
    %2771 = vmatprep.subr.mxu0 0.0
    %2772 = vmatpush1.msra.mxu0 0.0
    %2773 = vmatprep.subr.mxu0 0.0
    %2774 = vmatpush1.msra.mxu0 0.0
    %2775 = vmatprep.subr.mxu0 0.0
    %2776 = vmatpush1.msra.mxu0 0.0
    %2777 = vmatprep.subr.mxu0 0.0
    %2778 = vmatpush1.msra.mxu0 0.0
    %2779 = vmatprep.subr.mxu0 0.0
    %2780 = vmatpush1.msra.mxu0 0.0
    %2781 = vmatprep.subr.mxu0 0.0
    %2782 = vmatpush1.msra.mxu0 0.0
    %2783 = vmatprep.subr.mxu0 0.0
    %2784 = vmatpush1.msra.mxu0 0.0
    %2785 = vmatprep.subr.mxu0 0.0
    %2786 = vmatpush1.msra.mxu0 0.0
    %2787 = vmatprep.subr.mxu0 0.0
    %2788 = vmatpush1.msra.mxu0 0.0
    %2789 = vmatprep.subr.mxu0 0.0
    %2790 = vmatpush1.msra.mxu0 0.0
    %2791 = vmatprep.subr.mxu0 0.0
    %2792 = vmatpush1.msra.mxu0 0.0
    %2793 = vmatprep.subr.mxu0 0.0
    %2794 = vmatpush1.msra.mxu0 0.0
    %2795 = vmatprep.subr.mxu0 0.0
    %2796 = vmatpush1.msra.mxu0 0.0
    %2797 = vmatprep.subr.mxu0 0.0
    %2798 = vmatpush1.msra.mxu0 0.0
    %2799 = vmatprep.mubr.f32.mxu0 0.0
    %2800 = vmatmul.mubr.f32.gmra.mrb[0].mxu0 %v2284
    %v2801 = vpop.f32.mrb[0].mxu0
    %v2802 = vadd.f32 0.0, %v2801
    %v2803 = vpop.f32.mrb[0].mxu0
    %2804 = vmatprep.mubr.f32.mxu0 0.0
    %2805 = vmatmul.mubr.f32.gmra.mrb[0].mxu0 %v2287
    %v2806 = vpop.f32.mrb[0].mxu0
    %v2807 = vadd.f32 0.0, %v2806
    %v2808 = vpop.f32.mrb[0].mxu0
    %2809 = vdwg.mxu0
    %v2810 = vsub.f32 1.0, %v24
    %v2811 = vsub.f32 1.0, %v25
    %v2812 = vmul.f32 %v2802, %v2810
    %v2813 = vmul.f32 %v2807, %v2811
    %v2814 = vmul.f32 %v2812, %v2635
    %v2815 = vmul.f32 %v2813, %v2636
    %v2816 = vmul.f32 %v2814, %v2639
    %v2817 = vmul.f32 %v2815, %v2639
    %vm2818 = vcmp.ne.f32.partialorder %v2816, 0.0
    %vm2819 = vcmp.ne.f32.partialorder %v2817, 0.0
    %v2820 = vsel %vm2818, 1, 0
    %v2821 = vsel %vm2819, 1, 0
    %v2822 = vcvt.s32.f32 %v2820
    %v2823 = vcvt.s32.f32 %v2821
    %v2824 = vsel %vm36, %v2816, 0.0
    %v2825 = vsel %vm36, %v2817, 0.0
    %v2826 = vadd.f32 %v2824, %v2825
    %v2827 = vrot.slane %v2826, 4
    %v2828 = vadd.f32 %v2826, %v2827
    %v2829 = vrot.slane %v2828, 2
    %v2830 = vadd.f32 %v2828, %v2829
    %v2831 = vrot.slane %v2830, 1
    %v2832 = vadd.f32 %v2830, %v2831
    %vm2833 = vcmp.gt.f32.partialorder %v2832, 0.0
    %v2834 = vrsqrt.pop %v2832
    %v2835 = vsel %vm2833, %v2834, 0.0
    %v2836 = vmul.f32 %v2835, %v24
    %v2837 = vmul.f32 %v2835, %v25
    %v2838 = vsel %vm36, %v2836, 0.0
    %2839 = vadd.xlane.f32.xlu0 %v2838
    %v2840 = vpop.xlane.xlu0 %2839
    %v2841 = vsel %vm36, %v2837, 0.0
    %2842 = vadd.xlane.f32.xlu0 %v2841
    %v2843 = vpop.xlane.xlu0 %2842
    %v2844 = vsel %vm36, %v2822, 0.0
    %2845 = vadd.xlane.f32.xlu0 %v2844
    %v2846 = vpop.xlane.xlu0 %2845
    %v2847 = vsel %vm36, %v2823, 0.0
    %2848 = vadd.xlane.f32.xlu0 %v2847
    %v2849 = vpop.xlane.xlu0 %2848
    %v2850 = vmul.f32 %v2816, %v2840
    %v2851 = vmul.f32 %v2817, %v2843
    %v2852 = vmul.f32 %v2850, %v2835
    %v2853 = vmul.f32 %v2851, %v2835
    %v2854 = vsub.f32 0.0, %v2852
    %v2855 = vsub.f32 0.0, %v2853
    %v2856 = vadd.f32 %v2846, 1.0
    %v2857 = vadd.f32 %v2849, 1.0
    %v2858 = vrcp.pop %v2856
    %v2859 = vmul.f32 %v2854, %v2858
    %v2860 = vrcp.pop %v2857
    %v2861 = vmul.f32 %v2855, %v2860
    %v2862 = vld [vmem:[%s2 + $0xb8] sm:$0xff]
    %v2863 = vld [vmem:[%s2 + $0xc0] sm:$0xff]
    %v2864 = vld [vmem:[%s2 + $0xc8] sm:$0xff]
    %v2865 = vld [vmem:[%s2 + $0xd0] sm:$0xff]
    %v2867 = vsel %vm36, %v2859, 0
    %v2870 = vsel %vm36, %v2861, 0
    %2872 = vmatprep.subr.mxu0 0.0
    %2873 = vmatpush1.msra.mxu0 %v2652
    %2874 = vmatprep.subr.mxu0 0.0
    %2875 = vmatpush1.msra.mxu0 %v2653
    %2876 = vmatprep.subr.mxu0 0.0
    %2877 = vmatpush1.msra.mxu0 0.0
    %2878 = vmatprep.subr.mxu0 0.0
    %2879 = vmatpush1.msra.mxu0 0.0
    %2880 = vmatprep.subr.mxu0 0.0
    %2881 = vmatpush1.msra.mxu0 0.0
    %2882 = vmatprep.subr.mxu0 0.0
    %2883 = vmatpush1.msra.mxu0 0.0
    %2884 = vmatprep.subr.mxu0 0.0
    %2885 = vmatpush1.msra.mxu0 0.0
    %2886 = vmatprep.subr.mxu0 0.0
    %2887 = vmatpush1.msra.mxu0 0.0
    %2888 = vmatprep.subr.mxu0 0.0
    %2889 = vmatpush1.msra.mxu0 0.0
    %2890 = vmatprep.subr.mxu0 0.0
    %2891 = vmatpush1.msra.mxu0 0.0
    %2892 = vmatprep.subr.mxu0 0.0
    %2893 = vmatpush1.msra.mxu0 0.0
    %2894 = vmatprep.subr.mxu0 0.0
    %2895 = vmatpush1.msra.mxu0 0.0
    %2896 = vmatprep.subr.mxu0 0.0
    %2897 = vmatpush1.msra.mxu0 0.0
    %2898 = vmatprep.subr.mxu0 0.0
    %2899 = vmatpush1.msra.mxu0 0.0
    %2900 = vmatprep.subr.mxu0 0.0
    %2901 = vmatpush1.msra.mxu0 0.0
    %2902 = vmatprep.subr.mxu0 0.0
    %2903 = vmatpush1.msra.mxu0 0.0
    %2904 = vmatprep.subr.mxu0 0.0
    %2905 = vmatpush1.msra.mxu0 0.0
    %2906 = vmatprep.subr.mxu0 0.0
    %2907 = vmatpush1.msra.mxu0 0.0
    %2908 = vmatprep.subr.mxu0 0.0
    %2909 = vmatpush1.msra.mxu0 0.0
    %2910 = vmatprep.subr.mxu0 0.0
    %2911 = vmatpush1.msra.mxu0 0.0
    %2912 = vmatprep.subr.mxu0 0.0
    %2913 = vmatpush1.msra.mxu0 0.0
    %2914 = vmatprep.subr.mxu0 0.0
    %2915 = vmatpush1.msra.mxu0 0.0
    %2916 = vmatprep.subr.mxu0 0.0
    %2917 = vmatpush1.msra.mxu0 0.0
    %2918 = vmatprep.subr.mxu0 0.0
    %2919 = vmatpush1.msra.mxu0 0.0
    %2920 = vmatprep.subr.mxu0 0.0
    %2921 = vmatpush1.msra.mxu0 0.0
    %2922 = vmatprep.subr.mxu0 0.0
    %2923 = vmatpush1.msra.mxu0 0.0
    %2924 = vmatprep.subr.mxu0 0.0
    %2925 = vmatpush1.msra.mxu0 0.0
    %2926 = vmatprep.subr.mxu0 0.0
    %2927 = vmatpush1.msra.mxu0 0.0
    %2928 = vmatprep.subr.mxu0 0.0
    %2929 = vmatpush1.msra.mxu0 0.0
    %2930 = vmatprep.subr.mxu0 0.0
    %2931 = vmatpush1.msra.mxu0 0.0
    %2932 = vmatprep.subr.mxu0 0.0
    %2933 = vmatpush1.msra.mxu0 0.0
    %2934 = vmatprep.subr.mxu0 0.0
    %2935 = vmatpush1.msra.mxu0 0.0
    %2936 = vmatprep.mubr.f32.mxu0 0.0
    %2937 = vmatmul.mubr.f32.gmra.mrb[0].mxu0 %v2867
    %v2938 = vpop.f32.mrb[0].mxu0
    %v2939 = vadd.f32 0.0, %v2938
    %v2940 = vpop.f32.mrb[0].mxu0
    %2941 = vmatprep.mubr.f32.mxu0 0.0
    %2942 = vmatmul.mubr.f32.gmra.mrb[0].mxu0 %v2870
    %v2943 = vpop.f32.mrb[0].mxu0
    %v2944 = vadd.f32 0.0, %v2943
    %v2945 = vpop.f32.mrb[0].mxu0
    %2946 = vdwg.mxu0
    %v2947 = vld [vmem:[%s2 + $0xd8] sm:$0xff]
    %v2948 = vld [vmem:[%s2 + $0xe0] sm:$0xff]
    %v2949 = vld [vmem:[%s2 + $0xe8] sm:$0xff]
    %v2950 = vld [vmem:[%s2 + $0xf0] sm:$0xff]
    %v2952 = vsel %vm1388, %v2939, 0
    %v2955 = vsel %vm1388, %v2944, 0
    %2957 = vmatprep.subr.mxu0 0.0
    %2958 = vmatpush1.msra.mxu0 %v2947
    %2959 = vmatprep.subr.mxu0 0.0
    %2960 = vmatpush1.msra.mxu0 %v2948
    %2961 = vmatprep.subr.mxu0 0.0
    %2962 = vmatpush1.msra.mxu0 %v2949
    %2963 = vmatprep.subr.mxu0 0.0
    %2964 = vmatpush1.msra.mxu0 %v2950
    %2965 = vmatprep.subr.mxu0 0.0
    %2966 = vmatpush1.msra.mxu0 0.0
    %2967 = vmatprep.subr.mxu0 0.0
    %2968 = vmatpush1.msra.mxu0 0.0
    %2969 = vmatprep.subr.mxu0 0.0
    %2970 = vmatpush1.msra.mxu0 0.0
    %2971 = vmatprep.subr.mxu0 0.0
    %2972 = vmatpush1.msra.mxu0 0.0
    %2973 = vmatprep.subr.mxu0 0.0
    %2974 = vmatpush1.msra.mxu0 0.0
    %2975 = vmatprep.subr.mxu0 0.0
    %2976 = vmatpush1.msra.mxu0 0.0
    %2977 = vmatprep.subr.mxu0 0.0
    %2978 = vmatpush1.msra.mxu0 0.0
    %2979 = vmatprep.subr.mxu0 0.0
    %2980 = vmatpush1.msra.mxu0 0.0
    %2981 = vmatprep.subr.mxu0 0.0
    %2982 = vmatpush1.msra.mxu0 0.0
    %2983 = vmatprep.subr.mxu0 0.0
    %2984 = vmatpush1.msra.mxu0 0.0
    %2985 = vmatprep.subr.mxu0 0.0
    %2986 = vmatpush1.msra.mxu0 0.0
    %2987 = vmatprep.subr.mxu0 0.0
    %2988 = vmatpush1.msra.mxu0 0.0
    %2989 = vmatprep.subr.mxu0 0.0
    %2990 = vmatpush1.msra.mxu0 0.0
    %2991 = vmatprep.subr.mxu0 0.0
    %2992 = vmatpush1.msra.mxu0 0.0
    %2993 = vmatprep.subr.mxu0 0.0
    %2994 = vmatpush1.msra.mxu0 0.0
    %2995 = vmatprep.subr.mxu0 0.0
    %2996 = vmatpush1.msra.mxu0 0.0
    %2997 = vmatprep.subr.mxu0 0.0
    %2998 = vmatpush1.msra.mxu0 0.0
    %2999 = vmatprep.subr.mxu0 0.0
    %3000 = vmatpush1.msra.mxu0 0.0
    %3001 = vmatprep.subr.mxu0 0.0
    %3002 = vmatpush1.msra.mxu0 0.0
    %3003 = vmatprep.subr.mxu0 0.0
    %3004 = vmatpush1.msra.mxu0 0.0
    %3005 = vmatprep.subr.mxu0 0.0
    %3006 = vmatpush1.msra.mxu0 0.0
    %3007 = vmatprep.subr.mxu0 0.0
    %3008 = vmatpush1.msra.mxu0 0.0
    %3009 = vmatprep.subr.mxu0 0.0
    %3010 = vmatpush1.msra.mxu0 0.0
    %3011 = vmatprep.subr.mxu0 0.0
    %3012 = vmatpush1.msra.mxu0 0.0
    %3013 = vmatprep.subr.mxu0 0.0
    %3014 = vmatpush1.msra.mxu0 0.0
    %3015 = vmatprep.subr.mxu0 0.0
    %3016 = vmatpush1.msra.mxu0 0.0
    %3017 = vmatprep.subr.mxu0 0.0
    %3018 = vmatpush1.msra.mxu0 0.0
    %3019 = vmatprep.subr.mxu0 0.0
    %3020 = vmatpush1.msra.mxu0 0.0
    %3021 = vmatprep.mubr.f32.mxu0 0.0
    %3022 = vmatmul.mubr.f32.gmra.mrb[0].mxu0 %v2952
    %v3023 = vpop.f32.mrb[0].mxu0
    %v3024 = vadd.f32 0.0, %v3023
    %v3025 = vpop.f32.mrb[0].mxu0
    %3026 = vmatprep.mubr.f32.mxu0 0.0
    %3027 = vmatmul.mubr.f32.gmra.mrb[0].mxu0 %v2955
    %v3028 = vpop.f32.mrb[0].mxu0
    %v3029 = vadd.f32 0.0, %v3028
    %v3030 = vpop.f32.mrb[0].mxu0
    %3031 = vdwg.mxu0
    %v3033 = vsel %vm1388, %v2652, 0
    %v3036 = vsel %vm1388, %v2653, 0
    %3038 = vmatprep.subr.mxu0 0.0
    %3039 = vmatpush1.msra.mxu0 %v2862
    %3040 = vmatprep.subr.mxu0 0.0
    %3041 = vmatpush1.msra.mxu0 %v2863
    %3042 = vmatprep.subr.mxu0 0.0
    %3043 = vmatpush1.msra.mxu0 %v2864
    %3044 = vmatprep.subr.mxu0 0.0
    %3045 = vmatpush1.msra.mxu0 %v2865
    %3046 = vmatprep.subr.mxu0 0.0
    %3047 = vmatpush1.msra.mxu0 0.0
    %3048 = vmatprep.subr.mxu0 0.0
    %3049 = vmatpush1.msra.mxu0 0.0
    %3050 = vmatprep.subr.mxu0 0.0
    %3051 = vmatpush1.msra.mxu0 0.0
    %3052 = vmatprep.subr.mxu0 0.0
    %3053 = vmatpush1.msra.mxu0 0.0
    %3054 = vmatprep.subr.mxu0 0.0
    %3055 = vmatpush1.msra.mxu0 0.0
    %3056 = vmatprep.subr.mxu0 0.0
    %3057 = vmatpush1.msra.mxu0 0.0
    %3058 = vmatprep.subr.mxu0 0.0
    %3059 = vmatpush1.msra.mxu0 0.0
    %3060 = vmatprep.subr.mxu0 0.0
    %3061 = vmatpush1.msra.mxu0 0.0
    %3062 = vmatprep.subr.mxu0 0.0
    %3063 = vmatpush1.msra.mxu0 0.0
    %3064 = vmatprep.subr.mxu0 0.0
    %3065 = vmatpush1.msra.mxu0 0.0
    %3066 = vmatprep.subr.mxu0 0.0
    %3067 = vmatpush1.msra.mxu0 0.0
    %3068 = vmatprep.subr.mxu0 0.0
    %3069 = vmatpush1.msra.mxu0 0.0
    %3070 = vmatprep.subr.mxu0 0.0
    %3071 = vmatpush1.msra.mxu0 0.0
    %3072 = vmatprep.subr.mxu0 0.0
    %3073 = vmatpush1.msra.mxu0 0.0
    %3074 = vmatprep.subr.mxu0 0.0
    %3075 = vmatpush1.msra.mxu0 0.0
    %3076 = vmatprep.subr.mxu0 0.0
    %3077 = vmatpush1.msra.mxu0 0.0
    %3078 = vmatprep.subr.mxu0 0.0
    %3079 = vmatpush1.msra.mxu0 0.0
    %3080 = vmatprep.subr.mxu0 0.0
    %3081 = vmatpush1.msra.mxu0 0.0
    %3082 = vmatprep.subr.mxu0 0.0
    %3083 = vmatpush1.msra.mxu0 0.0
    %3084 = vmatprep.subr.mxu0 0.0
    %3085 = vmatpush1.msra.mxu0 0.0
    %3086 = vmatprep.subr.mxu0 0.0
    %3087 = vmatpush1.msra.mxu0 0.0
    %3088 = vmatprep.subr.mxu0 0.0
    %3089 = vmatpush1.msra.mxu0 0.0
    %3090 = vmatprep.subr.mxu0 0.0
    %3091 = vmatpush1.msra.mxu0 0.0
    %3092 = vmatprep.subr.mxu0 0.0
    %3093 = vmatpush1.msra.mxu0 0.0
    %3094 = vmatprep.subr.mxu0 0.0
    %3095 = vmatpush1.msra.mxu0 0.0
    %3096 = vmatprep.subr.mxu0 0.0
    %3097 = vmatpush1.msra.mxu0 0.0
    %3098 = vmatprep.subr.mxu0 0.0
    %3099 = vmatpush1.msra.mxu0 0.0
    %3100 = vmatprep.subr.mxu0 0.0
    %3101 = vmatpush1.msra.mxu0 0.0
    %3102 = vmatprep.mubr.f32.mxu0 0.0
    %3103 = vmatmul.mubr.f32.gmra.mrb[0].mxu0 %v3033
    %v3104 = vpop.f32.mrb[0].mxu0
    %v3105 = vadd.f32 %v3024, %v3104
    %v3106 = vpop.f32.mrb[0].mxu0
    %3107 = vmatprep.mubr.f32.mxu0 0.0
    %3108 = vmatmul.mubr.f32.gmra.mrb[0].mxu0 %v3036
    %v3109 = vpop.f32.mrb[0].mxu0
    %v3110 = vadd.f32 %v3029, %v3109
    %v3111 = vpop.f32.mrb[0].mxu0
    %3112 = vdwg.mxu0
    %v3113 = vld [vmem:[%s2 + $0xf8] sm:$0x1]
    %v3114 = vlaneseq
    %v3115 = vshrl.u32 %v3114, 7
    %v3116 = vsub.s32 0, %v3115
    %v3117 = vrot.slane %v3113, %v3116
    %v3118 = vadd.f32 %v3105, %v3117
    %v3119 = vadd.f32 %v3110, %v3117
    %v3120 = vmax.f32 %v3118, 0.0
    %v3121 = vmax.f32 %v3119, 0.0
    %v3122 = vmul.f32 %v3120, %v2635
    %v3123 = vmul.f32 %v3121, %v2636
    %v3124 = vsel %vm1388, %v3122, 0.0
    %v3125 = vsel %vm1388, %v3123, 0.0
    %v3126 = vadd.f32 %v3124, %v3125
    %v3127 = vrot.slane %v3126, 4
    %v3128 = vadd.f32 %v3126, %v3127
    %v3129 = vrot.slane %v3128, 2
    %v3130 = vadd.f32 %v3128, %v3129
    %v3131 = vrot.slane %v3130, 1
    %v3132 = vadd.f32 %v3130, %v3131
    %v3133 = vmul.f32 %v3132, 0.07692308
    %v3134 = vld [vmem:[%s2 + $0x1f8] sm:$0x1]
    %v3135 = vld [vmem:[%s2 + $0x198] sm:$0xff]
    %v3136 = vld [vmem:[%s2 + $0x1a0] sm:$0xff]
    %v3137 = vld [vmem:[%s2 + $0x1a8] sm:$0xff]
    %v3138 = vld [vmem:[%s2 + $0x1b0] sm:$0xff]
    %v3140 = vsel %vm1388, %v1398, 0
    %3142 = vmatprep.subr.mxu0 0.0
    %3143 = vmatpush1.msra.mxu0 %v3135
    %3144 = vmatprep.subr.mxu0 0.0
    %3145 = vmatpush1.msra.mxu0 %v3136
    %3146 = vmatprep.subr.mxu0 0.0
    %3147 = vmatpush1.msra.mxu0 %v3137
    %3148 = vmatprep.subr.mxu0 0.0
    %3149 = vmatpush1.msra.mxu0 %v3138
    %3150 = vmatprep.subr.mxu0 0.0
    %3151 = vmatpush1.msra.mxu0 0.0
    %3152 = vmatprep.subr.mxu0 0.0
    %3153 = vmatpush1.msra.mxu0 0.0
    %3154 = vmatprep.subr.mxu0 0.0
    %3155 = vmatpush1.msra.mxu0 0.0
    %3156 = vmatprep.subr.mxu0 0.0
    %3157 = vmatpush1.msra.mxu0 0.0
    %3158 = vmatprep.subr.mxu0 0.0
    %3159 = vmatpush1.msra.mxu0 0.0
    %3160 = vmatprep.subr.mxu0 0.0
    %3161 = vmatpush1.msra.mxu0 0.0
    %3162 = vmatprep.subr.mxu0 0.0
    %3163 = vmatpush1.msra.mxu0 0.0
    %3164 = vmatprep.subr.mxu0 0.0
    %3165 = vmatpush1.msra.mxu0 0.0
    %3166 = vmatprep.subr.mxu0 0.0
    %3167 = vmatpush1.msra.mxu0 0.0
    %3168 = vmatprep.subr.mxu0 0.0
    %3169 = vmatpush1.msra.mxu0 0.0
    %3170 = vmatprep.subr.mxu0 0.0
    %3171 = vmatpush1.msra.mxu0 0.0
    %3172 = vmatprep.subr.mxu0 0.0
    %3173 = vmatpush1.msra.mxu0 0.0
    %3174 = vmatprep.subr.mxu0 0.0
    %3175 = vmatpush1.msra.mxu0 0.0
    %3176 = vmatprep.subr.mxu0 0.0
    %3177 = vmatpush1.msra.mxu0 0.0
    %3178 = vmatprep.subr.mxu0 0.0
    %3179 = vmatpush1.msra.mxu0 0.0
    %3180 = vmatprep.subr.mxu0 0.0
    %3181 = vmatpush1.msra.mxu0 0.0
    %3182 = vmatprep.subr.mxu0 0.0
    %3183 = vmatpush1.msra.mxu0 0.0
    %3184 = vmatprep.subr.mxu0 0.0
    %3185 = vmatpush1.msra.mxu0 0.0
    %3186 = vmatprep.subr.mxu0 0.0
    %3187 = vmatpush1.msra.mxu0 0.0
    %3188 = vmatprep.subr.mxu0 0.0
    %3189 = vmatpush1.msra.mxu0 0.0
    %3190 = vmatprep.subr.mxu0 0.0
    %3191 = vmatpush1.msra.mxu0 0.0
    %3192 = vmatprep.subr.mxu0 0.0
    %3193 = vmatpush1.msra.mxu0 0.0
    %3194 = vmatprep.subr.mxu0 0.0
    %3195 = vmatpush1.msra.mxu0 0.0
    %3196 = vmatprep.subr.mxu0 0.0
    %3197 = vmatpush1.msra.mxu0 0.0
    %3198 = vmatprep.subr.mxu0 0.0
    %3199 = vmatpush1.msra.mxu0 0.0
    %3200 = vmatprep.subr.mxu0 0.0
    %3201 = vmatpush1.msra.mxu0 0.0
    %3202 = vmatprep.subr.mxu0 0.0
    %3203 = vmatpush1.msra.mxu0 0.0
    %3204 = vmatprep.subr.mxu0 0.0
    %3205 = vmatpush1.msra.mxu0 0.0
    %3206 = vmatprep.mubr.f32.mxu0 0.0
    %3207 = vmatmul.mubr.f32.gmra.mrb[0].mxu0 %v3140
    %v3208 = vpop.f32.mrb[0].mxu0
    %v3209 = vadd.f32 0.0, %v3208
    %v3210 = vpop.f32.mrb[0].mxu0
    %3211 = vdwg.mxu0
    %v3212 = vadd.f32 %v3134, %v3209
    %v3213 = vld [vmem:[%s2 + $0x1b8] sm:$0xff]
    %v3214 = vld [vmem:[%s2 + $0x1c0] sm:$0xff]
    %v3215 = vld [vmem:[%s2 + $0x1c8] sm:$0xff]
    %v3216 = vld [vmem:[%s2 + $0x1d0] sm:$0xff]
    %v3218 = vsel %vm1388, %v1662, 0
    %3220 = vmatprep.subr.mxu0 0.0
    %3221 = vmatpush1.msra.mxu0 %v3213
    %3222 = vmatprep.subr.mxu0 0.0
    %3223 = vmatpush1.msra.mxu0 %v3214
    %3224 = vmatprep.subr.mxu0 0.0
    %3225 = vmatpush1.msra.mxu0 %v3215
    %3226 = vmatprep.subr.mxu0 0.0
    %3227 = vmatpush1.msra.mxu0 %v3216
    %3228 = vmatprep.subr.mxu0 0.0
    %3229 = vmatpush1.msra.mxu0 0.0
    %3230 = vmatprep.subr.mxu0 0.0
    %3231 = vmatpush1.msra.mxu0 0.0
    %3232 = vmatprep.subr.mxu0 0.0
    %3233 = vmatpush1.msra.mxu0 0.0
    %3234 = vmatprep.subr.mxu0 0.0
    %3235 = vmatpush1.msra.mxu0 0.0
    %3236 = vmatprep.subr.mxu0 0.0
    %3237 = vmatpush1.msra.mxu0 0.0
    %3238 = vmatprep.subr.mxu0 0.0
    %3239 = vmatpush1.msra.mxu0 0.0
    %3240 = vmatprep.subr.mxu0 0.0
    %3241 = vmatpush1.msra.mxu0 0.0
    %3242 = vmatprep.subr.mxu0 0.0
    %3243 = vmatpush1.msra.mxu0 0.0
    %3244 = vmatprep.subr.mxu0 0.0
    %3245 = vmatpush1.msra.mxu0 0.0
    %3246 = vmatprep.subr.mxu0 0.0
    %3247 = vmatpush1.msra.mxu0 0.0
    %3248 = vmatprep.subr.mxu0 0.0
    %3249 = vmatpush1.msra.mxu0 0.0
    %3250 = vmatprep.subr.mxu0 0.0
    %3251 = vmatpush1.msra.mxu0 0.0
    %3252 = vmatprep.subr.mxu0 0.0
    %3253 = vmatpush1.msra.mxu0 0.0
    %3254 = vmatprep.subr.mxu0 0.0
    %3255 = vmatpush1.msra.mxu0 0.0
    %3256 = vmatprep.subr.mxu0 0.0
    %3257 = vmatpush1.msra.mxu0 0.0
    %3258 = vmatprep.subr.mxu0 0.0
    %3259 = vmatpush1.msra.mxu0 0.0
    %3260 = vmatprep.subr.mxu0 0.0
    %3261 = vmatpush1.msra.mxu0 0.0
    %3262 = vmatprep.subr.mxu0 0.0
    %3263 = vmatpush1.msra.mxu0 0.0
    %3264 = vmatprep.subr.mxu0 0.0
    %3265 = vmatpush1.msra.mxu0 0.0
    %3266 = vmatprep.subr.mxu0 0.0
    %3267 = vmatpush1.msra.mxu0 0.0
    %3268 = vmatprep.subr.mxu0 0.0
    %3269 = vmatpush1.msra.mxu0 0.0
    %3270 = vmatprep.subr.mxu0 0.0
    %3271 = vmatpush1.msra.mxu0 0.0
    %3272 = vmatprep.subr.mxu0 0.0
    %3273 = vmatpush1.msra.mxu0 0.0
    %3274 = vmatprep.subr.mxu0 0.0
    %3275 = vmatpush1.msra.mxu0 0.0
    %3276 = vmatprep.subr.mxu0 0.0
    %3277 = vmatpush1.msra.mxu0 0.0
    %3278 = vmatprep.subr.mxu0 0.0
    %3279 = vmatpush1.msra.mxu0 0.0
    %3280 = vmatprep.subr.mxu0 0.0
    %3281 = vmatpush1.msra.mxu0 0.0
    %3282 = vmatprep.subr.mxu0 0.0
    %3283 = vmatpush1.msra.mxu0 0.0
    %3284 = vmatprep.mubr.f32.mxu0 0.0
    %3285 = vmatmul.mubr.f32.gmra.mrb[0].mxu0 %v3218
    %v3286 = vpop.f32.mrb[0].mxu0
    %v3287 = vadd.f32 0.0, %v3286
    %v3288 = vpop.f32.mrb[0].mxu0
    %3289 = vdwg.mxu0
    %v3290 = vadd.f32 %v3212, %v3287
    %v3291 = vld [vmem:[%s2 + $0x1d8] sm:$0xff]
    %v3292 = vld [vmem:[%s2 + $0x1e0] sm:$0xff]
    %v3293 = vld [vmem:[%s2 + $0x1e8] sm:$0xff]
    %v3294 = vld [vmem:[%s2 + $0x1f0] sm:$0xff]
    %v3296 = vsel %vm1388, %v3133, 0
    %3298 = vmatprep.subr.mxu0 0.0
    %3299 = vmatpush1.msra.mxu0 %v3291
    %3300 = vmatprep.subr.mxu0 0.0
    %3301 = vmatpush1.msra.mxu0 %v3292
    %3302 = vmatprep.subr.mxu0 0.0
    %3303 = vmatpush1.msra.mxu0 %v3293
    %3304 = vmatprep.subr.mxu0 0.0
    %3305 = vmatpush1.msra.mxu0 %v3294
    %3306 = vmatprep.subr.mxu0 0.0
    %3307 = vmatpush1.msra.mxu0 0.0
    %3308 = vmatprep.subr.mxu0 0.0
    %3309 = vmatpush1.msra.mxu0 0.0
    %3310 = vmatprep.subr.mxu0 0.0
    %3311 = vmatpush1.msra.mxu0 0.0
    %3312 = vmatprep.subr.mxu0 0.0
    %3313 = vmatpush1.msra.mxu0 0.0
    %3314 = vmatprep.subr.mxu0 0.0
    %3315 = vmatpush1.msra.mxu0 0.0
    %3316 = vmatprep.subr.mxu0 0.0
    %3317 = vmatpush1.msra.mxu0 0.0
    %3318 = vmatprep.subr.mxu0 0.0
    %3319 = vmatpush1.msra.mxu0 0.0
    %3320 = vmatprep.subr.mxu0 0.0
    %3321 = vmatpush1.msra.mxu0 0.0
    %3322 = vmatprep.subr.mxu0 0.0
    %3323 = vmatpush1.msra.mxu0 0.0
    %3324 = vmatprep.subr.mxu0 0.0
    %3325 = vmatpush1.msra.mxu0 0.0
    %3326 = vmatprep.subr.mxu0 0.0
    %3327 = vmatpush1.msra.mxu0 0.0
    %3328 = vmatprep.subr.mxu0 0.0
    %3329 = vmatpush1.msra.mxu0 0.0
    %3330 = vmatprep.subr.mxu0 0.0
    %3331 = vmatpush1.msra.mxu0 0.0
    %3332 = vmatprep.subr.mxu0 0.0
    %3333 = vmatpush1.msra.mxu0 0.0
    %3334 = vmatprep.subr.mxu0 0.0
    %3335 = vmatpush1.msra.mxu0 0.0
    %3336 = vmatprep.subr.mxu0 0.0
    %3337 = vmatpush1.msra.mxu0 0.0
    %3338 = vmatprep.subr.mxu0 0.0
    %3339 = vmatpush1.msra.mxu0 0.0
    %3340 = vmatprep.subr.mxu0 0.0
    %3341 = vmatpush1.msra.mxu0 0.0
    %3342 = vmatprep.subr.mxu0 0.0
    %3343 = vmatpush1.msra.mxu0 0.0
    %3344 = vmatprep.subr.mxu0 0.0
    %3345 = vmatpush1.msra.mxu0 0.0
    %3346 = vmatprep.subr.mxu0 0.0
    %3347 = vmatpush1.msra.mxu0 0.0
    %3348 = vmatprep.subr.mxu0 0.0
    %3349 = vmatpush1.msra.mxu0 0.0
    %3350 = vmatprep.subr.mxu0 0.0
    %3351 = vmatpush1.msra.mxu0 0.0
    %3352 = vmatprep.subr.mxu0 0.0
    %3353 = vmatpush1.msra.mxu0 0.0
    %3354 = vmatprep.subr.mxu0 0.0
    %3355 = vmatpush1.msra.mxu0 0.0
    %3356 = vmatprep.subr.mxu0 0.0
    %3357 = vmatpush1.msra.mxu0 0.0
    %3358 = vmatprep.subr.mxu0 0.0
    %3359 = vmatpush1.msra.mxu0 0.0
    %3360 = vmatprep.subr.mxu0 0.0
    %3361 = vmatpush1.msra.mxu0 0.0
    %3362 = vmatprep.mubr.f32.mxu0 0.0
    %3363 = vmatmul.mubr.f32.gmra.mrb[0].mxu0 %v3296
    %v3364 = vpop.f32.mrb[0].mxu0
    %v3365 = vadd.f32 0.0, %v3364
    %v3366 = vpop.f32.mrb[0].mxu0
    %3367 = vdwg.mxu0
    %v3368 = vadd.f32 %v3290, %v3365
    %v3369 = vmax.f32 %v3368, 0.0
    %v3370 = vld [vmem:[%s2 + $0x200] sm:$0xff]
    %v3371 = vld [vmem:[%s2 + $0x208] sm:$0xff]
    %v3372 = vld [vmem:[%s2 + $0x210] sm:$0xff]
    %v3373 = vld [vmem:[%s2 + $0x218] sm:$0xff]
    %v3374 = vld [vmem:[%s2 + $0x220] sm:$0x1]
    %v3376 = vsel %vm1388, %v3369, 0
    %3378 = vmatprep.subr.mxu0 0.0
    %3379 = vmatpush1.msra.mxu0 %v3370
    %3380 = vmatprep.subr.mxu0 0.0
    %3381 = vmatpush1.msra.mxu0 %v3371
    %3382 = vmatprep.subr.mxu0 0.0
    %3383 = vmatpush1.msra.mxu0 %v3372
    %3384 = vmatprep.subr.mxu0 0.0
    %3385 = vmatpush1.msra.mxu0 %v3373
    %3386 = vmatprep.subr.mxu0 0.0
    %3387 = vmatpush1.msra.mxu0 0.0
    %3388 = vmatprep.subr.mxu0 0.0
    %3389 = vmatpush1.msra.mxu0 0.0
    %3390 = vmatprep.subr.mxu0 0.0
    %3391 = vmatpush1.msra.mxu0 0.0
    %3392 = vmatprep.subr.mxu0 0.0
    %3393 = vmatpush1.msra.mxu0 0.0
    %3394 = vmatprep.subr.mxu0 0.0
    %3395 = vmatpush1.msra.mxu0 0.0
    %3396 = vmatprep.subr.mxu0 0.0
    %3397 = vmatpush1.msra.mxu0 0.0
    %3398 = vmatprep.subr.mxu0 0.0
    %3399 = vmatpush1.msra.mxu0 0.0
    %3400 = vmatprep.subr.mxu0 0.0
    %3401 = vmatpush1.msra.mxu0 0.0
    %3402 = vmatprep.subr.mxu0 0.0
    %3403 = vmatpush1.msra.mxu0 0.0
    %3404 = vmatprep.subr.mxu0 0.0
    %3405 = vmatpush1.msra.mxu0 0.0
    %3406 = vmatprep.subr.mxu0 0.0
    %3407 = vmatpush1.msra.mxu0 0.0
    %3408 = vmatprep.subr.mxu0 0.0
    %3409 = vmatpush1.msra.mxu0 0.0
    %3410 = vmatprep.subr.mxu0 0.0
    %3411 = vmatpush1.msra.mxu0 0.0
    %3412 = vmatprep.subr.mxu0 0.0
    %3413 = vmatpush1.msra.mxu0 0.0
    %3414 = vmatprep.subr.mxu0 0.0
    %3415 = vmatpush1.msra.mxu0 0.0
    %3416 = vmatprep.subr.mxu0 0.0
    %3417 = vmatpush1.msra.mxu0 0.0
    %3418 = vmatprep.subr.mxu0 0.0
    %3419 = vmatpush1.msra.mxu0 0.0
    %3420 = vmatprep.subr.mxu0 0.0
    %3421 = vmatpush1.msra.mxu0 0.0
    %3422 = vmatprep.subr.mxu0 0.0
    %3423 = vmatpush1.msra.mxu0 0.0
    %3424 = vmatprep.subr.mxu0 0.0
    %3425 = vmatpush1.msra.mxu0 0.0
    %3426 = vmatprep.subr.mxu0 0.0
    %3427 = vmatpush1.msra.mxu0 0.0
    %3428 = vmatprep.subr.mxu0 0.0
    %3429 = vmatpush1.msra.mxu0 0.0
    %3430 = vmatprep.subr.mxu0 0.0
    %3431 = vmatpush1.msra.mxu0 0.0
    %3432 = vmatprep.subr.mxu0 0.0
    %3433 = vmatpush1.msra.mxu0 0.0
    %3434 = vmatprep.subr.mxu0 0.0
    %3435 = vmatpush1.msra.mxu0 0.0
    %3436 = vmatprep.subr.mxu0 0.0
    %3437 = vmatpush1.msra.mxu0 0.0
    %3438 = vmatprep.subr.mxu0 0.0
    %3439 = vmatpush1.msra.mxu0 0.0
    %3440 = vmatprep.subr.mxu0 0.0
    %3441 = vmatpush1.msra.mxu0 0.0
    %3442 = vmatprep.mubr.f32.mxu0 0.0
    %3443 = vmatmul.mubr.f32.gmra.mrb[0].mxu0 %v3376
    %v3444 = vpop.f32.mrb[0].mxu0
    %v3445 = vadd.f32 %v3374, %v3444
    %v3446 = vpop.f32.mrb[0].mxu0
    %3447 = vdwg.mxu0
    %vm3448 = vcmask 24576
    %v3449 = vsel %vm3448, %v3445, -inf
    %3450 = vmax.xlane.f32.xlu0 %v3449
    %v3451 = vpop.xlane.xlu0 %3450
    %v3452 = vsub.f32 %v3445, %v3451
    %v3453 = vmul.f32 %v3452, 1.442695
    %v3454 = vpow.pop %v3453
    %v3455 = vsel %vm3448, %v3454, 0.0
    %3456 = vadd.xlane.f32.xlu0 %v3455
    %v3457 = vpop.xlane.xlu0 %3456
    %v3458 = vlog2.pop %v3457
    %v3459 = vmul.f32 %v3458, 0.6931472
    %v3460 = vsub.f32 %v3452, %v3459
    %3461 = vst.msk [vmem:[#allocation2] sm:$0x1] %vm3448, %v3460
    // Predicated region
    $region14: #{asap_forward.1} parent=1 // pred_check
      _
    $region15: #{asap_forward.1} parent=1 // pred_check_branch
      %3463 = sbr.rel (0) target = $region17
    $region16: #{asap_forward.1} parent=1 // pred_region
      %s3465 = ssub.s32 16, 16
      %3466 = vsyncadd [#allocation3], %s3465
      %s3468 = sshll.u32 [#allocation2], 4
      %s3469 = int_to_ptr.vmem [resolvable:$true] %s3468
      %3471 = dma.vmem_to_hbm [thread:$0]  %s3469, 16, %s3, [#allocation3]
    $region17: #{asap_forward.1} parent=1 // pred_fallthru
      _
    // Predicated region
    $region18: #{asap_forward.1} parent=1 // pred_check
      _
    $region19: #{asap_forward.1} parent=1 // pred_check_branch
      %3473 = sbr.rel (0) target = $region21
    $region20: #{asap_forward.1} parent=1 // pred_region
      %3474 = dma.done [#allocation3], 16
    $region21: #{asap_forward.1} parent=1 // pred_fallthru
      _
    %3475 = vsyncpa [#allocation3], 1

</llo_original>
